<compile_context>
chip_gen: v7x
topology: tpu7x:2x2x1
jax: 0.10.0
libtpu: 0.0.40
codegen_flags: <defaults>
</compile_context>

<pallas_src>
import functools

import jax
import jax.numpy as jnp
from jax.experimental import pallas as pl
from jax.experimental.pallas import tpu as pltpu


# ---------------------------------------------------------------------------
# Kernel: fused 3-layer point-wise MLP, channel-major, lane-sub-tiled.
#   x block  : (1, Cin,  tile_l)   (any float dtype; cast per sub-tile)
#   weights  : (H, Cin), (H, H), (Cout, H)  in compute_dtype (BN folded)
#   biases   : (H, 1), (H, 1), (Cout, 1)    f32, broadcast over lanes (L)
#   out block: (1, Cout, tile_l)
# ---------------------------------------------------------------------------
def _conv_mlp_kernel(x_ref,
                     w1_ref, b1_ref,
                     w2_ref, b2_ref,
                     w3_ref, b3_ref,
                     o_ref,
                     *, sub_l, compute_dtype):
    tile_l = x_ref.shape[-1]
    n_sub = tile_l // sub_l

    w1 = w1_ref[...]
    w2 = w2_ref[...]
    w3 = w3_ref[...]
    b1 = b1_ref[...]
    b2 = b2_ref[...]
    b3 = b3_ref[...]

    # Loop over lane sub-tiles so the (H, sub_l) f32 intermediates stay small
    # while the DMA'd x/out blocks stay large.  Weights are VMEM-resident, so
    # this costs no extra HBM traffic.
    @pl.loop(0, n_sub)
    def _(s):
        start = pl.multiple_of(s * sub_l, 128)
        x = x_ref[0, :, pl.ds(start, sub_l)].astype(compute_dtype)

        h = jnp.dot(w1, x, preferred_element_type=jnp.float32) + b1
        h = jnp.maximum(h, 0.0).astype(compute_dtype)

        h = jnp.dot(w2, h, preferred_element_type=jnp.float32) + b2
        h = jnp.maximum(h, 0.0).astype(compute_dtype)

        out = jnp.dot(w3, h, preferred_element_type=jnp.float32) + b3
        o_ref[0, :, pl.ds(start, sub_l)] = out.astype(o_ref.dtype)


# ---------------------------------------------------------------------------
# BN folding (eval mode, exact):
#   y = gamma*(Wx+b - mean)/sqrt(var+eps) + beta = (scale*W) x + (scale*(b-mean)+beta)
# ---------------------------------------------------------------------------
def fold_bn_into_conv(params, eps=1e-5):
    (w1, b1, g1, be1, m1, v1,
     w2, b2, g2, be2, m2, v2,
     w3, b3) = params
    s1 = g1 / jnp.sqrt(v1 + eps)
    s2 = g2 / jnp.sqrt(v2 + eps)
    w1f = w1 * s1[:, None]
    b1f = (b1 - m1) * s1 + be1
    w2f = w2 * s2[:, None]
    b2f = (b2 - m2) * s2 + be2
    # Biases as (C, 1) columns so they broadcast over the lane (L) axis.
    return (w1f, b1f[:, None], w2f, b2f[:, None], w3, b3[:, None])


# ---------------------------------------------------------------------------
# Wrapper
# ---------------------------------------------------------------------------
def conv_pallas(x_ncl, params, *, tile_l=1024, sub_l=None,
                compute_dtype=jnp.bfloat16, out_dtype=None,
                eps=1e-5, vmem_limit_bytes=None):
    """x_ncl: (B, Cin, L).  Returns (B, Cout, L) in out_dtype (default x.dtype).

    tile_l: L-tile per grid step (multiple of 128); clamped so there are at
      least 2 grid programs (megacore / v7x dual-TC) and so it never exceeds
      round_up(L, 128).
    sub_l: in-kernel lane sub-tile bounding the (H, sub_l) f32 intermediates
      (default min(tile_l, 512)); must divide tile_l and be a multiple of 128.
    compute_dtype: operand dtype for x / weights (bf16 default; f32 supported).
      MXU accumulation and the bias/ReLU epilogue are always f32.
    """
    w1, b1, w2, b2, w3, b3 = fold_bn_into_conv(params, eps)
    B, Cin, L = x_ncl.shape
    H = w1.shape[0]
    Cout = w3.shape[0]
    out_dtype = x_ncl.dtype if out_dtype is None else out_dtype

    assert tile_l % 128 == 0, "tile_l must be a multiple of 128 (lane axis)"
    # Never overshoot the (128-rounded) sequence length.
    tile_l = min(tile_l, pl.cdiv(L, 128) * 128)
    # Keep >= 2 grid programs so both v7x TensorCores (megacore) have work.
    while B * pl.cdiv(L, tile_l) < 2 and tile_l > 128:
        tile_l //= 2
    if sub_l is None:
        sub_l = min(tile_l, 512)
    sub_l = min(sub_l, tile_l)
    assert sub_l % 128 == 0 and tile_l % sub_l == 0, "sub_l must divide tile_l"

    # Weights are small; casting them is negligible.  x is NOT pre-cast here —
    # the kernel casts per sub-tile (saves a full HBM read+write pass).
    w1c = w1.astype(compute_dtype)
    w2c = w2.astype(compute_dtype)
    w3c = w3.astype(compute_dtype)

    grid = (B, pl.cdiv(L, tile_l))

    def resident(shape):
        # Constant index map + single buffering: fetched once, stays VMEM
        # resident, no wasted second pipeline buffer.
        return pl.BlockSpec(shape, lambda b, l: (0,) * len(shape),
                            pipeline_mode=pl.Buffered(1))

    kernel = functools.partial(_conv_mlp_kernel, sub_l=sub_l,
                               compute_dtype=compute_dtype)

    out = pl.pallas_call(
        kernel,
        out_shape=jax.ShapeDtypeStruct((B, Cout, L), out_dtype),
        grid_spec=pltpu.PrefetchScalarGridSpec(
            num_scalar_prefetch=0,
            grid=grid,
            in_specs=[
                pl.BlockSpec((1, Cin, tile_l), lambda b, l: (b, 0, l)),  # x
                resident((H, Cin)),  resident((H, 1)),      # layer 1 (BN folded)
                resident((H, H)),    resident((H, 1)),      # layer 2 (BN folded)
                resident((Cout, H)), resident((Cout, 1)),   # layer 3
            ],
            out_specs=pl.BlockSpec((1, Cout, tile_l), lambda b, l: (b, 0, l)),
        ),
        compiler_params=pltpu.CompilerParams(
            dimension_semantics=("parallel", "parallel"),
            vmem_limit_bytes=vmem_limit_bytes),
    )(x_ncl, w1c, b1, w2c, b2, w3c, b3)

    return out


# ---------------------------------------------------------------------------
# Synthetic PyTorch-like parameters (raw, unfolded).
# ---------------------------------------------------------------------------
def init_params(key, in_size, hidden_size, out_size):
    ks = jax.random.split(key, 14)

    def conv_wb(kw, kb, cin, cout):
        bound = 1.0 / jnp.sqrt(cin)
        # Conv1d weight (out_c, in_c, 1) stored squeezed as (out_c, in_c).
        w = jax.random.uniform(kw, (cout, cin), jnp.float32, -bound, bound)
        b = jax.random.uniform(kb, (cout,), jnp.float32, -bound, bound)
        return w, b

    def bn_stats(kg, kb, km, kv, c):
        gamma = 1.0 + 0.1 * jax.random.normal(kg, (c,), jnp.float32)
        beta = 0.1 * jax.random.normal(kb, (c,), jnp.float32)
        mean = 0.1 * jax.random.normal(km, (c,), jnp.float32)
        var = jax.nn.softplus(jax.random.normal(kv, (c,), jnp.float32)) + 0.5
        return gamma, beta, mean, var

    w1, b1 = conv_wb(ks[0], ks[1], in_size, hidden_size)
    g1, be1, m1, v1 = bn_stats(ks[2], ks[3], ks[4], ks[5], hidden_size)
    w2, b2 = conv_wb(ks[6], ks[7], hidden_size, hidden_size)
    g2, be2, m2, v2 = bn_stats(ks[8], ks[9], ks[10], ks[11], hidden_size)
    w3, b3 = conv_wb(ks[12], ks[13], hidden_size, out_size)
    return (w1, b1, g1, be1, m1, v1, w2, b2, g2, be2, m2, v2, w3, b3)


# ---------------------------------------------------------------------------
# Pure-JAX references.
# ---------------------------------------------------------------------------
def conv_reference(x_ncl, params, eps=1e-5):
    """Unfolded reference: conv1x1 -> BN(eval) -> ReLU -> ... (accurate f32)."""
    (w1, b1, g1, be1, m1, v1, w2, b2, g2, be2, m2, v2, w3, b3) = params

    def conv1x1(x, w, b):
        return jnp.einsum('oc,bcl->bol', w, x,
                          precision=jax.lax.Precision.HIGHEST) + b[None, :, None]

    def bn(x, g, be, m, v):
        return ((x - m[None, :, None]) / jnp.sqrt(v[None, :, None] + eps)
                * g[None, :, None] + be[None, :, None])

    h = jax.nn.relu(bn(conv1x1(x_ncl, w1, b1), g1, be1, m1, v1))
    h = jax.nn.relu(bn(conv1x1(h, w2, b2), g2, be2, m2, v2))
    return conv1x1(h, w3, b3)


def conv_reference_folded(x_ncl, folded, compute_dtype):
    """Mirror of the kernel math (BN-folded, casted operands, f32 accumulate)."""
    w1, b1, w2, b2, w3, b3 = folded
    x = x_ncl.astype(compute_dtype)

    def mm(w, v):
        return jnp.einsum('oc,bcl->bol', w.astype(compute_dtype), v,
                          preferred_element_type=jnp.float32)

    h = jnp.maximum(mm(w1, x) + b1[None], 0.0).astype(compute_dtype)
    h = jnp.maximum(mm(w2, h) + b2[None], 0.0).astype(compute_dtype)
    return mm(w3, h) + b3[None]


if __name__ == "__main__":
    # Small shapes consistent with the module (in_size/hidden_size/out_size are
    # constructor args; kernel-1 conv over L positions).  L is deliberately not
    # a multiple of tile_l to exercise the masked partial last block.
    B, Cin, H, Cout, L = 2, 128, 256, 128, 1000

    key = jax.random.PRNGKey(0)
    kx, kp = jax.random.split(key)
    x = jax.random.normal(kx, (B, Cin, L), jnp.float32)   # NCL, like PyTorch
    params = init_params(kp, Cin, H, Cout)

    # --- f32 operand path vs. unfolded reference (validates BN folding/layout).
    fwd_f32 = jax.jit(functools.partial(conv_pallas, tile_l=512, sub_l=512,
                                        compute_dtype=jnp.float32))
    out_f32 = jax.block_until_ready(fwd_f32(x, params))
    ref_f32 = conv_reference(x, params)
    assert out_f32.shape == (B, Cout, L)
    assert jnp.allclose(out_f32, ref_f32, atol=1e-2, rtol=1e-2), \
        float(jnp.max(jnp.abs(out_f32 - ref_f32)))

    # --- default bf16 operand path (f32 accumulation), multi-step sub-tile
    #     loop + partial last block, vs. a math-mirrored reference.
    fwd_bf16 = jax.jit(functools.partial(conv_pallas, tile_l=512, sub_l=256))
    out_bf16 = jax.block_until_ready(fwd_bf16(x, params))
    ref_bf16 = conv_reference_folded(x, fold_bn_into_conv(params), jnp.bfloat16)
    assert out_bf16.shape == (B, Cout, L)
    assert jnp.allclose(out_bf16, ref_bf16, atol=3e-2, rtol=3e-2), \
        float(jnp.max(jnp.abs(out_bf16 - ref_bf16)))

    print("KERNEL_OK")
</pallas_src>

<mosaic_0001>
module attributes {stable_mosaic.version = 11 : i64} {
  func.func @_conv_mlp_kernel(%arg0: i32, %arg1: i32, %arg2: memref<1x128x512xf32, #tpu.memory_space<vmem>>, %arg3: memref<256x128xf32, #tpu.memory_space<vmem>>, %arg4: memref<256x1xf32, #tpu.memory_space<vmem>>, %arg5: memref<256x256xf32, #tpu.memory_space<vmem>>, %arg6: memref<256x1xf32, #tpu.memory_space<vmem>>, %arg7: memref<128x256xf32, #tpu.memory_space<vmem>>, %arg8: memref<128x1xf32, #tpu.memory_space<vmem>>, %arg9: memref<1x128x512xf32, #tpu.memory_space<vmem>>) attributes {dimension_semantics = [#tpu.dimension_semantics<parallel>, #tpu.dimension_semantics<parallel>], iteration_bounds = array<i64: 2, 2>, scalar_prefetch = 0 : i64, scratch_operands = 0 : i64, tpu.core_type = #tpu.core_type<tc>, window_params = [{transform_indices = @transform_0, window_bounds = array<i64: 1, 128, 512>}, {pipeline_mode = #tpu.pipeline_mode<synchronous>, transform_indices = @transform_1, window_bounds = array<i64: 256, 128>}, {pipeline_mode = #tpu.pipeline_mode<synchronous>, transform_indices = @transform_2, window_bounds = array<i64: 256, 1>}, {pipeline_mode = #tpu.pipeline_mode<synchronous>, transform_indices = @transform_3, window_bounds = array<i64: 256, 256>}, {pipeline_mode = #tpu.pipeline_mode<synchronous>, transform_indices = @transform_4, window_bounds = array<i64: 256, 1>}, {pipeline_mode = #tpu.pipeline_mode<synchronous>, transform_indices = @transform_5, window_bounds = array<i64: 128, 256>}, {pipeline_mode = #tpu.pipeline_mode<synchronous>, transform_indices = @transform_6, window_bounds = array<i64: 128, 1>}, {transform_indices = @transform_7, window_bounds = array<i64: 1, 128, 512>}]} {
    %c0 = arith.constant 0 : index
    %c0_0 = arith.constant 0 : index
    %0 = vector.load %arg3[%c0, %c0_0] : memref<256x128xf32, #tpu.memory_space<vmem>>, vector<256x128xf32>
    %c0_1 = arith.constant 0 : index
    %c0_2 = arith.constant 0 : index
    %1 = vector.load %arg5[%c0_1, %c0_2] : memref<256x256xf32, #tpu.memory_space<vmem>>, vector<256x256xf32>
    %c0_3 = arith.constant 0 : index
    %c0_4 = arith.constant 0 : index
    %2 = vector.load %arg7[%c0_3, %c0_4] : memref<128x256xf32, #tpu.memory_space<vmem>>, vector<128x256xf32>
    %c0_5 = arith.constant 0 : index
    %c0_6 = arith.constant 0 : index
    %3 = vector.load %arg4[%c0_5, %c0_6] : memref<256x1xf32, #tpu.memory_space<vmem>>, vector<256x1xf32>
    %c0_7 = arith.constant 0 : index
    %c0_8 = arith.constant 0 : index
    %4 = vector.load %arg6[%c0_7, %c0_8] : memref<256x1xf32, #tpu.memory_space<vmem>>, vector<256x1xf32>
    %c0_9 = arith.constant 0 : index
    %c0_10 = arith.constant 0 : index
    %5 = vector.load %arg8[%c0_9, %c0_10] : memref<128x1xf32, #tpu.memory_space<vmem>>, vector<128x1xf32>
    %c0_i32 = arith.constant 0 : i32
    %c1_i32 = arith.constant 1 : i32
    %6 = arith.muli %c0_i32, %c1_i32 : i32
    %c0_i32_11 = arith.constant 0 : i32
    %7 = arith.addi %c0_i32_11, %6 : i32
    %c512_i32 = arith.constant 512 : i32
    %8 = arith.muli %7, %c512_i32 : i32
    %9 = tpu.assume_multiple %8, 128 : i32
    %c0_12 = arith.constant 0 : index
    %c0_13 = arith.constant 0 : index
    %10 = arith.index_cast %9 : i32 to index
    %11 = vector.load %arg2[%c0_12, %c0_13, %10] : memref<1x128x512xf32, #tpu.memory_space<vmem>>, vector<1x128x512xf32>
    %12 = vector.shape_cast %11 : vector<1x128x512xf32> to vector<128x512xf32>
    %cst = arith.constant dense<0.000000e+00> : vector<256x512xf32>
    %13 = tpu.matmul %0, %12, %cst {dimension_numbers = #tpu.dot_dimension_numbers<[1], [0], [0], [1], [0, 0, 1, 1], [], []>} : vector<256x128xf32>, vector<128x512xf32>, vector<256x512xf32> -> vector<256x512xf32>
    %14 = vector.broadcast %3 : vector<256x1xf32> to vector<256x512xf32>
    %15 = arith.addf %13, %14 : vector<256x512xf32>
    %cst_14 = arith.constant 0.000000e+00 : f32
    %16 = vector.broadcast %cst_14 : f32 to vector<256x512xf32>
    %17 = arith.maximumf %15, %16 : vector<256x512xf32>
    %cst_15 = arith.constant dense<0.000000e+00> : vector<256x512xf32>
    %18 = tpu.matmul %1, %17, %cst_15 {dimension_numbers = #tpu.dot_dimension_numbers<[1], [0], [0], [1], [0, 0, 1, 1], [], []>} : vector<256x256xf32>, vector<256x512xf32>, vector<256x512xf32> -> vector<256x512xf32>
    %19 = vector.broadcast %4 : vector<256x1xf32> to vector<256x512xf32>
    %20 = arith.addf %18, %19 : vector<256x512xf32>
    %cst_16 = arith.constant 0.000000e+00 : f32
    %21 = vector.broadcast %cst_16 : f32 to vector<256x512xf32>
    %22 = arith.maximumf %20, %21 : vector<256x512xf32>
    %cst_17 = arith.constant dense<0.000000e+00> : vector<128x512xf32>
    %23 = tpu.matmul %2, %22, %cst_17 {dimension_numbers = #tpu.dot_dimension_numbers<[1], [0], [0], [1], [0, 0, 1, 1], [], []>} : vector<128x256xf32>, vector<256x512xf32>, vector<128x512xf32> -> vector<128x512xf32>
    %24 = vector.broadcast %5 : vector<128x1xf32> to vector<128x512xf32>
    %25 = arith.addf %23, %24 : vector<128x512xf32>
    %c0_18 = arith.constant 0 : index
    %c0_19 = arith.constant 0 : index
    %26 = arith.index_cast %9 : i32 to index
    %27 = vector.load %arg9[%c0_18, %c0_19, %26] : memref<1x128x512xf32, #tpu.memory_space<vmem>>, vector<1x128x512xf32>
    %28 = vector.shape_cast %27 : vector<1x128x512xf32> to vector<128x512xf32>
    %29 = vector.shape_cast %25 : vector<128x512xf32> to vector<1x128x512xf32>
    tpu.vector_store %arg9[%c0_18, %c0_19, %26], %29 {strides = array<i32>} : memref<1x128x512xf32, #tpu.memory_space<vmem>>, vector<1x128x512xf32>,
    %c1_i32_20 = arith.constant 1 : i32
    return
  }
  func.func @transform_0(%arg0: i32, %arg1: i32) -> (i32, i32, i32) {
    %c0_i32 = arith.constant 0 : i32
    %c0_i32_0 = arith.constant 0 : i32
    return %arg0, %c0_i32, %arg1 : i32, i32, i32
  }
  func.func @transform_1(%arg0: i32, %arg1: i32) -> (i32, i32) {
    %c0_i32 = arith.constant 0 : i32
    %c0_i32_0 = arith.constant 0 : i32
    %c0_i32_1 = arith.constant 0 : i32
    return %c0_i32, %c0_i32_0 : i32, i32
  }
  func.func @transform_2(%arg0: i32, %arg1: i32) -> (i32, i32) {
    %c0_i32 = arith.constant 0 : i32
    %c0_i32_0 = arith.constant 0 : i32
    %c0_i32_1 = arith.constant 0 : i32
    return %c0_i32, %c0_i32_0 : i32, i32
  }
  func.func @transform_3(%arg0: i32, %arg1: i32) -> (i32, i32) {
    %c0_i32 = arith.constant 0 : i32
    %c0_i32_0 = arith.constant 0 : i32
    %c0_i32_1 = arith.constant 0 : i32
    return %c0_i32, %c0_i32_0 : i32, i32
  }
  func.func @transform_4(%arg0: i32, %arg1: i32) -> (i32, i32) {
    %c0_i32 = arith.constant 0 : i32
    %c0_i32_0 = arith.constant 0 : i32
    %c0_i32_1 = arith.constant 0 : i32
    return %c0_i32, %c0_i32_0 : i32, i32
  }
  func.func @transform_5(%arg0: i32, %arg1: i32) -> (i32, i32) {
    %c0_i32 = arith.constant 0 : i32
    %c0_i32_0 = arith.constant 0 : i32
    %c0_i32_1 = arith.constant 0 : i32
    return %c0_i32, %c0_i32_0 : i32, i32
  }
  func.func @transform_6(%arg0: i32, %arg1: i32) -> (i32, i32) {
    %c0_i32 = arith.constant 0 : i32
    %c0_i32_0 = arith.constant 0 : i32
    %c0_i32_1 = arith.constant 0 : i32
    return %c0_i32, %c0_i32_0 : i32, i32
  }
  func.func @transform_7(%arg0: i32, %arg1: i32) -> (i32, i32, i32) {
    %c0_i32 = arith.constant 0 : i32
    %c0_i32_0 = arith.constant 0 : i32
    return %arg0, %c0_i32, %arg1 : i32, i32, i32
  }
}

</mosaic_0001>

<llo_original>
// kernel: conv_pallas.1
$region0: #{conv_pallas.1}
  #allocation0 [shape = 'u32[]', space=smem, size = 0x4, offset = 0x4, fixed_abs, tag = 'smem constant byte address 0x4 - core index']
  #allocation1 [shape = 'u32[144,128]{1,0:T(1,128)}', space=vmem, size = 0x12000, scoped, tag = 'internal scratch']
  %s0 = inlined_call_operand.vmem [shape: f32[2,128,1000], index: 0, kind: input, shape index: {}]
  %s1 = inlined_call_operand.vmem [shape: f32[256,128], index: 1, kind: input, shape index: {}]
  %s2 = inlined_call_operand.vmem [shape: f32[256,1], index: 2, kind: input, shape index: {}]
  %s3 = inlined_call_operand.vmem [shape: f32[256,256], index: 3, kind: input, shape index: {}]
  %s4 = inlined_call_operand.vmem [shape: f32[256,1], index: 4, kind: input, shape index: {}]
  %s5 = inlined_call_operand.vmem [shape: f32[128,256], index: 5, kind: input, shape index: {}]
  %s6 = inlined_call_operand.vmem [shape: f32[128,1], index: 6, kind: input, shape index: {}]
  %s7 = inlined_call_operand.vmem [shape: f32[2,128,1000], index: 7, kind: output, shape index: {}]
  %s8 = sld [smem:[#allocation0]]
  $region103: #{conv_pallas.1} parent=0
    _
  %s10 = ssub.s32 1, %s8
  %s11 = scalar_select 0, %s10, %s8
  $region1: #{conv_pallas.1} parent=0
    #allocation2 [shape = 'u8[524288]{0}', space=vmem, size = 0x80000, scoped, tag = 'input window, operand 0']
    #allocation3 [shape = 'u8[524288]{0}', space=vmem, size = 0x80000, scoped, tag = 'output window, operand 0']
    loop: start=0, step=1, limit=6
    $region2: #{conv_pallas.1} parent=1 // loop_pre_header
      _
    $region3: #{conv_pallas.1} parent=1 // loop_header
      %s13 = sphi 0, %s17
      %p14 = scmp.ge.s32.totalorder %s13, 6
      %s20 = sphi 0, %s32
      %s21 = sphi 0, %s28
      %s22 = sphi 0, %s20
      %s23 = sphi 0, %s21
      %s24 = sphi 0, %s22
      %s25 = sphi 0, %s23
      %s37 = sphi 0, %s39
      %s40 = sphi 0, %s37
      %s41 = sphi 0, %s40
      %s57 = sphi 0, %s41
      %s61 = sphi 0, %s61
      %s63 = sphi 0, %s61
      %s64 = sphi 0, %s63
      %s78 = sphi 0, %s64
      %s82 = sphi 0, %s82
      %s84 = sphi 0, %s82
      %s85 = sphi 0, %s84
      %s99 = sphi 0, %s85
      %s103 = sphi 0, %s103
      %s105 = sphi 0, %s103
      %s106 = sphi 0, %s105
      %s120 = sphi 0, %s106
      %s124 = sphi 0, %s124
      %s126 = sphi 0, %s124
      %s127 = sphi 0, %s126
      %s141 = sphi 0, %s127
      %s145 = sphi 0, %s145
      %s147 = sphi 0, %s145
      %s148 = sphi 0, %s147
      %s162 = sphi 0, %s148
      %s166 = sphi 0, %s166
      %s168 = sphi 0, %s166
      %s169 = sphi 0, %s168
      %s183 = sphi 0, %s169
      %s191 = sphi 0, %s193
      %s194 = sphi 0, %s191
      %s195 = sphi 0, %s194
      %s211 = sphi 0, %s195
    $region4: #{conv_pallas.1} parent=1 // loop_header_branch
      %16 = sbr.rel (%p14) target = $region8
    $region5: #{conv_pallas.1} parent=1 // loop_body
      %s18 = ssub.s32 %s13, 1
      %s19 = ssub.s32 %s13, 2
      %s26 = sadd.s32 1, %s21
      %p27 = scmp.ge.s32.totalorder %s26, 2
      %s28 = scalar_select %p27, 0, %s26
      %s29 = sadd.s32 1, %s20
      %s30 = scalar_select %p27, %s29, %s20
      %p31 = scmp.ge.s32.totalorder %s30, 2
      %s32 = scalar_select %p31, 0, %s30
      %s33 = ssub.s32 %s20, %s32
      %s34 = ssub.s32 %s21, %s28
      %s35 = sor.u32 %s33, %s34
      %p36 = scmp.eq.s32.totalorder %s35, 0
      %s38 = sadd.s32 %s37, 1
      %s39 = scalar_select %p36, %s37, %s38
      %p42 = pneg %p36
      %p43 = scmp.eq.s32.totalorder %s13, 3
      %p44 = por %p42, %p43
      %p45 = scmp.ne.s32.totalorder %s37, %s40
      %p46 = scmp.eq.s32.totalorder %s13, 0
      %p47 = por %p45, %p46
      %p48 = scmp.ne.s32.totalorder %s37, %s40
      %p49 = scmp.eq.s32.totalorder %s18, 3
      %p50 = por %p48, %p49
      %p51 = scmp.ne.s32.totalorder %s40, %s41
      %p52 = scmp.eq.s32.totalorder %s18, 0
      %p53 = por %p51, %p52
      %p54 = scmp.ne.s32.totalorder %s40, %s41
      %p55 = scmp.eq.s32.totalorder %s19, 3
      %p56 = por %p54, %p55
      %p58 = scmp.ne.s32.totalorder %s41, %s57
      %p59 = scmp.eq.s32.totalorder %s19, 0
      %p60 = por %p58, %p59
      %s62 = sadd.s32 %s61, 1
      %p65 = scmp.eq.s32.totalorder %s13, 3
      %p66 = scmp.ne.s32.totalorder %s61, %s63
      %p67 = scmp.eq.s32.totalorder %s13, 0
      %p68 = por %p66, %p67
      %p69 = scmp.ne.s32.totalorder %s61, %s63
      %p70 = scmp.eq.s32.totalorder %s18, 3
      %p71 = por %p69, %p70
      %p72 = scmp.ne.s32.totalorder %s63, %s64
      %p73 = scmp.eq.s32.totalorder %s18, 0
      %p74 = por %p72, %p73
      %p75 = scmp.ne.s32.totalorder %s63, %s64
      %p76 = scmp.eq.s32.totalorder %s19, 3
      %p77 = por %p75, %p76
      %p79 = scmp.ne.s32.totalorder %s64, %s78
      %p80 = scmp.eq.s32.totalorder %s19, 0
      %p81 = por %p79, %p80
      %s83 = sadd.s32 %s82, 1
      %p86 = scmp.eq.s32.totalorder %s13, 3
      %p87 = scmp.ne.s32.totalorder %s82, %s84
      %p88 = scmp.eq.s32.totalorder %s13, 0
      %p89 = por %p87, %p88
      %p90 = scmp.ne.s32.totalorder %s82, %s84
      %p91 = scmp.eq.s32.totalorder %s18, 3
      %p92 = por %p90, %p91
      %p93 = scmp.ne.s32.totalorder %s84, %s85
      %p94 = scmp.eq.s32.totalorder %s18, 0
      %p95 = por %p93, %p94
      %p96 = scmp.ne.s32.totalorder %s84, %s85
      %p97 = scmp.eq.s32.totalorder %s19, 3
      %p98 = por %p96, %p97
      %p100 = scmp.ne.s32.totalorder %s85, %s99
      %p101 = scmp.eq.s32.totalorder %s19, 0
      %p102 = por %p100, %p101
      %s104 = sadd.s32 %s103, 1
      %p107 = scmp.eq.s32.totalorder %s13, 3
      %p108 = scmp.ne.s32.totalorder %s103, %s105
      %p109 = scmp.eq.s32.totalorder %s13, 0
      %p110 = por %p108, %p109
      %p111 = scmp.ne.s32.totalorder %s103, %s105
      %p112 = scmp.eq.s32.totalorder %s18, 3
      %p113 = por %p111, %p112
      %p114 = scmp.ne.s32.totalorder %s105, %s106
      %p115 = scmp.eq.s32.totalorder %s18, 0
      %p116 = por %p114, %p115
      %p117 = scmp.ne.s32.totalorder %s105, %s106
      %p118 = scmp.eq.s32.totalorder %s19, 3
      %p119 = por %p117, %p118
      %p121 = scmp.ne.s32.totalorder %s106, %s120
      %p122 = scmp.eq.s32.totalorder %s19, 0
      %p123 = por %p121, %p122
      %s125 = sadd.s32 %s124, 1
      %p128 = scmp.eq.s32.totalorder %s13, 3
      %p129 = scmp.ne.s32.totalorder %s124, %s126
      %p130 = scmp.eq.s32.totalorder %s13, 0
      %p131 = por %p129, %p130
      %p132 = scmp.ne.s32.totalorder %s124, %s126
      %p133 = scmp.eq.s32.totalorder %s18, 3
      %p134 = por %p132, %p133
      %p135 = scmp.ne.s32.totalorder %s126, %s127
      %p136 = scmp.eq.s32.totalorder %s18, 0
      %p137 = por %p135, %p136
      %p138 = scmp.ne.s32.totalorder %s126, %s127
      %p139 = scmp.eq.s32.totalorder %s19, 3
      %p140 = por %p138, %p139
      %p142 = scmp.ne.s32.totalorder %s127, %s141
      %p143 = scmp.eq.s32.totalorder %s19, 0
      %p144 = por %p142, %p143
      %s146 = sadd.s32 %s145, 1
      %p149 = scmp.eq.s32.totalorder %s13, 3
      %p150 = scmp.ne.s32.totalorder %s145, %s147
      %p151 = scmp.eq.s32.totalorder %s13, 0
      %p152 = por %p150, %p151
      %p153 = scmp.ne.s32.totalorder %s145, %s147
      %p154 = scmp.eq.s32.totalorder %s18, 3
      %p155 = por %p153, %p154
      %p156 = scmp.ne.s32.totalorder %s147, %s148
      %p157 = scmp.eq.s32.totalorder %s18, 0
      %p158 = por %p156, %p157
      %p159 = scmp.ne.s32.totalorder %s147, %s148
      %p160 = scmp.eq.s32.totalorder %s19, 3
      %p161 = por %p159, %p160
      %p163 = scmp.ne.s32.totalorder %s148, %s162
      %p164 = scmp.eq.s32.totalorder %s19, 0
      %p165 = por %p163, %p164
      %s167 = sadd.s32 %s166, 1
      %p170 = scmp.eq.s32.totalorder %s13, 3
      %p171 = scmp.ne.s32.totalorder %s166, %s168
      %p172 = scmp.eq.s32.totalorder %s13, 0
      %p173 = por %p171, %p172
      %p174 = scmp.ne.s32.totalorder %s166, %s168
      %p175 = scmp.eq.s32.totalorder %s18, 3
      %p176 = por %p174, %p175
      %p177 = scmp.ne.s32.totalorder %s168, %s169
      %p178 = scmp.eq.s32.totalorder %s18, 0
      %p179 = por %p177, %p178
      %p180 = scmp.ne.s32.totalorder %s168, %s169
      %p181 = scmp.eq.s32.totalorder %s19, 3
      %p182 = por %p180, %p181
      %p184 = scmp.ne.s32.totalorder %s169, %s183
      %p185 = scmp.eq.s32.totalorder %s19, 0
      %p186 = por %p184, %p185
      %s187 = ssub.s32 %s20, %s32
      %s188 = ssub.s32 %s21, %s28
      %s189 = sor.u32 %s187, %s188
      %p190 = scmp.eq.s32.totalorder %s189, 0
      %s192 = sadd.s32 %s191, 1
      %s193 = scalar_select %p190, %s191, %s192
      %p196 = pneg %p190
      %p197 = scmp.eq.s32.totalorder %s13, 3
      %p198 = por %p196, %p197
      %p199 = scmp.ne.s32.totalorder %s191, %s194
      %p200 = scmp.eq.s32.totalorder %s13, 0
      %p201 = por %p199, %p200
      %p202 = scmp.ne.s32.totalorder %s191, %s194
      %p203 = scmp.eq.s32.totalorder %s18, 3
      %p204 = por %p202, %p203
      %p205 = scmp.ne.s32.totalorder %s194, %s195
      %p206 = scmp.eq.s32.totalorder %s18, 0
      %p207 = por %p205, %p206
      %p208 = scmp.ne.s32.totalorder %s194, %s195
      %p209 = scmp.eq.s32.totalorder %s19, 3
      %p210 = por %p208, %p209
      %p212 = scmp.ne.s32.totalorder %s195, %s211
      %p213 = scmp.eq.s32.totalorder %s19, 0
      %p214 = por %p212, %p213
      %p215 = scmp.le.s32.totalorder 1, %s13
      %p216 = scmp.lt.s32.totalorder %s13, 5
      %p217 = pnand %p215, %p216
      %p218 = pneg %p217
      // Predicated region
      $region9: #{conv_pallas.1} parent=5 // pred_check
        _
      $region10: #{conv_pallas.1} parent=5 // pred_check_branch
        %220 = sbr.rel (%p217) target = $region12
      $region11: #{conv_pallas.1} parent=5 // pred_region
        %s221 = ssub.s32 %s13, 1
        // Predicated region
        $region13: #{conv_pallas.1} parent=11 // pred_check
          %p222 = pneg %p74
        $region14: #{conv_pallas.1} parent=11 // pred_check_branch
          %224 = sbr.rel (%p222) target = $region16
        $region15: #{conv_pallas.1} parent=11 // pred_region
          _
        $region16: #{conv_pallas.1} parent=11 // pred_fallthru
          _
        // Predicated region
        $region17: #{conv_pallas.1} parent=11 // pred_check
          %p225 = pneg %p95
        $region18: #{conv_pallas.1} parent=11 // pred_check_branch
          %227 = sbr.rel (%p225) target = $region20
        $region19: #{conv_pallas.1} parent=11 // pred_region
          _
        $region20: #{conv_pallas.1} parent=11 // pred_fallthru
          _
        // Predicated region
        $region21: #{conv_pallas.1} parent=11 // pred_check
          %p228 = pneg %p116
        $region22: #{conv_pallas.1} parent=11 // pred_check_branch
          %230 = sbr.rel (%p228) target = $region24
        $region23: #{conv_pallas.1} parent=11 // pred_region
          _
        $region24: #{conv_pallas.1} parent=11 // pred_fallthru
          _
        // Predicated region
        $region25: #{conv_pallas.1} parent=11 // pred_check
          %p231 = pneg %p137
        $region26: #{conv_pallas.1} parent=11 // pred_check_branch
          %233 = sbr.rel (%p231) target = $region28
        $region27: #{conv_pallas.1} parent=11 // pred_region
          _
        $region28: #{conv_pallas.1} parent=11 // pred_fallthru
          _
        // Predicated region
        $region29: #{conv_pallas.1} parent=11 // pred_check
          %p234 = pneg %p158
        $region30: #{conv_pallas.1} parent=11 // pred_check_branch
          %236 = sbr.rel (%p234) target = $region32
        $region31: #{conv_pallas.1} parent=11 // pred_region
          _
        $region32: #{conv_pallas.1} parent=11 // pred_fallthru
          _
        // Predicated region
        $region33: #{conv_pallas.1} parent=11 // pred_check
          %p237 = pneg %p179
        $region34: #{conv_pallas.1} parent=11 // pred_check_branch
          %239 = sbr.rel (%p237) target = $region36
        $region35: #{conv_pallas.1} parent=11 // pred_region
          _
        $region36: #{conv_pallas.1} parent=11 // pred_fallthru
          _
      $region12: #{conv_pallas.1} parent=5 // pred_fallthru
        _
      %p240 = scmp.lt.s32.totalorder %s13, 4
      // Predicated region
      $region37: #{conv_pallas.1} parent=5 // pred_check
        %p241 = pneg %p240
      $region38: #{conv_pallas.1} parent=5 // pred_check_branch
        %243 = sbr.rel (%p241) target = $region40
      $region39: #{conv_pallas.1} parent=5 // pred_region
        // Predicated region
        $region41: #{conv_pallas.1} parent=39 // pred_check
          %p244 = pneg %p47
        $region42: #{conv_pallas.1} parent=39 // pred_check_branch
          %246 = sbr.rel (%p244) target = $region44
        $region43: #{conv_pallas.1} parent=39 // pred_region
          %s247 = sand.u32 %s37, 1
          %s248 = sand.u32 %s37, 1
          %s249 = smul.addr %s248, 512
          %s250 = scalar_lea.vmem [#allocation2], %s249
          %s251 = smul.u32 4, %s21
          %s252 = smul.addr %s20, 128
          %s253 = sadd.s32 %s251, %s252
          %s254 = smul.addr %s253, 8
          %s255 = scalar_lea.vmem %s0, %s254
          // Predicated region
          $region45: #{conv_pallas.1} parent=43 // pred_check
            _
          $region46: #{conv_pallas.1} parent=43 // pred_check_branch
            %257 = sbr.rel (0) target = $region48
          $region47: #{conv_pallas.1} parent=43 // pred_region
            // Predicated region
            $region49: #{conv_pallas.1} parent=47 // pred_check
              _
            $region50: #{conv_pallas.1} parent=47 // pred_check_branch
              %259 = sbr.rel (0) target = $region52
            $region51: #{conv_pallas.1} parent=47 // pred_region
              loop: start=0, step=1, limit=1
              $region53: #{conv_pallas.1} parent=51 // loop_pre_header
                _
              $region54: #{conv_pallas.1} parent=51 // loop_header
                %s261 = sphi 0, %s265
                %p262 = scmp.ge.s32.totalorder %s261, 1
                %s266 = sphi %s255, %s255
                %s267 = sphi %s250, %s250
              $region55: #{conv_pallas.1} parent=51 // loop_header_branch
                %264 = sbr.rel (%p262) target = $region59
              $region56: #{conv_pallas.1} parent=51 // loop_body
                %v268 = vld [vmem:[%s266] sm:$0xff]
                %269 = vst [vmem:[%s267] sm:$0xff] %v268
                %v270 = vld [vmem:[%s266 + $0x8] sm:$0xff]
                %271 = vst [vmem:[%s267 + $0x8] sm:$0xff] %v270
                %v272 = vld [vmem:[%s266 + $0x10] sm:$0xff]
                %273 = vst [vmem:[%s267 + $0x10] sm:$0xff] %v272
                %v274 = vld [vmem:[%s266 + $0x18] sm:$0xff]
                %275 = vst [vmem:[%s267 + $0x18] sm:$0xff] %v274
                %v276 = vld [vmem:[%s266 + $0x40] sm:$0xff]
                %277 = vst [vmem:[%s267 + $0x20] sm:$0xff] %v276
                %v278 = vld [vmem:[%s266 + $0x48] sm:$0xff]
                %279 = vst [vmem:[%s267 + $0x28] sm:$0xff] %v278
                %v280 = vld [vmem:[%s266 + $0x50] sm:$0xff]
                %281 = vst [vmem:[%s267 + $0x30] sm:$0xff] %v280
                %v282 = vld [vmem:[%s266 + $0x58] sm:$0xff]
                %283 = vst [vmem:[%s267 + $0x38] sm:$0xff] %v282
                %v284 = vld [vmem:[%s266 + $0x80] sm:$0xff]
                %285 = vst [vmem:[%s267 + $0x40] sm:$0xff] %v284
                %v286 = vld [vmem:[%s266 + $0x88] sm:$0xff]
                %287 = vst [vmem:[%s267 + $0x48] sm:$0xff] %v286
                %v288 = vld [vmem:[%s266 + $0x90] sm:$0xff]
                %289 = vst [vmem:[%s267 + $0x50] sm:$0xff] %v288
                %v290 = vld [vmem:[%s266 + $0x98] sm:$0xff]
                %291 = vst [vmem:[%s267 + $0x58] sm:$0xff] %v290
                %v292 = vld [vmem:[%s266 + $0xc0] sm:$0xff]
                %293 = vst [vmem:[%s267 + $0x60] sm:$0xff] %v292
                %v294 = vld [vmem:[%s266 + $0xc8] sm:$0xff]
                %295 = vst [vmem:[%s267 + $0x68] sm:$0xff] %v294
                %v296 = vld [vmem:[%s266 + $0xd0] sm:$0xff]
                %297 = vst [vmem:[%s267 + $0x70] sm:$0xff] %v296
                %v298 = vld [vmem:[%s266 + $0xd8] sm:$0xff]
                %299 = vst [vmem:[%s267 + $0x78] sm:$0xff] %v298
                %v300 = vld [vmem:[%s266 + $0x100] sm:$0xff]
                %301 = vst [vmem:[%s267 + $0x80] sm:$0xff] %v300
                %v302 = vld [vmem:[%s266 + $0x108] sm:$0xff]
                %303 = vst [vmem:[%s267 + $0x88] sm:$0xff] %v302
                %v304 = vld [vmem:[%s266 + $0x110] sm:$0xff]
                %305 = vst [vmem:[%s267 + $0x90] sm:$0xff] %v304
                %v306 = vld [vmem:[%s266 + $0x118] sm:$0xff]
                %307 = vst [vmem:[%s267 + $0x98] sm:$0xff] %v306
                %v308 = vld [vmem:[%s266 + $0x140] sm:$0xff]
                %309 = vst [vmem:[%s267 + $0xa0] sm:$0xff] %v308
                %v310 = vld [vmem:[%s266 + $0x148] sm:$0xff]
                %311 = vst [vmem:[%s267 + $0xa8] sm:$0xff] %v310
                %v312 = vld [vmem:[%s266 + $0x150] sm:$0xff]
                %313 = vst [vmem:[%s267 + $0xb0] sm:$0xff] %v312
                %v314 = vld [vmem:[%s266 + $0x158] sm:$0xff]
                %315 = vst [vmem:[%s267 + $0xb8] sm:$0xff] %v314
                %v316 = vld [vmem:[%s266 + $0x180] sm:$0xff]
                %317 = vst [vmem:[%s267 + $0xc0] sm:$0xff] %v316
                %v318 = vld [vmem:[%s266 + $0x188] sm:$0xff]
                %319 = vst [vmem:[%s267 + $0xc8] sm:$0xff] %v318
                %v320 = vld [vmem:[%s266 + $0x190] sm:$0xff]
                %321 = vst [vmem:[%s267 + $0xd0] sm:$0xff] %v320
                %v322 = vld [vmem:[%s266 + $0x198] sm:$0xff]
                %323 = vst [vmem:[%s267 + $0xd8] sm:$0xff] %v322
                %v324 = vld [vmem:[%s266 + $0x1c0] sm:$0xff]
                %325 = vst [vmem:[%s267 + $0xe0] sm:$0xff] %v324
                %v326 = vld [vmem:[%s266 + $0x1c8] sm:$0xff]
                %327 = vst [vmem:[%s267 + $0xe8] sm:$0xff] %v326
                %v328 = vld [vmem:[%s266 + $0x1d0] sm:$0xff]
                %329 = vst [vmem:[%s267 + $0xf0] sm:$0xff] %v328
                %v330 = vld [vmem:[%s266 + $0x1d8] sm:$0xff]
                %331 = vst [vmem:[%s267 + $0xf8] sm:$0xff] %v330
                %v332 = vld [vmem:[%s266 + $0x200] sm:$0xff]
                %333 = vst [vmem:[%s267 + $0x100] sm:$0xff] %v332
                %v334 = vld [vmem:[%s266 + $0x208] sm:$0xff]
                %335 = vst [vmem:[%s267 + $0x108] sm:$0xff] %v334
                %v336 = vld [vmem:[%s266 + $0x210] sm:$0xff]
                %337 = vst [vmem:[%s267 + $0x110] sm:$0xff] %v336
                %v338 = vld [vmem:[%s266 + $0x218] sm:$0xff]
                %339 = vst [vmem:[%s267 + $0x118] sm:$0xff] %v338
                %v340 = vld [vmem:[%s266 + $0x240] sm:$0xff]
                %341 = vst [vmem:[%s267 + $0x120] sm:$0xff] %v340
                %v342 = vld [vmem:[%s266 + $0x248] sm:$0xff]
                %343 = vst [vmem:[%s267 + $0x128] sm:$0xff] %v342
                %v344 = vld [vmem:[%s266 + $0x250] sm:$0xff]
                %345 = vst [vmem:[%s267 + $0x130] sm:$0xff] %v344
                %v346 = vld [vmem:[%s266 + $0x258] sm:$0xff]
                %347 = vst [vmem:[%s267 + $0x138] sm:$0xff] %v346
                %v348 = vld [vmem:[%s266 + $0x280] sm:$0xff]
                %349 = vst [vmem:[%s267 + $0x140] sm:$0xff] %v348
                %v350 = vld [vmem:[%s266 + $0x288] sm:$0xff]
                %351 = vst [vmem:[%s267 + $0x148] sm:$0xff] %v350
                %v352 = vld [vmem:[%s266 + $0x290] sm:$0xff]
                %353 = vst [vmem:[%s267 + $0x150] sm:$0xff] %v352
                %v354 = vld [vmem:[%s266 + $0x298] sm:$0xff]
                %355 = vst [vmem:[%s267 + $0x158] sm:$0xff] %v354
                %v356 = vld [vmem:[%s266 + $0x2c0] sm:$0xff]
                %357 = vst [vmem:[%s267 + $0x160] sm:$0xff] %v356
                %v358 = vld [vmem:[%s266 + $0x2c8] sm:$0xff]
                %359 = vst [vmem:[%s267 + $0x168] sm:$0xff] %v358
                %v360 = vld [vmem:[%s266 + $0x2d0] sm:$0xff]
                %361 = vst [vmem:[%s267 + $0x170] sm:$0xff] %v360
                %v362 = vld [vmem:[%s266 + $0x2d8] sm:$0xff]
                %363 = vst [vmem:[%s267 + $0x178] sm:$0xff] %v362
                %v364 = vld [vmem:[%s266 + $0x300] sm:$0xff]
                %365 = vst [vmem:[%s267 + $0x180] sm:$0xff] %v364
                %v366 = vld [vmem:[%s266 + $0x308] sm:$0xff]
                %367 = vst [vmem:[%s267 + $0x188] sm:$0xff] %v366
                %v368 = vld [vmem:[%s266 + $0x310] sm:$0xff]
                %369 = vst [vmem:[%s267 + $0x190] sm:$0xff] %v368
                %v370 = vld [vmem:[%s266 + $0x318] sm:$0xff]
                %371 = vst [vmem:[%s267 + $0x198] sm:$0xff] %v370
                %v372 = vld [vmem:[%s266 + $0x340] sm:$0xff]
                %373 = vst [vmem:[%s267 + $0x1a0] sm:$0xff] %v372
                %v374 = vld [vmem:[%s266 + $0x348] sm:$0xff]
                %375 = vst [vmem:[%s267 + $0x1a8] sm:$0xff] %v374
                %v376 = vld [vmem:[%s266 + $0x350] sm:$0xff]
                %377 = vst [vmem:[%s267 + $0x1b0] sm:$0xff] %v376
                %v378 = vld [vmem:[%s266 + $0x358] sm:$0xff]
                %379 = vst [vmem:[%s267 + $0x1b8] sm:$0xff] %v378
                %v380 = vld [vmem:[%s266 + $0x380] sm:$0xff]
                %381 = vst [vmem:[%s267 + $0x1c0] sm:$0xff] %v380
                %v382 = vld [vmem:[%s266 + $0x388] sm:$0xff]
                %383 = vst [vmem:[%s267 + $0x1c8] sm:$0xff] %v382
                %v384 = vld [vmem:[%s266 + $0x390] sm:$0xff]
                %385 = vst [vmem:[%s267 + $0x1d0] sm:$0xff] %v384
                %v386 = vld [vmem:[%s266 + $0x398] sm:$0xff]
                %387 = vst [vmem:[%s267 + $0x1d8] sm:$0xff] %v386
                %v388 = vld [vmem:[%s266 + $0x3c0] sm:$0xff]
                %389 = vst [vmem:[%s267 + $0x1e0] sm:$0xff] %v388
                %v390 = vld [vmem:[%s266 + $0x3c8] sm:$0xff]
                %391 = vst [vmem:[%s267 + $0x1e8] sm:$0xff] %v390
                %v392 = vld [vmem:[%s266 + $0x3d0] sm:$0xff]
                %393 = vst [vmem:[%s267 + $0x1f0] sm:$0xff] %v392
                %v394 = vld [vmem:[%s266 + $0x3d8] sm:$0xff]
                %395 = vst [vmem:[%s267 + $0x1f8] sm:$0xff] %v394
              $region57: #{conv_pallas.1} parent=51 // loop_footer
                %s265 = sadd.s32 1, %s261
              $region58: #{conv_pallas.1} parent=51 // loop_footer_branch
                %260 = sbr.rel target = $region54
              $region59: #{conv_pallas.1} parent=51 // loop_exit
                _
            $region52: #{conv_pallas.1} parent=47 // pred_fallthru
              _
            // Predicated region
            $region60: #{conv_pallas.1} parent=47 // pred_check
              _
            $region61: #{conv_pallas.1} parent=47 // pred_check_branch
              %397 = sbr.rel target = $region63
            $region62: #{conv_pallas.1} parent=47 // pred_region
              _
            $region63: #{conv_pallas.1} parent=47 // pred_fallthru
              _
          $region48: #{conv_pallas.1} parent=43 // pred_fallthru
            _
          %398 = vnop
        $region44: #{conv_pallas.1} parent=39 // pred_fallthru
          _
      $region40: #{conv_pallas.1} parent=5 // pred_fallthru
        _
      %p399 = scmp.le.s32.totalorder 1, %s13
      %p400 = scmp.lt.s32.totalorder %s13, 5
      %p401 = pnand %p399, %p400
      %p402 = pneg %p401
      // Predicated region
      $region64: #{conv_pallas.1} parent=5 // pred_check
        _
      $region65: #{conv_pallas.1} parent=5 // pred_check_branch
        %404 = sbr.rel (%p401) target = $region67
      $region66: #{conv_pallas.1} parent=5 // pred_region
        %s405 = ssub.s32 %s13, 1
        %s406 = sand.u32 %s40, 1
        %s407 = sand.u32 %s40, 1
        %s408 = smul.addr %s407, 512
        %s409 = scalar_lea.vmem [#allocation2], %s408
        // Predicated region
        $region68: #{conv_pallas.1} parent=66 // pred_check
          %p410 = pneg %p53
        $region69: #{conv_pallas.1} parent=66 // pred_check_branch
          %412 = sbr.rel (%p410) target = $region71
        $region70: #{conv_pallas.1} parent=66 // pred_region
          _
        $region71: #{conv_pallas.1} parent=66 // pred_fallthru
          _
        %s413 = sand.u32 %s40, 1
        %s414 = sand.u32 %s40, 1
        %s415 = smul.addr %s414, 512
        %s416 = scalar_lea.vmem [#allocation2], %s415
        %p417 = pneg %p53
        %p418 = pneg %p50
        %p419 = pneg %p74
        %p420 = pneg %p71
        %p421 = pneg %p95
        %p422 = pneg %p92
        %p423 = pneg %p116
        %p424 = pneg %p113
        %p425 = pneg %p137
        %p426 = pneg %p134
        %p427 = pneg %p158
        %p428 = pneg %p155
        %p429 = pneg %p179
        %p430 = pneg %p176
        %p431 = pneg %p207
        %p432 = pneg %p204
        %s433 = sand.u32 %s194, 1
        %s434 = sand.u32 %s194, 1
        %s435 = smul.addr %s434, 512
        %s436 = scalar_lea.vmem [#allocation3], %s435
        %s437 = smul.u32 4, %s23
        %s438 = smul.u32 4, %s23
        %v439 = vld [vmem:[%s1] sm:$0xff]
        %v440 = vld [vmem:[%s1 + $0x8] sm:$0xff]
        %v441 = vld [vmem:[%s1 + $0x10] sm:$0xff]
        %v442 = vld [vmem:[%s1 + $0x18] sm:$0xff]
        %v443 = vld [vmem:[%s1 + $0x20] sm:$0xff]
        %v444 = vld [vmem:[%s1 + $0x28] sm:$0xff]
        %v445 = vld [vmem:[%s1 + $0x30] sm:$0xff]
        %v446 = vld [vmem:[%s1 + $0x38] sm:$0xff]
        %v447 = vld [vmem:[%s1 + $0x40] sm:$0xff]
        %v448 = vld [vmem:[%s1 + $0x48] sm:$0xff]
        %v449 = vld [vmem:[%s1 + $0x50] sm:$0xff]
        %v450 = vld [vmem:[%s1 + $0x58] sm:$0xff]
        %v451 = vld [vmem:[%s1 + $0x60] sm:$0xff]
        %v452 = vld [vmem:[%s1 + $0x68] sm:$0xff]
        %v453 = vld [vmem:[%s1 + $0x70] sm:$0xff]
        %v454 = vld [vmem:[%s1 + $0x78] sm:$0xff]
        %v455 = vld [vmem:[%s1 + $0x80] sm:$0xff]
        %v456 = vld [vmem:[%s1 + $0x88] sm:$0xff]
        %v457 = vld [vmem:[%s1 + $0x90] sm:$0xff]
        %v458 = vld [vmem:[%s1 + $0x98] sm:$0xff]
        %v459 = vld [vmem:[%s1 + $0xa0] sm:$0xff]
        %v460 = vld [vmem:[%s1 + $0xa8] sm:$0xff]
        %v461 = vld [vmem:[%s1 + $0xb0] sm:$0xff]
        %v462 = vld [vmem:[%s1 + $0xb8] sm:$0xff]
        %v463 = vld [vmem:[%s1 + $0xc0] sm:$0xff]
        %v464 = vld [vmem:[%s1 + $0xc8] sm:$0xff]
        %v465 = vld [vmem:[%s1 + $0xd0] sm:$0xff]
        %v466 = vld [vmem:[%s1 + $0xd8] sm:$0xff]
        %v467 = vld [vmem:[%s1 + $0xe0] sm:$0xff]
        %v468 = vld [vmem:[%s1 + $0xe8] sm:$0xff]
        %v469 = vld [vmem:[%s1 + $0xf0] sm:$0xff]
        %v470 = vld [vmem:[%s1 + $0xf8] sm:$0xff]
        %v471 = vld [vmem:[%s3] sm:$0xff]
        %v472 = vld [vmem:[%s3 + $0x8] sm:$0xff]
        %v473 = vld [vmem:[%s3 + $0x10] sm:$0xff]
        %v474 = vld [vmem:[%s3 + $0x18] sm:$0xff]
        %v475 = vld [vmem:[%s3 + $0x20] sm:$0xff]
        %v476 = vld [vmem:[%s3 + $0x28] sm:$0xff]
        %v477 = vld [vmem:[%s3 + $0x30] sm:$0xff]
        %v478 = vld [vmem:[%s3 + $0x38] sm:$0xff]
        %v479 = vld [vmem:[%s3 + $0x40] sm:$0xff]
        %v480 = vld [vmem:[%s3 + $0x48] sm:$0xff]
        %v481 = vld [vmem:[%s3 + $0x50] sm:$0xff]
        %v482 = vld [vmem:[%s3 + $0x58] sm:$0xff]
        %v483 = vld [vmem:[%s3 + $0x60] sm:$0xff]
        %v484 = vld [vmem:[%s3 + $0x68] sm:$0xff]
        %v485 = vld [vmem:[%s3 + $0x70] sm:$0xff]
        %v486 = vld [vmem:[%s3 + $0x78] sm:$0xff]
        %v487 = vld [vmem:[%s3 + $0x80] sm:$0xff]
        %v488 = vld [vmem:[%s3 + $0x88] sm:$0xff]
        %v489 = vld [vmem:[%s3 + $0x90] sm:$0xff]
        %v490 = vld [vmem:[%s3 + $0x98] sm:$0xff]
        %v491 = vld [vmem:[%s3 + $0xa0] sm:$0xff]
        %v492 = vld [vmem:[%s3 + $0xa8] sm:$0xff]
        %v493 = vld [vmem:[%s3 + $0xb0] sm:$0xff]
        %v494 = vld [vmem:[%s3 + $0xb8] sm:$0xff]
        %v495 = vld [vmem:[%s3 + $0xc0] sm:$0xff]
        %v496 = vld [vmem:[%s3 + $0xc8] sm:$0xff]
        %v497 = vld [vmem:[%s3 + $0xd0] sm:$0xff]
        %v498 = vld [vmem:[%s3 + $0xd8] sm:$0xff]
        %v499 = vld [vmem:[%s3 + $0xe0] sm:$0xff]
        %v500 = vld [vmem:[%s3 + $0xe8] sm:$0xff]
        %v501 = vld [vmem:[%s3 + $0xf0] sm:$0xff]
        %v502 = vld [vmem:[%s3 + $0xf8] sm:$0xff]
        %v503 = vld [vmem:[%s3 + $0x100] sm:$0xff]
        %v504 = vld [vmem:[%s3 + $0x108] sm:$0xff]
        %v505 = vld [vmem:[%s3 + $0x110] sm:$0xff]
        %v506 = vld [vmem:[%s3 + $0x118] sm:$0xff]
        %v507 = vld [vmem:[%s3 + $0x120] sm:$0xff]
        %v508 = vld [vmem:[%s3 + $0x128] sm:$0xff]
        %v509 = vld [vmem:[%s3 + $0x130] sm:$0xff]
        %v510 = vld [vmem:[%s3 + $0x138] sm:$0xff]
        %v511 = vld [vmem:[%s3 + $0x140] sm:$0xff]
        %v512 = vld [vmem:[%s3 + $0x148] sm:$0xff]
        %v513 = vld [vmem:[%s3 + $0x150] sm:$0xff]
        %v514 = vld [vmem:[%s3 + $0x158] sm:$0xff]
        %v515 = vld [vmem:[%s3 + $0x160] sm:$0xff]
        %v516 = vld [vmem:[%s3 + $0x168] sm:$0xff]
        %v517 = vld [vmem:[%s3 + $0x170] sm:$0xff]
        %v518 = vld [vmem:[%s3 + $0x178] sm:$0xff]
        %v519 = vld [vmem:[%s3 + $0x180] sm:$0xff]
        %v520 = vld [vmem:[%s3 + $0x188] sm:$0xff]
        %v521 = vld [vmem:[%s3 + $0x190] sm:$0xff]
        %v522 = vld [vmem:[%s3 + $0x198] sm:$0xff]
        %v523 = vld [vmem:[%s3 + $0x1a0] sm:$0xff]
        %v524 = vld [vmem:[%s3 + $0x1a8] sm:$0xff]
        %v525 = vld [vmem:[%s3 + $0x1b0] sm:$0xff]
        %v526 = vld [vmem:[%s3 + $0x1b8] sm:$0xff]
        %v527 = vld [vmem:[%s3 + $0x1c0] sm:$0xff]
        %v528 = vld [vmem:[%s3 + $0x1c8] sm:$0xff]
        %v529 = vld [vmem:[%s3 + $0x1d0] sm:$0xff]
        %v530 = vld [vmem:[%s3 + $0x1d8] sm:$0xff]
        %v531 = vld [vmem:[%s3 + $0x1e0] sm:$0xff]
        %v532 = vld [vmem:[%s3 + $0x1e8] sm:$0xff]
        %v533 = vld [vmem:[%s3 + $0x1f0] sm:$0xff]
        %v534 = vld [vmem:[%s3 + $0x1f8] sm:$0xff]
        %v535 = vld [vmem:[%s5] sm:$0xff]
        %v536 = vld [vmem:[%s5 + $0x8] sm:$0xff]
        %v537 = vld [vmem:[%s5 + $0x10] sm:$0xff]
        %v538 = vld [vmem:[%s5 + $0x18] sm:$0xff]
        %v539 = vld [vmem:[%s5 + $0x20] sm:$0xff]
        %v540 = vld [vmem:[%s5 + $0x28] sm:$0xff]
        %v541 = vld [vmem:[%s5 + $0x30] sm:$0xff]
        %v542 = vld [vmem:[%s5 + $0x38] sm:$0xff]
        %v543 = vld [vmem:[%s5 + $0x40] sm:$0xff]
        %v544 = vld [vmem:[%s5 + $0x48] sm:$0xff]
        %v545 = vld [vmem:[%s5 + $0x50] sm:$0xff]
        %v546 = vld [vmem:[%s5 + $0x58] sm:$0xff]
        %v547 = vld [vmem:[%s5 + $0x60] sm:$0xff]
        %v548 = vld [vmem:[%s5 + $0x68] sm:$0xff]
        %v549 = vld [vmem:[%s5 + $0x70] sm:$0xff]
        %v550 = vld [vmem:[%s5 + $0x78] sm:$0xff]
        %v551 = vld [vmem:[%s5 + $0x80] sm:$0xff]
        %v552 = vld [vmem:[%s5 + $0x88] sm:$0xff]
        %v553 = vld [vmem:[%s5 + $0x90] sm:$0xff]
        %v554 = vld [vmem:[%s5 + $0x98] sm:$0xff]
        %v555 = vld [vmem:[%s5 + $0xa0] sm:$0xff]
        %v556 = vld [vmem:[%s5 + $0xa8] sm:$0xff]
        %v557 = vld [vmem:[%s5 + $0xb0] sm:$0xff]
        %v558 = vld [vmem:[%s5 + $0xb8] sm:$0xff]
        %v559 = vld [vmem:[%s5 + $0xc0] sm:$0xff]
        %v560 = vld [vmem:[%s5 + $0xc8] sm:$0xff]
        %v561 = vld [vmem:[%s5 + $0xd0] sm:$0xff]
        %v562 = vld [vmem:[%s5 + $0xd8] sm:$0xff]
        %v563 = vld [vmem:[%s5 + $0xe0] sm:$0xff]
        %v564 = vld [vmem:[%s5 + $0xe8] sm:$0xff]
        %v565 = vld [vmem:[%s5 + $0xf0] sm:$0xff]
        %v566 = vld [vmem:[%s5 + $0xf8] sm:$0xff]
        %v567 = vld [vmem:[%s2] sm:$0xff]
        %v568 = vld [vmem:[%s2 + $0x8] sm:$0xff]
        %v569 = vld [vmem:[%s2 + $0x10] sm:$0xff]
        %v570 = vld [vmem:[%s2 + $0x18] sm:$0xff]
        %v571 = vld [vmem:[%s2 + $0x20] sm:$0xff]
        %v572 = vld [vmem:[%s2 + $0x28] sm:$0xff]
        %v573 = vld [vmem:[%s2 + $0x30] sm:$0xff]
        %v574 = vld [vmem:[%s2 + $0x38] sm:$0xff]
        %v575 = vld [vmem:[%s2 + $0x40] sm:$0xff]
        %v576 = vld [vmem:[%s2 + $0x48] sm:$0xff]
        %v577 = vld [vmem:[%s2 + $0x50] sm:$0xff]
        %v578 = vld [vmem:[%s2 + $0x58] sm:$0xff]
        %v579 = vld [vmem:[%s2 + $0x60] sm:$0xff]
        %v580 = vld [vmem:[%s2 + $0x68] sm:$0xff]
        %v581 = vld [vmem:[%s2 + $0x70] sm:$0xff]
        %v582 = vld [vmem:[%s2 + $0x78] sm:$0xff]
        %v583 = vld [vmem:[%s2 + $0x80] sm:$0xff]
        %v584 = vld [vmem:[%s2 + $0x88] sm:$0xff]
        %v585 = vld [vmem:[%s2 + $0x90] sm:$0xff]
        %v586 = vld [vmem:[%s2 + $0x98] sm:$0xff]
        %v587 = vld [vmem:[%s2 + $0xa0] sm:$0xff]
        %v588 = vld [vmem:[%s2 + $0xa8] sm:$0xff]
        %v589 = vld [vmem:[%s2 + $0xb0] sm:$0xff]
        %v590 = vld [vmem:[%s2 + $0xb8] sm:$0xff]
        %v591 = vld [vmem:[%s2 + $0xc0] sm:$0xff]
        %v592 = vld [vmem:[%s2 + $0xc8] sm:$0xff]
        %v593 = vld [vmem:[%s2 + $0xd0] sm:$0xff]
        %v594 = vld [vmem:[%s2 + $0xd8] sm:$0xff]
        %v595 = vld [vmem:[%s2 + $0xe0] sm:$0xff]
        %v596 = vld [vmem:[%s2 + $0xe8] sm:$0xff]
        %v597 = vld [vmem:[%s2 + $0xf0] sm:$0xff]
        %v598 = vld [vmem:[%s2 + $0xf8] sm:$0xff]
        %v599 = vld [vmem:[%s4] sm:$0xff]
        %v600 = vld [vmem:[%s4 + $0x8] sm:$0xff]
        %v601 = vld [vmem:[%s4 + $0x10] sm:$0xff]
        %v602 = vld [vmem:[%s4 + $0x18] sm:$0xff]
        %v603 = vld [vmem:[%s4 + $0x20] sm:$0xff]
        %v604 = vld [vmem:[%s4 + $0x28] sm:$0xff]
        %v605 = vld [vmem:[%s4 + $0x30] sm:$0xff]
        %v606 = vld [vmem:[%s4 + $0x38] sm:$0xff]
        %v607 = vld [vmem:[%s4 + $0x40] sm:$0xff]
        %v608 = vld [vmem:[%s4 + $0x48] sm:$0xff]
        %v609 = vld [vmem:[%s4 + $0x50] sm:$0xff]
        %v610 = vld [vmem:[%s4 + $0x58] sm:$0xff]
        %v611 = vld [vmem:[%s4 + $0x60] sm:$0xff]
        %v612 = vld [vmem:[%s4 + $0x68] sm:$0xff]
        %v613 = vld [vmem:[%s4 + $0x70] sm:$0xff]
        %v614 = vld [vmem:[%s4 + $0x78] sm:$0xff]
        %v615 = vld [vmem:[%s4 + $0x80] sm:$0xff]
        %v616 = vld [vmem:[%s4 + $0x88] sm:$0xff]
        %v617 = vld [vmem:[%s4 + $0x90] sm:$0xff]
        %v618 = vld [vmem:[%s4 + $0x98] sm:$0xff]
        %v619 = vld [vmem:[%s4 + $0xa0] sm:$0xff]
        %v620 = vld [vmem:[%s4 + $0xa8] sm:$0xff]
        %v621 = vld [vmem:[%s4 + $0xb0] sm:$0xff]
        %v622 = vld [vmem:[%s4 + $0xb8] sm:$0xff]
        %v623 = vld [vmem:[%s4 + $0xc0] sm:$0xff]
        %v624 = vld [vmem:[%s4 + $0xc8] sm:$0xff]
        %v625 = vld [vmem:[%s4 + $0xd0] sm:$0xff]
        %v626 = vld [vmem:[%s4 + $0xd8] sm:$0xff]
        %v627 = vld [vmem:[%s4 + $0xe0] sm:$0xff]
        %v628 = vld [vmem:[%s4 + $0xe8] sm:$0xff]
        %v629 = vld [vmem:[%s4 + $0xf0] sm:$0xff]
        %v630 = vld [vmem:[%s4 + $0xf8] sm:$0xff]
        %v631 = vld [vmem:[%s6] sm:$0xff]
        %v632 = vld [vmem:[%s6 + $0x8] sm:$0xff]
        %v633 = vld [vmem:[%s6 + $0x10] sm:$0xff]
        %v634 = vld [vmem:[%s6 + $0x18] sm:$0xff]
        %v635 = vld [vmem:[%s6 + $0x20] sm:$0xff]
        %v636 = vld [vmem:[%s6 + $0x28] sm:$0xff]
        %v637 = vld [vmem:[%s6 + $0x30] sm:$0xff]
        %v638 = vld [vmem:[%s6 + $0x38] sm:$0xff]
        %v639 = vld [vmem:[%s6 + $0x40] sm:$0xff]
        %v640 = vld [vmem:[%s6 + $0x48] sm:$0xff]
        %v641 = vld [vmem:[%s6 + $0x50] sm:$0xff]
        %v642 = vld [vmem:[%s6 + $0x58] sm:$0xff]
        %v643 = vld [vmem:[%s6 + $0x60] sm:$0xff]
        %v644 = vld [vmem:[%s6 + $0x68] sm:$0xff]
        %v645 = vld [vmem:[%s6 + $0x70] sm:$0xff]
        %v646 = vld [vmem:[%s6 + $0x78] sm:$0xff]
        %v647 = vld [vmem:[%s409] sm:$0xff]
        %v648 = vld [vmem:[%s409 + $0x8] sm:$0xff]
        %v649 = vld [vmem:[%s409 + $0x10] sm:$0xff]
        %v650 = vld [vmem:[%s409 + $0x18] sm:$0xff]
        %v651 = vld [vmem:[%s409 + $0x20] sm:$0xff]
        %v652 = vld [vmem:[%s409 + $0x28] sm:$0xff]
        %v653 = vld [vmem:[%s409 + $0x30] sm:$0xff]
        %v654 = vld [vmem:[%s409 + $0x38] sm:$0xff]
        %v655 = vld [vmem:[%s409 + $0x40] sm:$0xff]
        %v656 = vld [vmem:[%s409 + $0x48] sm:$0xff]
        %v657 = vld [vmem:[%s409 + $0x50] sm:$0xff]
        %v658 = vld [vmem:[%s409 + $0x58] sm:$0xff]
        %v659 = vld [vmem:[%s409 + $0x60] sm:$0xff]
        %v660 = vld [vmem:[%s409 + $0x68] sm:$0xff]
        %v661 = vld [vmem:[%s409 + $0x70] sm:$0xff]
        %v662 = vld [vmem:[%s409 + $0x78] sm:$0xff]
        %v663 = vld [vmem:[%s409 + $0x80] sm:$0xff]
        %v664 = vld [vmem:[%s409 + $0x88] sm:$0xff]
        %v665 = vld [vmem:[%s409 + $0x90] sm:$0xff]
        %v666 = vld [vmem:[%s409 + $0x98] sm:$0xff]
        %v667 = vld [vmem:[%s409 + $0xa0] sm:$0xff]
        %v668 = vld [vmem:[%s409 + $0xa8] sm:$0xff]
        %v669 = vld [vmem:[%s409 + $0xb0] sm:$0xff]
        %v670 = vld [vmem:[%s409 + $0xb8] sm:$0xff]
        %v671 = vld [vmem:[%s409 + $0xc0] sm:$0xff]
        %v672 = vld [vmem:[%s409 + $0xc8] sm:$0xff]
        %v673 = vld [vmem:[%s409 + $0xd0] sm:$0xff]
        %v674 = vld [vmem:[%s409 + $0xd8] sm:$0xff]
        %v675 = vld [vmem:[%s409 + $0xe0] sm:$0xff]
        %v676 = vld [vmem:[%s409 + $0xe8] sm:$0xff]
        %v677 = vld [vmem:[%s409 + $0xf0] sm:$0xff]
        %v678 = vld [vmem:[%s409 + $0xf8] sm:$0xff]
        %v679 = vld [vmem:[%s409 + $0x100] sm:$0xff]
        %v680 = vld [vmem:[%s409 + $0x108] sm:$0xff]
        %v681 = vld [vmem:[%s409 + $0x110] sm:$0xff]
        %v682 = vld [vmem:[%s409 + $0x118] sm:$0xff]
        %v683 = vld [vmem:[%s409 + $0x120] sm:$0xff]
        %v684 = vld [vmem:[%s409 + $0x128] sm:$0xff]
        %v685 = vld [vmem:[%s409 + $0x130] sm:$0xff]
        %v686 = vld [vmem:[%s409 + $0x138] sm:$0xff]
        %v687 = vld [vmem:[%s409 + $0x140] sm:$0xff]
        %v688 = vld [vmem:[%s409 + $0x148] sm:$0xff]
        %v689 = vld [vmem:[%s409 + $0x150] sm:$0xff]
        %v690 = vld [vmem:[%s409 + $0x158] sm:$0xff]
        %v691 = vld [vmem:[%s409 + $0x160] sm:$0xff]
        %v692 = vld [vmem:[%s409 + $0x168] sm:$0xff]
        %v693 = vld [vmem:[%s409 + $0x170] sm:$0xff]
        %v694 = vld [vmem:[%s409 + $0x178] sm:$0xff]
        %v695 = vld [vmem:[%s409 + $0x180] sm:$0xff]
        %v696 = vld [vmem:[%s409 + $0x188] sm:$0xff]
        %v697 = vld [vmem:[%s409 + $0x190] sm:$0xff]
        %v698 = vld [vmem:[%s409 + $0x198] sm:$0xff]
        %v699 = vld [vmem:[%s409 + $0x1a0] sm:$0xff]
        %v700 = vld [vmem:[%s409 + $0x1a8] sm:$0xff]
        %v701 = vld [vmem:[%s409 + $0x1b0] sm:$0xff]
        %v702 = vld [vmem:[%s409 + $0x1b8] sm:$0xff]
        %v703 = vld [vmem:[%s409 + $0x1c0] sm:$0xff]
        %v704 = vld [vmem:[%s409 + $0x1c8] sm:$0xff]
        %v705 = vld [vmem:[%s409 + $0x1d0] sm:$0xff]
        %v706 = vld [vmem:[%s409 + $0x1d8] sm:$0xff]
        %v707 = vld [vmem:[%s409 + $0x1e0] sm:$0xff]
        %v708 = vld [vmem:[%s409 + $0x1e8] sm:$0xff]
        %v709 = vld [vmem:[%s409 + $0x1f0] sm:$0xff]
        %v710 = vld [vmem:[%s409 + $0x1f8] sm:$0xff]
        %712 = vset.pattern.permute.xlu0 0
        %713 = vperm.xlu0 %712, %v567
        %v714 = vpop.permute.xlu0 %713
        %717 = vset.pattern.permute.xlu0 0
        %718 = vperm.xlu0 %717, %v568
        %v719 = vpop.permute.xlu0 %718
        %722 = vset.pattern.permute.xlu0 0
        %723 = vperm.xlu0 %722, %v569
        %v724 = vpop.permute.xlu0 %723
        %727 = vset.pattern.permute.xlu0 0
        %728 = vperm.xlu0 %727, %v570
        %v729 = vpop.permute.xlu0 %728
        %732 = vset.pattern.permute.xlu0 0
        %733 = vperm.xlu0 %732, %v571
        %v734 = vpop.permute.xlu0 %733
        %737 = vset.pattern.permute.xlu0 0
        %738 = vperm.xlu0 %737, %v572
        %v739 = vpop.permute.xlu0 %738
        %742 = vset.pattern.permute.xlu0 0
        %743 = vperm.xlu0 %742, %v573
        %v744 = vpop.permute.xlu0 %743
        %747 = vset.pattern.permute.xlu0 0
        %748 = vperm.xlu0 %747, %v574
        %v749 = vpop.permute.xlu0 %748
        %752 = vset.pattern.permute.xlu0 0
        %753 = vperm.xlu0 %752, %v575
        %v754 = vpop.permute.xlu0 %753
        %757 = vset.pattern.permute.xlu0 0
        %758 = vperm.xlu0 %757, %v576
        %v759 = vpop.permute.xlu0 %758
        %762 = vset.pattern.permute.xlu0 0
        %763 = vperm.xlu0 %762, %v577
        %v764 = vpop.permute.xlu0 %763
        %767 = vset.pattern.permute.xlu0 0
        %768 = vperm.xlu0 %767, %v578
        %v769 = vpop.permute.xlu0 %768
        %772 = vset.pattern.permute.xlu0 0
        %773 = vperm.xlu0 %772, %v579
        %v774 = vpop.permute.xlu0 %773
        %777 = vset.pattern.permute.xlu0 0
        %778 = vperm.xlu0 %777, %v580
        %v779 = vpop.permute.xlu0 %778
        %782 = vset.pattern.permute.xlu0 0
        %783 = vperm.xlu0 %782, %v581
        %v784 = vpop.permute.xlu0 %783
        %787 = vset.pattern.permute.xlu0 0
        %788 = vperm.xlu0 %787, %v582
        %v789 = vpop.permute.xlu0 %788
        %792 = vset.pattern.permute.xlu0 0
        %793 = vperm.xlu0 %792, %v583
        %v794 = vpop.permute.xlu0 %793
        %797 = vset.pattern.permute.xlu0 0
        %798 = vperm.xlu0 %797, %v584
        %v799 = vpop.permute.xlu0 %798
        %802 = vset.pattern.permute.xlu0 0
        %803 = vperm.xlu0 %802, %v585
        %v804 = vpop.permute.xlu0 %803
        %807 = vset.pattern.permute.xlu0 0
        %808 = vperm.xlu0 %807, %v586
        %v809 = vpop.permute.xlu0 %808
        %812 = vset.pattern.permute.xlu0 0
        %813 = vperm.xlu0 %812, %v587
        %v814 = vpop.permute.xlu0 %813
        %817 = vset.pattern.permute.xlu0 0
        %818 = vperm.xlu0 %817, %v588
        %v819 = vpop.permute.xlu0 %818
        %822 = vset.pattern.permute.xlu0 0
        %823 = vperm.xlu0 %822, %v589
        %v824 = vpop.permute.xlu0 %823
        %827 = vset.pattern.permute.xlu0 0
        %828 = vperm.xlu0 %827, %v590
        %v829 = vpop.permute.xlu0 %828
        %832 = vset.pattern.permute.xlu0 0
        %833 = vperm.xlu0 %832, %v591
        %v834 = vpop.permute.xlu0 %833
        %837 = vset.pattern.permute.xlu0 0
        %838 = vperm.xlu0 %837, %v592
        %v839 = vpop.permute.xlu0 %838
        %842 = vset.pattern.permute.xlu0 0
        %843 = vperm.xlu0 %842, %v593
        %v844 = vpop.permute.xlu0 %843
        %847 = vset.pattern.permute.xlu0 0
        %848 = vperm.xlu0 %847, %v594
        %v849 = vpop.permute.xlu0 %848
        %852 = vset.pattern.permute.xlu0 0
        %853 = vperm.xlu0 %852, %v595
        %v854 = vpop.permute.xlu0 %853
        %857 = vset.pattern.permute.xlu0 0
        %858 = vperm.xlu0 %857, %v596
        %v859 = vpop.permute.xlu0 %858
        %862 = vset.pattern.permute.xlu0 0
        %863 = vperm.xlu0 %862, %v597
        %v864 = vpop.permute.xlu0 %863
        %867 = vset.pattern.permute.xlu0 0
        %868 = vperm.xlu0 %867, %v598
        %v869 = vpop.permute.xlu0 %868
        %871 = vmatprep.subr.mxu0 %v648
        %872 = vmatpush1.msra.mxu0 %v647
        %873 = vmatprep.subr.mxu0 %v652
        %874 = vmatpush1.msra.mxu0 %v651
        %875 = vmatprep.subr.mxu0 %v656
        %876 = vmatpush1.msra.mxu0 %v655
        %877 = vmatprep.subr.mxu0 %v660
        %878 = vmatpush1.msra.mxu0 %v659
        %879 = vmatprep.subr.mxu0 %v664
        %880 = vmatpush1.msra.mxu0 %v663
        %881 = vmatprep.subr.mxu0 %v668
        %882 = vmatpush1.msra.mxu0 %v667
        %883 = vmatprep.subr.mxu0 %v672
        %884 = vmatpush1.msra.mxu0 %v671
        %885 = vmatprep.subr.mxu0 %v676
        %886 = vmatpush1.msra.mxu0 %v675
        %887 = vmatprep.subr.mxu0 %v680
        %888 = vmatpush1.msra.mxu0 %v679
        %889 = vmatprep.subr.mxu0 %v684
        %890 = vmatpush1.msra.mxu0 %v683
        %891 = vmatprep.subr.mxu0 %v688
        %892 = vmatpush1.msra.mxu0 %v687
        %893 = vmatprep.subr.mxu0 %v692
        %894 = vmatpush1.msra.mxu0 %v691
        %895 = vmatprep.subr.mxu0 %v696
        %896 = vmatpush1.msra.mxu0 %v695
        %897 = vmatprep.subr.mxu0 %v700
        %898 = vmatpush1.msra.mxu0 %v699
        %899 = vmatprep.subr.mxu0 %v704
        %900 = vmatpush1.msra.mxu0 %v703
        %901 = vmatprep.subr.mxu0 %v708
        %902 = vmatpush1.msra.mxu0 %v707
        %903 = vmatprep.subr.mxu0 0.0
        %904 = vmatpush1.msra.mxu0 0.0
        %905 = vmatprep.subr.mxu0 0.0
        %906 = vmatpush1.msra.mxu0 0.0
        %907 = vmatprep.subr.mxu0 0.0
        %908 = vmatpush1.msra.mxu0 0.0
        %909 = vmatprep.subr.mxu0 0.0
        %910 = vmatpush1.msra.mxu0 0.0
        %911 = vmatprep.subr.mxu0 0.0
        %912 = vmatpush1.msra.mxu0 0.0
        %913 = vmatprep.subr.mxu0 0.0
        %914 = vmatpush1.msra.mxu0 0.0
        %915 = vmatprep.subr.mxu0 0.0
        %916 = vmatpush1.msra.mxu0 0.0
        %917 = vmatprep.subr.mxu0 0.0
        %918 = vmatpush1.msra.mxu0 0.0
        %919 = vmatprep.subr.mxu0 0.0
        %920 = vmatpush1.msra.mxu0 0.0
        %921 = vmatprep.subr.mxu0 0.0
        %922 = vmatpush1.msra.mxu0 0.0
        %923 = vmatprep.subr.mxu0 0.0
        %924 = vmatpush1.msra.mxu0 0.0
        %925 = vmatprep.subr.mxu0 0.0
        %926 = vmatpush1.msra.mxu0 0.0
        %927 = vmatprep.subr.mxu0 0.0
        %928 = vmatpush1.msra.mxu0 0.0
        %929 = vmatprep.subr.mxu0 0.0
        %930 = vmatpush1.msra.mxu0 0.0
        %931 = vmatprep.subr.mxu0 0.0
        %932 = vmatpush1.msra.mxu0 0.0
        %933 = vmatprep.subr.mxu0 0.0
        %934 = vmatpush1.msra.mxu0 0.0
        %935 = vmatprep.mubr.f32.mxu0 0.0
        %936 = vmatmul.mubr.f32.gmra.mrb[0].mxu0 %v439
        %v937 = vpop.f32.mrb[0].mxu0
        %v938 = vadd.f32 %v714, %v937
        %v939 = vpop.f32.mrb[0].mxu0
        %v940 = vadd.f32 %v714, %v939
        %941 = vmatprep.mubr.f32.mxu0 0.0
        %942 = vmatmul.mubr.f32.gmra.mrb[0].mxu0 %v440
        %v943 = vpop.f32.mrb[0].mxu0
        %v944 = vadd.f32 %v719, %v943
        %v945 = vpop.f32.mrb[0].mxu0
        %v946 = vadd.f32 %v719, %v945
        %947 = vmatprep.mubr.f32.mxu0 0.0
        %948 = vmatmul.mubr.f32.gmra.mrb[0].mxu0 %v441
        %v949 = vpop.f32.mrb[0].mxu0
        %v950 = vadd.f32 %v724, %v949
        %v951 = vpop.f32.mrb[0].mxu0
        %v952 = vadd.f32 %v724, %v951
        %953 = vmatprep.mubr.f32.mxu0 0.0
        %954 = vmatmul.mubr.f32.gmra.mrb[0].mxu0 %v442
        %v955 = vpop.f32.mrb[0].mxu0
        %v956 = vadd.f32 %v729, %v955
        %v957 = vpop.f32.mrb[0].mxu0
        %v958 = vadd.f32 %v729, %v957
        %959 = vmatprep.mubr.f32.mxu0 0.0
        %960 = vmatmul.mubr.f32.gmra.mrb[0].mxu0 %v443
        %v961 = vpop.f32.mrb[0].mxu0
        %v962 = vadd.f32 %v734, %v961
        %v963 = vpop.f32.mrb[0].mxu0
        %v964 = vadd.f32 %v734, %v963
        %965 = vmatprep.mubr.f32.mxu0 0.0
        %966 = vmatmul.mubr.f32.gmra.mrb[0].mxu0 %v444
        %v967 = vpop.f32.mrb[0].mxu0
        %v968 = vadd.f32 %v739, %v967
        %v969 = vpop.f32.mrb[0].mxu0
        %v970 = vadd.f32 %v739, %v969
        %971 = vmatprep.mubr.f32.mxu0 0.0
        %972 = vmatmul.mubr.f32.gmra.mrb[0].mxu0 %v445
        %v973 = vpop.f32.mrb[0].mxu0
        %v974 = vadd.f32 %v744, %v973
        %v975 = vpop.f32.mrb[0].mxu0
        %v976 = vadd.f32 %v744, %v975
        %977 = vmatprep.mubr.f32.mxu0 0.0
        %978 = vmatmul.mubr.f32.gmra.mrb[0].mxu0 %v446
        %v979 = vpop.f32.mrb[0].mxu0
        %v980 = vadd.f32 %v749, %v979
        %v981 = vpop.f32.mrb[0].mxu0
        %v982 = vadd.f32 %v749, %v981
        %983 = vmatprep.mubr.f32.mxu0 0.0
        %984 = vmatmul.mubr.f32.gmra.mrb[0].mxu0 %v447
        %v985 = vpop.f32.mrb[0].mxu0
        %v986 = vadd.f32 %v754, %v985
        %v987 = vpop.f32.mrb[0].mxu0
        %v988 = vadd.f32 %v754, %v987
        %989 = vmatprep.mubr.f32.mxu0 0.0
        %990 = vmatmul.mubr.f32.gmra.mrb[0].mxu0 %v448
        %v991 = vpop.f32.mrb[0].mxu0
        %v992 = vadd.f32 %v759, %v991
        %v993 = vpop.f32.mrb[0].mxu0
        %v994 = vadd.f32 %v759, %v993
        %995 = vmatprep.mubr.f32.mxu0 0.0
        %996 = vmatmul.mubr.f32.gmra.mrb[0].mxu0 %v449
        %v997 = vpop.f32.mrb[0].mxu0
        %v998 = vadd.f32 %v764, %v997
        %v999 = vpop.f32.mrb[0].mxu0
        %v1000 = vadd.f32 %v764, %v999
        %1001 = vmatprep.mubr.f32.mxu0 0.0
        %1002 = vmatmul.mubr.f32.gmra.mrb[0].mxu0 %v450
        %v1003 = vpop.f32.mrb[0].mxu0
        %v1004 = vadd.f32 %v769, %v1003
        %v1005 = vpop.f32.mrb[0].mxu0
        %v1006 = vadd.f32 %v769, %v1005
        %1007 = vmatprep.mubr.f32.mxu0 0.0
        %1008 = vmatmul.mubr.f32.gmra.mrb[0].mxu0 %v451
        %v1009 = vpop.f32.mrb[0].mxu0
        %v1010 = vadd.f32 %v774, %v1009
        %v1011 = vpop.f32.mrb[0].mxu0
        %v1012 = vadd.f32 %v774, %v1011
        %1013 = vmatprep.mubr.f32.mxu0 0.0
        %1014 = vmatmul.mubr.f32.gmra.mrb[0].mxu0 %v452
        %v1015 = vpop.f32.mrb[0].mxu0
        %v1016 = vadd.f32 %v779, %v1015
        %v1017 = vpop.f32.mrb[0].mxu0
        %v1018 = vadd.f32 %v779, %v1017
        %1019 = vmatprep.mubr.f32.mxu0 0.0
        %1020 = vmatmul.mubr.f32.gmra.mrb[0].mxu0 %v453
        %v1021 = vpop.f32.mrb[0].mxu0
        %v1022 = vadd.f32 %v784, %v1021
        %v1023 = vpop.f32.mrb[0].mxu0
        %v1024 = vadd.f32 %v784, %v1023
        %1025 = vmatprep.mubr.f32.mxu0 0.0
        %1026 = vmatmul.mubr.f32.gmra.mrb[0].mxu0 %v454
        %v1027 = vpop.f32.mrb[0].mxu0
        %v1028 = vadd.f32 %v789, %v1027
        %v1029 = vpop.f32.mrb[0].mxu0
        %v1030 = vadd.f32 %v789, %v1029
        %1031 = vmatprep.mubr.f32.mxu0 0.0
        %1032 = vmatmul.mubr.f32.gmra.mrb[0].mxu0 %v455
        %v1033 = vpop.f32.mrb[0].mxu0
        %v1034 = vadd.f32 %v794, %v1033
        %v1035 = vpop.f32.mrb[0].mxu0
        %v1036 = vadd.f32 %v794, %v1035
        %1037 = vmatprep.mubr.f32.mxu0 0.0
        %1038 = vmatmul.mubr.f32.gmra.mrb[0].mxu0 %v456
        %v1039 = vpop.f32.mrb[0].mxu0
        %v1040 = vadd.f32 %v799, %v1039
        %v1041 = vpop.f32.mrb[0].mxu0
        %v1042 = vadd.f32 %v799, %v1041
        %1043 = vmatprep.mubr.f32.mxu0 0.0
        %1044 = vmatmul.mubr.f32.gmra.mrb[0].mxu0 %v457
        %v1045 = vpop.f32.mrb[0].mxu0
        %v1046 = vadd.f32 %v804, %v1045
        %v1047 = vpop.f32.mrb[0].mxu0
        %v1048 = vadd.f32 %v804, %v1047
        %1049 = vmatprep.mubr.f32.mxu0 0.0
        %1050 = vmatmul.mubr.f32.gmra.mrb[0].mxu0 %v458
        %v1051 = vpop.f32.mrb[0].mxu0
        %v1052 = vadd.f32 %v809, %v1051
        %v1053 = vpop.f32.mrb[0].mxu0
        %v1054 = vadd.f32 %v809, %v1053
        %1055 = vmatprep.mubr.f32.mxu0 0.0
        %1056 = vmatmul.mubr.f32.gmra.mrb[0].mxu0 %v459
        %v1057 = vpop.f32.mrb[0].mxu0
        %v1058 = vadd.f32 %v814, %v1057
        %v1059 = vpop.f32.mrb[0].mxu0
        %v1060 = vadd.f32 %v814, %v1059
        %1061 = vmatprep.mubr.f32.mxu0 0.0
        %1062 = vmatmul.mubr.f32.gmra.mrb[0].mxu0 %v460
        %v1063 = vpop.f32.mrb[0].mxu0
        %v1064 = vadd.f32 %v819, %v1063
        %v1065 = vpop.f32.mrb[0].mxu0
        %v1066 = vadd.f32 %v819, %v1065
        %1067 = vmatprep.mubr.f32.mxu0 0.0
        %1068 = vmatmul.mubr.f32.gmra.mrb[0].mxu0 %v461
        %v1069 = vpop.f32.mrb[0].mxu0
        %v1070 = vadd.f32 %v824, %v1069
        %v1071 = vpop.f32.mrb[0].mxu0
        %v1072 = vadd.f32 %v824, %v1071
        %1073 = vmatprep.mubr.f32.mxu0 0.0
        %1074 = vmatmul.mubr.f32.gmra.mrb[0].mxu0 %v462
        %v1075 = vpop.f32.mrb[0].mxu0
        %v1076 = vadd.f32 %v829, %v1075
        %v1077 = vpop.f32.mrb[0].mxu0
        %v1078 = vadd.f32 %v829, %v1077
        %1079 = vmatprep.mubr.f32.mxu0 0.0
        %1080 = vmatmul.mubr.f32.gmra.mrb[0].mxu0 %v463
        %v1081 = vpop.f32.mrb[0].mxu0
        %v1082 = vadd.f32 %v834, %v1081
        %v1083 = vpop.f32.mrb[0].mxu0
        %v1084 = vadd.f32 %v834, %v1083
        %1085 = vmatprep.mubr.f32.mxu0 0.0
        %1086 = vmatmul.mubr.f32.gmra.mrb[0].mxu0 %v464
        %v1087 = vpop.f32.mrb[0].mxu0
        %v1088 = vadd.f32 %v839, %v1087
        %v1089 = vpop.f32.mrb[0].mxu0
        %v1090 = vadd.f32 %v839, %v1089
        %1091 = vmatprep.mubr.f32.mxu0 0.0
        %1092 = vmatmul.mubr.f32.gmra.mrb[0].mxu0 %v465
        %v1093 = vpop.f32.mrb[0].mxu0
        %v1094 = vadd.f32 %v844, %v1093
        %v1095 = vpop.f32.mrb[0].mxu0
        %v1096 = vadd.f32 %v844, %v1095
        %1097 = vmatprep.mubr.f32.mxu0 0.0
        %1098 = vmatmul.mubr.f32.gmra.mrb[0].mxu0 %v466
        %v1099 = vpop.f32.mrb[0].mxu0
        %v1100 = vadd.f32 %v849, %v1099
        %v1101 = vpop.f32.mrb[0].mxu0
        %v1102 = vadd.f32 %v849, %v1101
        %1103 = vmatprep.mubr.f32.mxu0 0.0
        %1104 = vmatmul.mubr.f32.gmra.mrb[0].mxu0 %v467
        %v1105 = vpop.f32.mrb[0].mxu0
        %v1106 = vadd.f32 %v854, %v1105
        %v1107 = vpop.f32.mrb[0].mxu0
        %v1108 = vadd.f32 %v854, %v1107
        %1109 = vmatprep.mubr.f32.mxu0 0.0
        %1110 = vmatmul.mubr.f32.gmra.mrb[0].mxu0 %v468
        %v1111 = vpop.f32.mrb[0].mxu0
        %v1112 = vadd.f32 %v859, %v1111
        %v1113 = vpop.f32.mrb[0].mxu0
        %v1114 = vadd.f32 %v859, %v1113
        %1115 = vmatprep.mubr.f32.mxu0 0.0
        %1116 = vmatmul.mubr.f32.gmra.mrb[0].mxu0 %v469
        %v1117 = vpop.f32.mrb[0].mxu0
        %v1118 = vadd.f32 %v864, %v1117
        %v1119 = vpop.f32.mrb[0].mxu0
        %v1120 = vadd.f32 %v864, %v1119
        %1121 = vmatprep.mubr.f32.mxu0 0.0
        %1122 = vmatmul.mubr.f32.gmra.mrb[0].mxu0 %v470
        %v1123 = vpop.f32.mrb[0].mxu0
        %v1124 = vadd.f32 %v869, %v1123
        %v1125 = vpop.f32.mrb[0].mxu0
        %v1126 = vadd.f32 %v869, %v1125
        %1127 = vdwg.mxu0
        %1128 = vmatprep.subr.mxu0 %v650
        %1129 = vmatpush1.msra.mxu0 %v649
        %1130 = vmatprep.subr.mxu0 %v654
        %1131 = vmatpush1.msra.mxu0 %v653
        %1132 = vmatprep.subr.mxu0 %v658
        %1133 = vmatpush1.msra.mxu0 %v657
        %1134 = vmatprep.subr.mxu0 %v662
        %1135 = vmatpush1.msra.mxu0 %v661
        %1136 = vmatprep.subr.mxu0 %v666
        %1137 = vmatpush1.msra.mxu0 %v665
        %1138 = vmatprep.subr.mxu0 %v670
        %1139 = vmatpush1.msra.mxu0 %v669
        %1140 = vmatprep.subr.mxu0 %v674
        %1141 = vmatpush1.msra.mxu0 %v673
        %1142 = vmatprep.subr.mxu0 %v678
        %1143 = vmatpush1.msra.mxu0 %v677
        %1144 = vmatprep.subr.mxu0 %v682
        %1145 = vmatpush1.msra.mxu0 %v681
        %1146 = vmatprep.subr.mxu0 %v686
        %1147 = vmatpush1.msra.mxu0 %v685
        %1148 = vmatprep.subr.mxu0 %v690
        %1149 = vmatpush1.msra.mxu0 %v689
        %1150 = vmatprep.subr.mxu0 %v694
        %1151 = vmatpush1.msra.mxu0 %v693
        %1152 = vmatprep.subr.mxu0 %v698
        %1153 = vmatpush1.msra.mxu0 %v697
        %1154 = vmatprep.subr.mxu0 %v702
        %1155 = vmatpush1.msra.mxu0 %v701
        %1156 = vmatprep.subr.mxu0 %v706
        %1157 = vmatpush1.msra.mxu0 %v705
        %1158 = vmatprep.subr.mxu0 %v710
        %1159 = vmatpush1.msra.mxu0 %v709
        %1160 = vmatprep.subr.mxu0 0.0
        %1161 = vmatpush1.msra.mxu0 0.0
        %1162 = vmatprep.subr.mxu0 0.0
        %1163 = vmatpush1.msra.mxu0 0.0
        %1164 = vmatprep.subr.mxu0 0.0
        %1165 = vmatpush1.msra.mxu0 0.0
        %1166 = vmatprep.subr.mxu0 0.0
        %1167 = vmatpush1.msra.mxu0 0.0
        %1168 = vmatprep.subr.mxu0 0.0
        %1169 = vmatpush1.msra.mxu0 0.0
        %1170 = vmatprep.subr.mxu0 0.0
        %1171 = vmatpush1.msra.mxu0 0.0
        %1172 = vmatprep.subr.mxu0 0.0
        %1173 = vmatpush1.msra.mxu0 0.0
        %1174 = vmatprep.subr.mxu0 0.0
        %1175 = vmatpush1.msra.mxu0 0.0
        %1176 = vmatprep.subr.mxu0 0.0
        %1177 = vmatpush1.msra.mxu0 0.0
        %1178 = vmatprep.subr.mxu0 0.0
        %1179 = vmatpush1.msra.mxu0 0.0
        %1180 = vmatprep.subr.mxu0 0.0
        %1181 = vmatpush1.msra.mxu0 0.0
        %1182 = vmatprep.subr.mxu0 0.0
        %1183 = vmatpush1.msra.mxu0 0.0
        %1184 = vmatprep.subr.mxu0 0.0
        %1185 = vmatpush1.msra.mxu0 0.0
        %1186 = vmatprep.subr.mxu0 0.0
        %1187 = vmatpush1.msra.mxu0 0.0
        %1188 = vmatprep.subr.mxu0 0.0
        %1189 = vmatpush1.msra.mxu0 0.0
        %1190 = vmatprep.subr.mxu0 0.0
        %1191 = vmatpush1.msra.mxu0 0.0
        %1192 = vmatprep.mubr.f32.mxu0 0.0
        %1193 = vmatmul.mubr.f32.gmra.mrb[0].mxu0 %v439
        %v1194 = vpop.f32.mrb[0].mxu0
        %v1195 = vadd.f32 %v714, %v1194
        %v1196 = vpop.f32.mrb[0].mxu0
        %v1197 = vadd.f32 %v714, %v1196
        %1198 = vmatprep.mubr.f32.mxu0 0.0
        %1199 = vmatmul.mubr.f32.gmra.mrb[0].mxu0 %v440
        %v1200 = vpop.f32.mrb[0].mxu0
        %v1201 = vadd.f32 %v719, %v1200
        %v1202 = vpop.f32.mrb[0].mxu0
        %v1203 = vadd.f32 %v719, %v1202
        %1204 = vmatprep.mubr.f32.mxu0 0.0
        %1205 = vmatmul.mubr.f32.gmra.mrb[0].mxu0 %v441
        %v1206 = vpop.f32.mrb[0].mxu0
        %v1207 = vadd.f32 %v724, %v1206
        %v1208 = vpop.f32.mrb[0].mxu0
        %v1209 = vadd.f32 %v724, %v1208
        %1210 = vmatprep.mubr.f32.mxu0 0.0
        %1211 = vmatmul.mubr.f32.gmra.mrb[0].mxu0 %v442
        %v1212 = vpop.f32.mrb[0].mxu0
        %v1213 = vadd.f32 %v729, %v1212
        %v1214 = vpop.f32.mrb[0].mxu0
        %v1215 = vadd.f32 %v729, %v1214
        %1216 = vmatprep.mubr.f32.mxu0 0.0
        %1217 = vmatmul.mubr.f32.gmra.mrb[0].mxu0 %v443
        %v1218 = vpop.f32.mrb[0].mxu0
        %v1219 = vadd.f32 %v734, %v1218
        %v1220 = vpop.f32.mrb[0].mxu0
        %v1221 = vadd.f32 %v734, %v1220
        %1222 = vmatprep.mubr.f32.mxu0 0.0
        %1223 = vmatmul.mubr.f32.gmra.mrb[0].mxu0 %v444
        %v1224 = vpop.f32.mrb[0].mxu0
        %v1225 = vadd.f32 %v739, %v1224
        %v1226 = vpop.f32.mrb[0].mxu0
        %v1227 = vadd.f32 %v739, %v1226
        %1228 = vmatprep.mubr.f32.mxu0 0.0
        %1229 = vmatmul.mubr.f32.gmra.mrb[0].mxu0 %v445
        %v1230 = vpop.f32.mrb[0].mxu0
        %v1231 = vadd.f32 %v744, %v1230
        %v1232 = vpop.f32.mrb[0].mxu0
        %v1233 = vadd.f32 %v744, %v1232
        %1234 = vmatprep.mubr.f32.mxu0 0.0
        %1235 = vmatmul.mubr.f32.gmra.mrb[0].mxu0 %v446
        %v1236 = vpop.f32.mrb[0].mxu0
        %v1237 = vadd.f32 %v749, %v1236
        %v1238 = vpop.f32.mrb[0].mxu0
        %v1239 = vadd.f32 %v749, %v1238
        %1240 = vmatprep.mubr.f32.mxu0 0.0
        %1241 = vmatmul.mubr.f32.gmra.mrb[0].mxu0 %v447
        %v1242 = vpop.f32.mrb[0].mxu0
        %v1243 = vadd.f32 %v754, %v1242
        %v1244 = vpop.f32.mrb[0].mxu0
        %v1245 = vadd.f32 %v754, %v1244
        %1246 = vmatprep.mubr.f32.mxu0 0.0
        %1247 = vmatmul.mubr.f32.gmra.mrb[0].mxu0 %v448
        %v1248 = vpop.f32.mrb[0].mxu0
        %v1249 = vadd.f32 %v759, %v1248
        %v1250 = vpop.f32.mrb[0].mxu0
        %v1251 = vadd.f32 %v759, %v1250
        %1252 = vmatprep.mubr.f32.mxu0 0.0
        %1253 = vmatmul.mubr.f32.gmra.mrb[0].mxu0 %v449
        %v1254 = vpop.f32.mrb[0].mxu0
        %v1255 = vadd.f32 %v764, %v1254
        %v1256 = vpop.f32.mrb[0].mxu0
        %v1257 = vadd.f32 %v764, %v1256
        %1258 = vmatprep.mubr.f32.mxu0 0.0
        %1259 = vmatmul.mubr.f32.gmra.mrb[0].mxu0 %v450
        %v1260 = vpop.f32.mrb[0].mxu0
        %v1261 = vadd.f32 %v769, %v1260
        %v1262 = vpop.f32.mrb[0].mxu0
        %v1263 = vadd.f32 %v769, %v1262
        %1264 = vmatprep.mubr.f32.mxu0 0.0
        %1265 = vmatmul.mubr.f32.gmra.mrb[0].mxu0 %v451
        %v1266 = vpop.f32.mrb[0].mxu0
        %v1267 = vadd.f32 %v774, %v1266
        %v1268 = vpop.f32.mrb[0].mxu0
        %v1269 = vadd.f32 %v774, %v1268
        %1270 = vmatprep.mubr.f32.mxu0 0.0
        %1271 = vmatmul.mubr.f32.gmra.mrb[0].mxu0 %v452
        %v1272 = vpop.f32.mrb[0].mxu0
        %v1273 = vadd.f32 %v779, %v1272
        %v1274 = vpop.f32.mrb[0].mxu0
        %v1275 = vadd.f32 %v779, %v1274
        %1276 = vmatprep.mubr.f32.mxu0 0.0
        %1277 = vmatmul.mubr.f32.gmra.mrb[0].mxu0 %v453
        %v1278 = vpop.f32.mrb[0].mxu0
        %v1279 = vadd.f32 %v784, %v1278
        %v1280 = vpop.f32.mrb[0].mxu0
        %v1281 = vadd.f32 %v784, %v1280
        %1282 = vmatprep.mubr.f32.mxu0 0.0
        %1283 = vmatmul.mubr.f32.gmra.mrb[0].mxu0 %v454
        %v1284 = vpop.f32.mrb[0].mxu0
        %v1285 = vadd.f32 %v789, %v1284
        %v1286 = vpop.f32.mrb[0].mxu0
        %v1287 = vadd.f32 %v789, %v1286
        %1288 = vmatprep.mubr.f32.mxu0 0.0
        %1289 = vmatmul.mubr.f32.gmra.mrb[0].mxu0 %v455
        %v1290 = vpop.f32.mrb[0].mxu0
        %v1291 = vadd.f32 %v794, %v1290
        %v1292 = vpop.f32.mrb[0].mxu0
        %v1293 = vadd.f32 %v794, %v1292
        %1294 = vmatprep.mubr.f32.mxu0 0.0
        %1295 = vmatmul.mubr.f32.gmra.mrb[0].mxu0 %v456
        %v1296 = vpop.f32.mrb[0].mxu0
        %v1297 = vadd.f32 %v799, %v1296
        %v1298 = vpop.f32.mrb[0].mxu0
        %v1299 = vadd.f32 %v799, %v1298
        %1300 = vmatprep.mubr.f32.mxu0 0.0
        %1301 = vmatmul.mubr.f32.gmra.mrb[0].mxu0 %v457
        %v1302 = vpop.f32.mrb[0].mxu0
        %v1303 = vadd.f32 %v804, %v1302
        %v1304 = vpop.f32.mrb[0].mxu0
        %v1305 = vadd.f32 %v804, %v1304
        %1306 = vmatprep.mubr.f32.mxu0 0.0
        %1307 = vmatmul.mubr.f32.gmra.mrb[0].mxu0 %v458
        %v1308 = vpop.f32.mrb[0].mxu0
        %v1309 = vadd.f32 %v809, %v1308
        %v1310 = vpop.f32.mrb[0].mxu0
        %v1311 = vadd.f32 %v809, %v1310
        %1312 = vmatprep.mubr.f32.mxu0 0.0
        %1313 = vmatmul.mubr.f32.gmra.mrb[0].mxu0 %v459
        %v1314 = vpop.f32.mrb[0].mxu0
        %v1315 = vadd.f32 %v814, %v1314
        %v1316 = vpop.f32.mrb[0].mxu0
        %v1317 = vadd.f32 %v814, %v1316
        %1318 = vmatprep.mubr.f32.mxu0 0.0
        %1319 = vmatmul.mubr.f32.gmra.mrb[0].mxu0 %v460
        %v1320 = vpop.f32.mrb[0].mxu0
        %v1321 = vadd.f32 %v819, %v1320
        %v1322 = vpop.f32.mrb[0].mxu0
        %v1323 = vadd.f32 %v819, %v1322
        %1324 = vmatprep.mubr.f32.mxu0 0.0
        %1325 = vmatmul.mubr.f32.gmra.mrb[0].mxu0 %v461
        %v1326 = vpop.f32.mrb[0].mxu0
        %v1327 = vadd.f32 %v824, %v1326
        %v1328 = vpop.f32.mrb[0].mxu0
        %v1329 = vadd.f32 %v824, %v1328
        %1330 = vmatprep.mubr.f32.mxu0 0.0
        %1331 = vmatmul.mubr.f32.gmra.mrb[0].mxu0 %v462
        %v1332 = vpop.f32.mrb[0].mxu0
        %v1333 = vadd.f32 %v829, %v1332
        %v1334 = vpop.f32.mrb[0].mxu0
        %v1335 = vadd.f32 %v829, %v1334
        %1336 = vmatprep.mubr.f32.mxu0 0.0
        %1337 = vmatmul.mubr.f32.gmra.mrb[0].mxu0 %v463
        %v1338 = vpop.f32.mrb[0].mxu0
        %v1339 = vadd.f32 %v834, %v1338
        %v1340 = vpop.f32.mrb[0].mxu0
        %v1341 = vadd.f32 %v834, %v1340
        %1342 = vmatprep.mubr.f32.mxu0 0.0
        %1343 = vmatmul.mubr.f32.gmra.mrb[0].mxu0 %v464
        %v1344 = vpop.f32.mrb[0].mxu0
        %v1345 = vadd.f32 %v839, %v1344
        %v1346 = vpop.f32.mrb[0].mxu0
        %v1347 = vadd.f32 %v839, %v1346
        %1348 = vmatprep.mubr.f32.mxu0 0.0
        %1349 = vmatmul.mubr.f32.gmra.mrb[0].mxu0 %v465
        %v1350 = vpop.f32.mrb[0].mxu0
        %v1351 = vadd.f32 %v844, %v1350
        %v1352 = vpop.f32.mrb[0].mxu0
        %v1353 = vadd.f32 %v844, %v1352
        %1354 = vmatprep.mubr.f32.mxu0 0.0
        %1355 = vmatmul.mubr.f32.gmra.mrb[0].mxu0 %v466
        %v1356 = vpop.f32.mrb[0].mxu0
        %v1357 = vadd.f32 %v849, %v1356
        %v1358 = vpop.f32.mrb[0].mxu0
        %v1359 = vadd.f32 %v849, %v1358
        %1360 = vmatprep.mubr.f32.mxu0 0.0
        %1361 = vmatmul.mubr.f32.gmra.mrb[0].mxu0 %v467
        %v1362 = vpop.f32.mrb[0].mxu0
        %v1363 = vadd.f32 %v854, %v1362
        %v1364 = vpop.f32.mrb[0].mxu0
        %v1365 = vadd.f32 %v854, %v1364
        %1366 = vmatprep.mubr.f32.mxu0 0.0
        %1367 = vmatmul.mubr.f32.gmra.mrb[0].mxu0 %v468
        %v1368 = vpop.f32.mrb[0].mxu0
        %v1369 = vadd.f32 %v859, %v1368
        %v1370 = vpop.f32.mrb[0].mxu0
        %v1371 = vadd.f32 %v859, %v1370
        %1372 = vmatprep.mubr.f32.mxu0 0.0
        %1373 = vmatmul.mubr.f32.gmra.mrb[0].mxu0 %v469
        %v1374 = vpop.f32.mrb[0].mxu0
        %v1375 = vadd.f32 %v864, %v1374
        %v1376 = vpop.f32.mrb[0].mxu0
        %v1377 = vadd.f32 %v864, %v1376
        %1378 = vmatprep.mubr.f32.mxu0 0.0
        %1379 = vmatmul.mubr.f32.gmra.mrb[0].mxu0 %v470
        %v1380 = vpop.f32.mrb[0].mxu0
        %v1381 = vadd.f32 %v869, %v1380
        %v1382 = vpop.f32.mrb[0].mxu0
        %v1383 = vadd.f32 %v869, %v1382
        %1384 = vdwg.mxu0
        %v1385 = vmax.f32 %v938, 0.0
        %v1386 = vmax.f32 %v940, 0.0
        %v1387 = vmax.f32 %v1195, 0.0
        %v1388 = vmax.f32 %v1197, 0.0
        %v1389 = vmax.f32 %v944, 0.0
        %v1390 = vmax.f32 %v946, 0.0
        %v1391 = vmax.f32 %v1201, 0.0
        %v1392 = vmax.f32 %v1203, 0.0
        %v1393 = vmax.f32 %v950, 0.0
        %v1394 = vmax.f32 %v952, 0.0
        %v1395 = vmax.f32 %v1207, 0.0
        %v1396 = vmax.f32 %v1209, 0.0
        %v1397 = vmax.f32 %v956, 0.0
        %v1398 = vmax.f32 %v958, 0.0
        %v1399 = vmax.f32 %v1213, 0.0
        %v1400 = vmax.f32 %v1215, 0.0
        %v1401 = vmax.f32 %v962, 0.0
        %v1402 = vmax.f32 %v964, 0.0
        %v1403 = vmax.f32 %v1219, 0.0
        %v1404 = vmax.f32 %v1221, 0.0
        %v1405 = vmax.f32 %v968, 0.0
        %v1406 = vmax.f32 %v970, 0.0
        %v1407 = vmax.f32 %v1225, 0.0
        %v1408 = vmax.f32 %v1227, 0.0
        %v1409 = vmax.f32 %v974, 0.0
        %v1410 = vmax.f32 %v976, 0.0
        %v1411 = vmax.f32 %v1231, 0.0
        %v1412 = vmax.f32 %v1233, 0.0
        %v1413 = vmax.f32 %v980, 0.0
        %v1414 = vmax.f32 %v982, 0.0
        %v1415 = vmax.f32 %v1237, 0.0
        %v1416 = vmax.f32 %v1239, 0.0
        %v1417 = vmax.f32 %v986, 0.0
        %v1418 = vmax.f32 %v988, 0.0
        %v1419 = vmax.f32 %v1243, 0.0
        %v1420 = vmax.f32 %v1245, 0.0
        %v1421 = vmax.f32 %v992, 0.0
        %v1422 = vmax.f32 %v994, 0.0
        %v1423 = vmax.f32 %v1249, 0.0
        %v1424 = vmax.f32 %v1251, 0.0
        %v1425 = vmax.f32 %v998, 0.0
        %v1426 = vmax.f32 %v1000, 0.0
        %v1427 = vmax.f32 %v1255, 0.0
        %v1428 = vmax.f32 %v1257, 0.0
        %v1429 = vmax.f32 %v1004, 0.0
        %v1430 = vmax.f32 %v1006, 0.0
        %v1431 = vmax.f32 %v1261, 0.0
        %v1432 = vmax.f32 %v1263, 0.0
        %v1433 = vmax.f32 %v1010, 0.0
        %v1434 = vmax.f32 %v1012, 0.0
        %v1435 = vmax.f32 %v1267, 0.0
        %v1436 = vmax.f32 %v1269, 0.0
        %v1437 = vmax.f32 %v1016, 0.0
        %v1438 = vmax.f32 %v1018, 0.0
        %v1439 = vmax.f32 %v1273, 0.0
        %v1440 = vmax.f32 %v1275, 0.0
        %v1441 = vmax.f32 %v1022, 0.0
        %v1442 = vmax.f32 %v1024, 0.0
        %v1443 = vmax.f32 %v1279, 0.0
        %v1444 = vmax.f32 %v1281, 0.0
        %v1445 = vmax.f32 %v1028, 0.0
        %v1446 = vmax.f32 %v1030, 0.0
        %v1447 = vmax.f32 %v1285, 0.0
        %v1448 = vmax.f32 %v1287, 0.0
        %v1449 = vmax.f32 %v1034, 0.0
        %v1450 = vmax.f32 %v1036, 0.0
        %v1451 = vmax.f32 %v1291, 0.0
        %v1452 = vmax.f32 %v1293, 0.0
        %v1453 = vmax.f32 %v1040, 0.0
        %v1454 = vmax.f32 %v1042, 0.0
        %v1455 = vmax.f32 %v1297, 0.0
        %v1456 = vmax.f32 %v1299, 0.0
        %v1457 = vmax.f32 %v1046, 0.0
        %v1458 = vmax.f32 %v1048, 0.0
        %v1459 = vmax.f32 %v1303, 0.0
        %v1460 = vmax.f32 %v1305, 0.0
        %v1461 = vmax.f32 %v1052, 0.0
        %v1462 = vmax.f32 %v1054, 0.0
        %v1463 = vmax.f32 %v1309, 0.0
        %v1464 = vmax.f32 %v1311, 0.0
        %v1465 = vmax.f32 %v1058, 0.0
        %v1466 = vmax.f32 %v1060, 0.0
        %v1467 = vmax.f32 %v1315, 0.0
        %v1468 = vmax.f32 %v1317, 0.0
        %v1469 = vmax.f32 %v1064, 0.0
        %v1470 = vmax.f32 %v1066, 0.0
        %v1471 = vmax.f32 %v1321, 0.0
        %v1472 = vmax.f32 %v1323, 0.0
        %v1473 = vmax.f32 %v1070, 0.0
        %v1474 = vmax.f32 %v1072, 0.0
        %v1475 = vmax.f32 %v1327, 0.0
        %v1476 = vmax.f32 %v1329, 0.0
        %v1477 = vmax.f32 %v1076, 0.0
        %v1478 = vmax.f32 %v1078, 0.0
        %v1479 = vmax.f32 %v1333, 0.0
        %v1480 = vmax.f32 %v1335, 0.0
        %v1481 = vmax.f32 %v1082, 0.0
        %v1482 = vmax.f32 %v1084, 0.0
        %v1483 = vmax.f32 %v1339, 0.0
        %v1484 = vmax.f32 %v1341, 0.0
        %v1485 = vmax.f32 %v1088, 0.0
        %v1486 = vmax.f32 %v1090, 0.0
        %v1487 = vmax.f32 %v1345, 0.0
        %v1488 = vmax.f32 %v1347, 0.0
        %v1489 = vmax.f32 %v1094, 0.0
        %v1490 = vmax.f32 %v1096, 0.0
        %v1491 = vmax.f32 %v1351, 0.0
        %v1492 = vmax.f32 %v1353, 0.0
        %v1493 = vmax.f32 %v1100, 0.0
        %v1494 = vmax.f32 %v1102, 0.0
        %v1495 = vmax.f32 %v1357, 0.0
        %v1496 = vmax.f32 %v1359, 0.0
        %v1497 = vmax.f32 %v1106, 0.0
        %v1498 = vmax.f32 %v1108, 0.0
        %v1499 = vmax.f32 %v1363, 0.0
        %v1500 = vmax.f32 %v1365, 0.0
        %v1501 = vmax.f32 %v1112, 0.0
        %v1502 = vmax.f32 %v1114, 0.0
        %v1503 = vmax.f32 %v1369, 0.0
        %v1504 = vmax.f32 %v1371, 0.0
        %v1505 = vmax.f32 %v1118, 0.0
        %v1506 = vmax.f32 %v1120, 0.0
        %v1507 = vmax.f32 %v1375, 0.0
        %v1508 = vmax.f32 %v1377, 0.0
        %v1509 = vmax.f32 %v1124, 0.0
        %v1510 = vmax.f32 %v1126, 0.0
        %v1511 = vmax.f32 %v1381, 0.0
        %v1512 = vmax.f32 %v1383, 0.0
        %1514 = vset.pattern.permute.xlu0 0
        %1515 = vperm.xlu0 %1514, %v599
        %v1516 = vpop.permute.xlu0 %1515
        %1519 = vset.pattern.permute.xlu0 0
        %1520 = vperm.xlu0 %1519, %v600
        %v1521 = vpop.permute.xlu0 %1520
        %1524 = vset.pattern.permute.xlu0 0
        %1525 = vperm.xlu0 %1524, %v601
        %v1526 = vpop.permute.xlu0 %1525
        %1529 = vset.pattern.permute.xlu0 0
        %1530 = vperm.xlu0 %1529, %v602
        %v1531 = vpop.permute.xlu0 %1530
        %1534 = vset.pattern.permute.xlu0 0
        %1535 = vperm.xlu0 %1534, %v603
        %v1536 = vpop.permute.xlu0 %1535
        %1539 = vset.pattern.permute.xlu0 0
        %1540 = vperm.xlu0 %1539, %v604
        %v1541 = vpop.permute.xlu0 %1540
        %1544 = vset.pattern.permute.xlu0 0
        %1545 = vperm.xlu0 %1544, %v605
        %v1546 = vpop.permute.xlu0 %1545
        %1549 = vset.pattern.permute.xlu0 0
        %1550 = vperm.xlu0 %1549, %v606
        %v1551 = vpop.permute.xlu0 %1550
        %1554 = vset.pattern.permute.xlu0 0
        %1555 = vperm.xlu0 %1554, %v607
        %v1556 = vpop.permute.xlu0 %1555
        %1559 = vset.pattern.permute.xlu0 0
        %1560 = vperm.xlu0 %1559, %v608
        %v1561 = vpop.permute.xlu0 %1560
        %1564 = vset.pattern.permute.xlu0 0
        %1565 = vperm.xlu0 %1564, %v609
        %v1566 = vpop.permute.xlu0 %1565
        %1569 = vset.pattern.permute.xlu0 0
        %1570 = vperm.xlu0 %1569, %v610
        %v1571 = vpop.permute.xlu0 %1570
        %1574 = vset.pattern.permute.xlu0 0
        %1575 = vperm.xlu0 %1574, %v611
        %v1576 = vpop.permute.xlu0 %1575
        %1579 = vset.pattern.permute.xlu0 0
        %1580 = vperm.xlu0 %1579, %v612
        %v1581 = vpop.permute.xlu0 %1580
        %1584 = vset.pattern.permute.xlu0 0
        %1585 = vperm.xlu0 %1584, %v613
        %v1586 = vpop.permute.xlu0 %1585
        %1589 = vset.pattern.permute.xlu0 0
        %1590 = vperm.xlu0 %1589, %v614
        %v1591 = vpop.permute.xlu0 %1590
        %1594 = vset.pattern.permute.xlu0 0
        %1595 = vperm.xlu0 %1594, %v615
        %v1596 = vpop.permute.xlu0 %1595
        %1599 = vset.pattern.permute.xlu0 0
        %1600 = vperm.xlu0 %1599, %v616
        %v1601 = vpop.permute.xlu0 %1600
        %1604 = vset.pattern.permute.xlu0 0
        %1605 = vperm.xlu0 %1604, %v617
        %v1606 = vpop.permute.xlu0 %1605
        %1609 = vset.pattern.permute.xlu0 0
        %1610 = vperm.xlu0 %1609, %v618
        %v1611 = vpop.permute.xlu0 %1610
        %1614 = vset.pattern.permute.xlu0 0
        %1615 = vperm.xlu0 %1614, %v619
        %v1616 = vpop.permute.xlu0 %1615
        %1619 = vset.pattern.permute.xlu0 0
        %1620 = vperm.xlu0 %1619, %v620
        %v1621 = vpop.permute.xlu0 %1620
        %1624 = vset.pattern.permute.xlu0 0
        %1625 = vperm.xlu0 %1624, %v621
        %v1626 = vpop.permute.xlu0 %1625
        %1629 = vset.pattern.permute.xlu0 0
        %1630 = vperm.xlu0 %1629, %v622
        %v1631 = vpop.permute.xlu0 %1630
        %1634 = vset.pattern.permute.xlu0 0
        %1635 = vperm.xlu0 %1634, %v623
        %v1636 = vpop.permute.xlu0 %1635
        %1639 = vset.pattern.permute.xlu0 0
        %1640 = vperm.xlu0 %1639, %v624
        %v1641 = vpop.permute.xlu0 %1640
        %1644 = vset.pattern.permute.xlu0 0
        %1645 = vperm.xlu0 %1644, %v625
        %v1646 = vpop.permute.xlu0 %1645
        %1649 = vset.pattern.permute.xlu0 0
        %1650 = vperm.xlu0 %1649, %v626
        %v1651 = vpop.permute.xlu0 %1650
        %1654 = vset.pattern.permute.xlu0 0
        %1655 = vperm.xlu0 %1654, %v627
        %v1656 = vpop.permute.xlu0 %1655
        %1659 = vset.pattern.permute.xlu0 0
        %1660 = vperm.xlu0 %1659, %v628
        %v1661 = vpop.permute.xlu0 %1660
        %1664 = vset.pattern.permute.xlu0 0
        %1665 = vperm.xlu0 %1664, %v629
        %v1666 = vpop.permute.xlu0 %1665
        %1669 = vset.pattern.permute.xlu0 0
        %1670 = vperm.xlu0 %1669, %v630
        %v1671 = vpop.permute.xlu0 %1670
        %1673 = vmatprep.subr.mxu0 %v1386
        %1674 = vmatpush1.msra.mxu0 %v1385
        %1675 = vmatprep.subr.mxu0 %v1390
        %1676 = vmatpush1.msra.mxu0 %v1389
        %1677 = vmatprep.subr.mxu0 %v1394
        %1678 = vmatpush1.msra.mxu0 %v1393
        %1679 = vmatprep.subr.mxu0 %v1398
        %1680 = vmatpush1.msra.mxu0 %v1397
        %1681 = vmatprep.subr.mxu0 %v1402
        %1682 = vmatpush1.msra.mxu0 %v1401
        %1683 = vmatprep.subr.mxu0 %v1406
        %1684 = vmatpush1.msra.mxu0 %v1405
        %1685 = vmatprep.subr.mxu0 %v1410
        %1686 = vmatpush1.msra.mxu0 %v1409
        %1687 = vmatprep.subr.mxu0 %v1414
        %1688 = vmatpush1.msra.mxu0 %v1413
        %1689 = vmatprep.subr.mxu0 %v1418
        %1690 = vmatpush1.msra.mxu0 %v1417
        %1691 = vmatprep.subr.mxu0 %v1422
        %1692 = vmatpush1.msra.mxu0 %v1421
        %1693 = vmatprep.subr.mxu0 %v1426
        %1694 = vmatpush1.msra.mxu0 %v1425
        %1695 = vmatprep.subr.mxu0 %v1430
        %1696 = vmatpush1.msra.mxu0 %v1429
        %1697 = vmatprep.subr.mxu0 %v1434
        %1698 = vmatpush1.msra.mxu0 %v1433
        %1699 = vmatprep.subr.mxu0 %v1438
        %1700 = vmatpush1.msra.mxu0 %v1437
        %1701 = vmatprep.subr.mxu0 %v1442
        %1702 = vmatpush1.msra.mxu0 %v1441
        %1703 = vmatprep.subr.mxu0 %v1446
        %1704 = vmatpush1.msra.mxu0 %v1445
        %1705 = vmatprep.subr.mxu0 %v1450
        %1706 = vmatpush1.msra.mxu0 %v1449
        %1707 = vmatprep.subr.mxu0 %v1454
        %1708 = vmatpush1.msra.mxu0 %v1453
        %1709 = vmatprep.subr.mxu0 %v1458
        %1710 = vmatpush1.msra.mxu0 %v1457
        %1711 = vmatprep.subr.mxu0 %v1462
        %1712 = vmatpush1.msra.mxu0 %v1461
        %1713 = vmatprep.subr.mxu0 %v1466
        %1714 = vmatpush1.msra.mxu0 %v1465
        %1715 = vmatprep.subr.mxu0 %v1470
        %1716 = vmatpush1.msra.mxu0 %v1469
        %1717 = vmatprep.subr.mxu0 %v1474
        %1718 = vmatpush1.msra.mxu0 %v1473
        %1719 = vmatprep.subr.mxu0 %v1478
        %1720 = vmatpush1.msra.mxu0 %v1477
        %1721 = vmatprep.subr.mxu0 %v1482
        %1722 = vmatpush1.msra.mxu0 %v1481
        %1723 = vmatprep.subr.mxu0 %v1486
        %1724 = vmatpush1.msra.mxu0 %v1485
        %1725 = vmatprep.subr.mxu0 %v1490
        %1726 = vmatpush1.msra.mxu0 %v1489
        %1727 = vmatprep.subr.mxu0 %v1494
        %1728 = vmatpush1.msra.mxu0 %v1493
        %1729 = vmatprep.subr.mxu0 %v1498
        %1730 = vmatpush1.msra.mxu0 %v1497
        %1731 = vmatprep.subr.mxu0 %v1502
        %1732 = vmatpush1.msra.mxu0 %v1501
        %1733 = vmatprep.subr.mxu0 %v1506
        %1734 = vmatpush1.msra.mxu0 %v1505
        %1735 = vmatprep.subr.mxu0 %v1510
        %1736 = vmatpush1.msra.mxu0 %v1509
        %1737 = vmatprep.mubr.f32.mxu0 %v472
        %1738 = vmatmul.mubr.f32.gmra.mrb[0].mxu0 %v471
        %v1739 = vpop.f32.mrb[0].mxu0
        %v1740 = vadd.f32 %v1516, %v1739
        %v1741 = vpop.f32.mrb[0].mxu0
        %v1742 = vadd.f32 %v1516, %v1741
        %1743 = vmatprep.mubr.f32.mxu0 %v474
        %1744 = vmatmul.mubr.f32.gmra.mrb[0].mxu0 %v473
        %v1745 = vpop.f32.mrb[0].mxu0
        %v1746 = vadd.f32 %v1521, %v1745
        %v1747 = vpop.f32.mrb[0].mxu0
        %v1748 = vadd.f32 %v1521, %v1747
        %1749 = vmatprep.mubr.f32.mxu0 %v476
        %1750 = vmatmul.mubr.f32.gmra.mrb[0].mxu0 %v475
        %v1751 = vpop.f32.mrb[0].mxu0
        %v1752 = vadd.f32 %v1526, %v1751
        %v1753 = vpop.f32.mrb[0].mxu0
        %v1754 = vadd.f32 %v1526, %v1753
        %1755 = vmatprep.mubr.f32.mxu0 %v478
        %1756 = vmatmul.mubr.f32.gmra.mrb[0].mxu0 %v477
        %v1757 = vpop.f32.mrb[0].mxu0
        %v1758 = vadd.f32 %v1531, %v1757
        %v1759 = vpop.f32.mrb[0].mxu0
        %v1760 = vadd.f32 %v1531, %v1759
        %1761 = vmatprep.mubr.f32.mxu0 %v480
        %1762 = vmatmul.mubr.f32.gmra.mrb[0].mxu0 %v479
        %v1763 = vpop.f32.mrb[0].mxu0
        %v1764 = vadd.f32 %v1536, %v1763
        %v1765 = vpop.f32.mrb[0].mxu0
        %v1766 = vadd.f32 %v1536, %v1765
        %1767 = vmatprep.mubr.f32.mxu0 %v482
        %1768 = vmatmul.mubr.f32.gmra.mrb[0].mxu0 %v481
        %v1769 = vpop.f32.mrb[0].mxu0
        %v1770 = vadd.f32 %v1541, %v1769
        %v1771 = vpop.f32.mrb[0].mxu0
        %v1772 = vadd.f32 %v1541, %v1771
        %1773 = vmatprep.mubr.f32.mxu0 %v484
        %1774 = vmatmul.mubr.f32.gmra.mrb[0].mxu0 %v483
        %v1775 = vpop.f32.mrb[0].mxu0
        %v1776 = vadd.f32 %v1546, %v1775
        %v1777 = vpop.f32.mrb[0].mxu0
        %v1778 = vadd.f32 %v1546, %v1777
        %1779 = vmatprep.mubr.f32.mxu0 %v486
        %1780 = vmatmul.mubr.f32.gmra.mrb[0].mxu0 %v485
        %v1781 = vpop.f32.mrb[0].mxu0
        %v1782 = vadd.f32 %v1551, %v1781
        %v1783 = vpop.f32.mrb[0].mxu0
        %v1784 = vadd.f32 %v1551, %v1783
        %1785 = vmatprep.mubr.f32.mxu0 %v488
        %1786 = vmatmul.mubr.f32.gmra.mrb[0].mxu0 %v487
        %v1787 = vpop.f32.mrb[0].mxu0
        %v1788 = vadd.f32 %v1556, %v1787
        %v1789 = vpop.f32.mrb[0].mxu0
        %v1790 = vadd.f32 %v1556, %v1789
        %1791 = vmatprep.mubr.f32.mxu0 %v490
        %1792 = vmatmul.mubr.f32.gmra.mrb[0].mxu0 %v489
        %v1793 = vpop.f32.mrb[0].mxu0
        %v1794 = vadd.f32 %v1561, %v1793
        %v1795 = vpop.f32.mrb[0].mxu0
        %v1796 = vadd.f32 %v1561, %v1795
        %1797 = vmatprep.mubr.f32.mxu0 %v492
        %1798 = vmatmul.mubr.f32.gmra.mrb[0].mxu0 %v491
        %v1799 = vpop.f32.mrb[0].mxu0
        %v1800 = vadd.f32 %v1566, %v1799
        %v1801 = vpop.f32.mrb[0].mxu0
        %v1802 = vadd.f32 %v1566, %v1801
        %1803 = vmatprep.mubr.f32.mxu0 %v494
        %1804 = vmatmul.mubr.f32.gmra.mrb[0].mxu0 %v493
        %v1805 = vpop.f32.mrb[0].mxu0
        %v1806 = vadd.f32 %v1571, %v1805
        %v1807 = vpop.f32.mrb[0].mxu0
        %v1808 = vadd.f32 %v1571, %v1807
        %1809 = vmatprep.mubr.f32.mxu0 %v496
        %1810 = vmatmul.mubr.f32.gmra.mrb[0].mxu0 %v495
        %v1811 = vpop.f32.mrb[0].mxu0
        %v1812 = vadd.f32 %v1576, %v1811
        %v1813 = vpop.f32.mrb[0].mxu0
        %v1814 = vadd.f32 %v1576, %v1813
        %1815 = vmatprep.mubr.f32.mxu0 %v498
        %1816 = vmatmul.mubr.f32.gmra.mrb[0].mxu0 %v497
        %v1817 = vpop.f32.mrb[0].mxu0
        %v1818 = vadd.f32 %v1581, %v1817
        %v1819 = vpop.f32.mrb[0].mxu0
        %v1820 = vadd.f32 %v1581, %v1819
        %1821 = vmatprep.mubr.f32.mxu0 %v500
        %1822 = vmatmul.mubr.f32.gmra.mrb[0].mxu0 %v499
        %v1823 = vpop.f32.mrb[0].mxu0
        %v1824 = vadd.f32 %v1586, %v1823
        %v1825 = vpop.f32.mrb[0].mxu0
        %v1826 = vadd.f32 %v1586, %v1825
        %1827 = vmatprep.mubr.f32.mxu0 %v502
        %1828 = vmatmul.mubr.f32.gmra.mrb[0].mxu0 %v501
        %v1829 = vpop.f32.mrb[0].mxu0
        %v1830 = vadd.f32 %v1591, %v1829
        %v1831 = vpop.f32.mrb[0].mxu0
        %v1832 = vadd.f32 %v1591, %v1831
        %1833 = vmatprep.mubr.f32.mxu0 %v504
        %1834 = vmatmul.mubr.f32.gmra.mrb[0].mxu0 %v503
        %v1835 = vpop.f32.mrb[0].mxu0
        %v1836 = vadd.f32 %v1596, %v1835
        %v1837 = vpop.f32.mrb[0].mxu0
        %v1838 = vadd.f32 %v1596, %v1837
        %1839 = vmatprep.mubr.f32.mxu0 %v506
        %1840 = vmatmul.mubr.f32.gmra.mrb[0].mxu0 %v505
        %v1841 = vpop.f32.mrb[0].mxu0
        %v1842 = vadd.f32 %v1601, %v1841
        %v1843 = vpop.f32.mrb[0].mxu0
        %v1844 = vadd.f32 %v1601, %v1843
        %1845 = vmatprep.mubr.f32.mxu0 %v508
        %1846 = vmatmul.mubr.f32.gmra.mrb[0].mxu0 %v507
        %v1847 = vpop.f32.mrb[0].mxu0
        %v1848 = vadd.f32 %v1606, %v1847
        %v1849 = vpop.f32.mrb[0].mxu0
        %v1850 = vadd.f32 %v1606, %v1849
        %1851 = vmatprep.mubr.f32.mxu0 %v510
        %1852 = vmatmul.mubr.f32.gmra.mrb[0].mxu0 %v509
        %v1853 = vpop.f32.mrb[0].mxu0
        %v1854 = vadd.f32 %v1611, %v1853
        %v1855 = vpop.f32.mrb[0].mxu0
        %v1856 = vadd.f32 %v1611, %v1855
        %1857 = vmatprep.mubr.f32.mxu0 %v512
        %1858 = vmatmul.mubr.f32.gmra.mrb[0].mxu0 %v511
        %v1859 = vpop.f32.mrb[0].mxu0
        %v1860 = vadd.f32 %v1616, %v1859
        %v1861 = vpop.f32.mrb[0].mxu0
        %v1862 = vadd.f32 %v1616, %v1861
        %1863 = vmatprep.mubr.f32.mxu0 %v514
        %1864 = vmatmul.mubr.f32.gmra.mrb[0].mxu0 %v513
        %v1865 = vpop.f32.mrb[0].mxu0
        %v1866 = vadd.f32 %v1621, %v1865
        %v1867 = vpop.f32.mrb[0].mxu0
        %v1868 = vadd.f32 %v1621, %v1867
        %1869 = vmatprep.mubr.f32.mxu0 %v516
        %1870 = vmatmul.mubr.f32.gmra.mrb[0].mxu0 %v515
        %v1871 = vpop.f32.mrb[0].mxu0
        %v1872 = vadd.f32 %v1626, %v1871
        %v1873 = vpop.f32.mrb[0].mxu0
        %v1874 = vadd.f32 %v1626, %v1873
        %1875 = vmatprep.mubr.f32.mxu0 %v518
        %1876 = vmatmul.mubr.f32.gmra.mrb[0].mxu0 %v517
        %v1877 = vpop.f32.mrb[0].mxu0
        %v1878 = vadd.f32 %v1631, %v1877
        %v1879 = vpop.f32.mrb[0].mxu0
        %v1880 = vadd.f32 %v1631, %v1879
        %1881 = vmatprep.mubr.f32.mxu0 %v520
        %1882 = vmatmul.mubr.f32.gmra.mrb[0].mxu0 %v519
        %v1883 = vpop.f32.mrb[0].mxu0
        %v1884 = vadd.f32 %v1636, %v1883
        %v1885 = vpop.f32.mrb[0].mxu0
        %v1886 = vadd.f32 %v1636, %v1885
        %1887 = vmatprep.mubr.f32.mxu0 %v522
        %1888 = vmatmul.mubr.f32.gmra.mrb[0].mxu0 %v521
        %v1889 = vpop.f32.mrb[0].mxu0
        %v1890 = vadd.f32 %v1641, %v1889
        %v1891 = vpop.f32.mrb[0].mxu0
        %v1892 = vadd.f32 %v1641, %v1891
        %1893 = vmatprep.mubr.f32.mxu0 %v524
        %1894 = vmatmul.mubr.f32.gmra.mrb[0].mxu0 %v523
        %v1895 = vpop.f32.mrb[0].mxu0
        %v1896 = vadd.f32 %v1646, %v1895
        %v1897 = vpop.f32.mrb[0].mxu0
        %v1898 = vadd.f32 %v1646, %v1897
        %1899 = vmatprep.mubr.f32.mxu0 %v526
        %1900 = vmatmul.mubr.f32.gmra.mrb[0].mxu0 %v525
        %v1901 = vpop.f32.mrb[0].mxu0
        %v1902 = vadd.f32 %v1651, %v1901
        %v1903 = vpop.f32.mrb[0].mxu0
        %v1904 = vadd.f32 %v1651, %v1903
        %1905 = vmatprep.mubr.f32.mxu0 %v528
        %1906 = vmatmul.mubr.f32.gmra.mrb[0].mxu0 %v527
        %v1907 = vpop.f32.mrb[0].mxu0
        %v1908 = vadd.f32 %v1656, %v1907
        %v1909 = vpop.f32.mrb[0].mxu0
        %v1910 = vadd.f32 %v1656, %v1909
        %1911 = vmatprep.mubr.f32.mxu0 %v530
        %1912 = vmatmul.mubr.f32.gmra.mrb[0].mxu0 %v529
        %v1913 = vpop.f32.mrb[0].mxu0
        %v1914 = vadd.f32 %v1661, %v1913
        %v1915 = vpop.f32.mrb[0].mxu0
        %v1916 = vadd.f32 %v1661, %v1915
        %1917 = vmatprep.mubr.f32.mxu0 %v532
        %1918 = vmatmul.mubr.f32.gmra.mrb[0].mxu0 %v531
        %v1919 = vpop.f32.mrb[0].mxu0
        %v1920 = vadd.f32 %v1666, %v1919
        %v1921 = vpop.f32.mrb[0].mxu0
        %v1922 = vadd.f32 %v1666, %v1921
        %1923 = vmatprep.mubr.f32.mxu0 %v534
        %1924 = vmatmul.mubr.f32.gmra.mrb[0].mxu0 %v533
        %v1925 = vpop.f32.mrb[0].mxu0
        %v1926 = vadd.f32 %v1671, %v1925
        %v1927 = vpop.f32.mrb[0].mxu0
        %v1928 = vadd.f32 %v1671, %v1927
        %1929 = vdwg.mxu0
        %1930 = vmatprep.subr.mxu0 %v1388
        %1931 = vmatpush1.msra.mxu0 %v1387
        %1932 = vmatprep.subr.mxu0 %v1392
        %1933 = vmatpush1.msra.mxu0 %v1391
        %1934 = vmatprep.subr.mxu0 %v1396
        %1935 = vmatpush1.msra.mxu0 %v1395
        %1936 = vmatprep.subr.mxu0 %v1400
        %1937 = vmatpush1.msra.mxu0 %v1399
        %1938 = vmatprep.subr.mxu0 %v1404
        %1939 = vmatpush1.msra.mxu0 %v1403
        %1940 = vmatprep.subr.mxu0 %v1408
        %1941 = vmatpush1.msra.mxu0 %v1407
        %1942 = vmatprep.subr.mxu0 %v1412
        %1943 = vmatpush1.msra.mxu0 %v1411
        %1944 = vmatprep.subr.mxu0 %v1416
        %1945 = vmatpush1.msra.mxu0 %v1415
        %1946 = vmatprep.subr.mxu0 %v1420
        %1947 = vmatpush1.msra.mxu0 %v1419
        %1948 = vmatprep.subr.mxu0 %v1424
        %1949 = vmatpush1.msra.mxu0 %v1423
        %1950 = vmatprep.subr.mxu0 %v1428
        %1951 = vmatpush1.msra.mxu0 %v1427
        %1952 = vmatprep.subr.mxu0 %v1432
        %1953 = vmatpush1.msra.mxu0 %v1431
        %1954 = vmatprep.subr.mxu0 %v1436
        %1955 = vmatpush1.msra.mxu0 %v1435
        %1956 = vmatprep.subr.mxu0 %v1440
        %1957 = vmatpush1.msra.mxu0 %v1439
        %1958 = vmatprep.subr.mxu0 %v1444
        %1959 = vmatpush1.msra.mxu0 %v1443
        %1960 = vmatprep.subr.mxu0 %v1448
        %1961 = vmatpush1.msra.mxu0 %v1447
        %1962 = vmatprep.subr.mxu0 %v1452
        %1963 = vmatpush1.msra.mxu0 %v1451
        %1964 = vmatprep.subr.mxu0 %v1456
        %1965 = vmatpush1.msra.mxu0 %v1455
        %1966 = vmatprep.subr.mxu0 %v1460
        %1967 = vmatpush1.msra.mxu0 %v1459
        %1968 = vmatprep.subr.mxu0 %v1464
        %1969 = vmatpush1.msra.mxu0 %v1463
        %1970 = vmatprep.subr.mxu0 %v1468
        %1971 = vmatpush1.msra.mxu0 %v1467
        %1972 = vmatprep.subr.mxu0 %v1472
        %1973 = vmatpush1.msra.mxu0 %v1471
        %1974 = vmatprep.subr.mxu0 %v1476
        %1975 = vmatpush1.msra.mxu0 %v1475
        %1976 = vmatprep.subr.mxu0 %v1480
        %1977 = vmatpush1.msra.mxu0 %v1479
        %1978 = vmatprep.subr.mxu0 %v1484
        %1979 = vmatpush1.msra.mxu0 %v1483
        %1980 = vmatprep.subr.mxu0 %v1488
        %1981 = vmatpush1.msra.mxu0 %v1487
        %1982 = vmatprep.subr.mxu0 %v1492
        %1983 = vmatpush1.msra.mxu0 %v1491
        %1984 = vmatprep.subr.mxu0 %v1496
        %1985 = vmatpush1.msra.mxu0 %v1495
        %1986 = vmatprep.subr.mxu0 %v1500
        %1987 = vmatpush1.msra.mxu0 %v1499
        %1988 = vmatprep.subr.mxu0 %v1504
        %1989 = vmatpush1.msra.mxu0 %v1503
        %1990 = vmatprep.subr.mxu0 %v1508
        %1991 = vmatpush1.msra.mxu0 %v1507
        %1992 = vmatprep.subr.mxu0 %v1512
        %1993 = vmatpush1.msra.mxu0 %v1511
        %1994 = vmatprep.mubr.f32.mxu0 %v472
        %1995 = vmatmul.mubr.f32.gmra.mrb[0].mxu0 %v471
        %v1996 = vpop.f32.mrb[0].mxu0
        %v1997 = vadd.f32 %v1516, %v1996
        %v1998 = vpop.f32.mrb[0].mxu0
        %v1999 = vadd.f32 %v1516, %v1998
        %2000 = vmatprep.mubr.f32.mxu0 %v474
        %2001 = vmatmul.mubr.f32.gmra.mrb[0].mxu0 %v473
        %v2002 = vpop.f32.mrb[0].mxu0
        %v2003 = vadd.f32 %v1521, %v2002
        %v2004 = vpop.f32.mrb[0].mxu0
        %v2005 = vadd.f32 %v1521, %v2004
        %2006 = vmatprep.mubr.f32.mxu0 %v476
        %2007 = vmatmul.mubr.f32.gmra.mrb[0].mxu0 %v475
        %v2008 = vpop.f32.mrb[0].mxu0
        %v2009 = vadd.f32 %v1526, %v2008
        %v2010 = vpop.f32.mrb[0].mxu0
        %v2011 = vadd.f32 %v1526, %v2010
        %2012 = vmatprep.mubr.f32.mxu0 %v478
        %2013 = vmatmul.mubr.f32.gmra.mrb[0].mxu0 %v477
        %v2014 = vpop.f32.mrb[0].mxu0
        %v2015 = vadd.f32 %v1531, %v2014
        %v2016 = vpop.f32.mrb[0].mxu0
        %v2017 = vadd.f32 %v1531, %v2016
        %2018 = vmatprep.mubr.f32.mxu0 %v480
        %2019 = vmatmul.mubr.f32.gmra.mrb[0].mxu0 %v479
        %v2020 = vpop.f32.mrb[0].mxu0
        %v2021 = vadd.f32 %v1536, %v2020
        %v2022 = vpop.f32.mrb[0].mxu0
        %v2023 = vadd.f32 %v1536, %v2022
        %2024 = vmatprep.mubr.f32.mxu0 %v482
        %2025 = vmatmul.mubr.f32.gmra.mrb[0].mxu0 %v481
        %v2026 = vpop.f32.mrb[0].mxu0
        %v2027 = vadd.f32 %v1541, %v2026
        %v2028 = vpop.f32.mrb[0].mxu0
        %v2029 = vadd.f32 %v1541, %v2028
        %2030 = vmatprep.mubr.f32.mxu0 %v484
        %2031 = vmatmul.mubr.f32.gmra.mrb[0].mxu0 %v483
        %v2032 = vpop.f32.mrb[0].mxu0
        %v2033 = vadd.f32 %v1546, %v2032
        %v2034 = vpop.f32.mrb[0].mxu0
        %v2035 = vadd.f32 %v1546, %v2034
        %2036 = vmatprep.mubr.f32.mxu0 %v486
        %2037 = vmatmul.mubr.f32.gmra.mrb[0].mxu0 %v485
        %v2038 = vpop.f32.mrb[0].mxu0
        %v2039 = vadd.f32 %v1551, %v2038
        %v2040 = vpop.f32.mrb[0].mxu0
        %v2041 = vadd.f32 %v1551, %v2040
        %2042 = vmatprep.mubr.f32.mxu0 %v488
        %2043 = vmatmul.mubr.f32.gmra.mrb[0].mxu0 %v487
        %v2044 = vpop.f32.mrb[0].mxu0
        %v2045 = vadd.f32 %v1556, %v2044
        %v2046 = vpop.f32.mrb[0].mxu0
        %v2047 = vadd.f32 %v1556, %v2046
        %2048 = vmatprep.mubr.f32.mxu0 %v490
        %2049 = vmatmul.mubr.f32.gmra.mrb[0].mxu0 %v489
        %v2050 = vpop.f32.mrb[0].mxu0
        %v2051 = vadd.f32 %v1561, %v2050
        %v2052 = vpop.f32.mrb[0].mxu0
        %v2053 = vadd.f32 %v1561, %v2052
        %2054 = vmatprep.mubr.f32.mxu0 %v492
        %2055 = vmatmul.mubr.f32.gmra.mrb[0].mxu0 %v491
        %v2056 = vpop.f32.mrb[0].mxu0
        %v2057 = vadd.f32 %v1566, %v2056
        %v2058 = vpop.f32.mrb[0].mxu0
        %v2059 = vadd.f32 %v1566, %v2058
        %2060 = vmatprep.mubr.f32.mxu0 %v494
        %2061 = vmatmul.mubr.f32.gmra.mrb[0].mxu0 %v493
        %v2062 = vpop.f32.mrb[0].mxu0
        %v2063 = vadd.f32 %v1571, %v2062
        %v2064 = vpop.f32.mrb[0].mxu0
        %v2065 = vadd.f32 %v1571, %v2064
        %2066 = vmatprep.mubr.f32.mxu0 %v496
        %2067 = vmatmul.mubr.f32.gmra.mrb[0].mxu0 %v495
        %v2068 = vpop.f32.mrb[0].mxu0
        %v2069 = vadd.f32 %v1576, %v2068
        %v2070 = vpop.f32.mrb[0].mxu0
        %v2071 = vadd.f32 %v1576, %v2070
        %2072 = vmatprep.mubr.f32.mxu0 %v498
        %2073 = vmatmul.mubr.f32.gmra.mrb[0].mxu0 %v497
        %v2074 = vpop.f32.mrb[0].mxu0
        %v2075 = vadd.f32 %v1581, %v2074
        %v2076 = vpop.f32.mrb[0].mxu0
        %v2077 = vadd.f32 %v1581, %v2076
        %2078 = vmatprep.mubr.f32.mxu0 %v500
        %2079 = vmatmul.mubr.f32.gmra.mrb[0].mxu0 %v499
        %v2080 = vpop.f32.mrb[0].mxu0
        %v2081 = vadd.f32 %v1586, %v2080
        %v2082 = vpop.f32.mrb[0].mxu0
        %v2083 = vadd.f32 %v1586, %v2082
        %2084 = vmatprep.mubr.f32.mxu0 %v502
        %2085 = vmatmul.mubr.f32.gmra.mrb[0].mxu0 %v501
        %v2086 = vpop.f32.mrb[0].mxu0
        %v2087 = vadd.f32 %v1591, %v2086
        %v2088 = vpop.f32.mrb[0].mxu0
        %v2089 = vadd.f32 %v1591, %v2088
        %2090 = vmatprep.mubr.f32.mxu0 %v504
        %2091 = vmatmul.mubr.f32.gmra.mrb[0].mxu0 %v503
        %v2092 = vpop.f32.mrb[0].mxu0
        %v2093 = vadd.f32 %v1596, %v2092
        %v2094 = vpop.f32.mrb[0].mxu0
        %v2095 = vadd.f32 %v1596, %v2094
        %2096 = vmatprep.mubr.f32.mxu0 %v506
        %2097 = vmatmul.mubr.f32.gmra.mrb[0].mxu0 %v505
        %v2098 = vpop.f32.mrb[0].mxu0
        %v2099 = vadd.f32 %v1601, %v2098
        %v2100 = vpop.f32.mrb[0].mxu0
        %v2101 = vadd.f32 %v1601, %v2100
        %2102 = vmatprep.mubr.f32.mxu0 %v508
        %2103 = vmatmul.mubr.f32.gmra.mrb[0].mxu0 %v507
        %v2104 = vpop.f32.mrb[0].mxu0
        %v2105 = vadd.f32 %v1606, %v2104
        %v2106 = vpop.f32.mrb[0].mxu0
        %v2107 = vadd.f32 %v1606, %v2106
        %2108 = vmatprep.mubr.f32.mxu0 %v510
        %2109 = vmatmul.mubr.f32.gmra.mrb[0].mxu0 %v509
        %v2110 = vpop.f32.mrb[0].mxu0
        %v2111 = vadd.f32 %v1611, %v2110
        %v2112 = vpop.f32.mrb[0].mxu0
        %v2113 = vadd.f32 %v1611, %v2112
        %2114 = vmatprep.mubr.f32.mxu0 %v512
        %2115 = vmatmul.mubr.f32.gmra.mrb[0].mxu0 %v511
        %v2116 = vpop.f32.mrb[0].mxu0
        %v2117 = vadd.f32 %v1616, %v2116
        %v2118 = vpop.f32.mrb[0].mxu0
        %v2119 = vadd.f32 %v1616, %v2118
        %2120 = vmatprep.mubr.f32.mxu0 %v514
        %2121 = vmatmul.mubr.f32.gmra.mrb[0].mxu0 %v513
        %v2122 = vpop.f32.mrb[0].mxu0
        %v2123 = vadd.f32 %v1621, %v2122
        %v2124 = vpop.f32.mrb[0].mxu0
        %v2125 = vadd.f32 %v1621, %v2124
        %2126 = vmatprep.mubr.f32.mxu0 %v516
        %2127 = vmatmul.mubr.f32.gmra.mrb[0].mxu0 %v515
        %v2128 = vpop.f32.mrb[0].mxu0
        %v2129 = vadd.f32 %v1626, %v2128
        %v2130 = vpop.f32.mrb[0].mxu0
        %v2131 = vadd.f32 %v1626, %v2130
        %2132 = vmatprep.mubr.f32.mxu0 %v518
        %2133 = vmatmul.mubr.f32.gmra.mrb[0].mxu0 %v517
        %v2134 = vpop.f32.mrb[0].mxu0
        %v2135 = vadd.f32 %v1631, %v2134
        %v2136 = vpop.f32.mrb[0].mxu0
        %v2137 = vadd.f32 %v1631, %v2136
        %2138 = vmatprep.mubr.f32.mxu0 %v520
        %2139 = vmatmul.mubr.f32.gmra.mrb[0].mxu0 %v519
        %v2140 = vpop.f32.mrb[0].mxu0
        %v2141 = vadd.f32 %v1636, %v2140
        %v2142 = vpop.f32.mrb[0].mxu0
        %v2143 = vadd.f32 %v1636, %v2142
        %2144 = vmatprep.mubr.f32.mxu0 %v522
        %2145 = vmatmul.mubr.f32.gmra.mrb[0].mxu0 %v521
        %v2146 = vpop.f32.mrb[0].mxu0
        %v2147 = vadd.f32 %v1641, %v2146
        %v2148 = vpop.f32.mrb[0].mxu0
        %v2149 = vadd.f32 %v1641, %v2148
        %2150 = vmatprep.mubr.f32.mxu0 %v524
        %2151 = vmatmul.mubr.f32.gmra.mrb[0].mxu0 %v523
        %v2152 = vpop.f32.mrb[0].mxu0
        %v2153 = vadd.f32 %v1646, %v2152
        %v2154 = vpop.f32.mrb[0].mxu0
        %v2155 = vadd.f32 %v1646, %v2154
        %2156 = vmatprep.mubr.f32.mxu0 %v526
        %2157 = vmatmul.mubr.f32.gmra.mrb[0].mxu0 %v525
        %v2158 = vpop.f32.mrb[0].mxu0
        %v2159 = vadd.f32 %v1651, %v2158
        %v2160 = vpop.f32.mrb[0].mxu0
        %v2161 = vadd.f32 %v1651, %v2160
        %2162 = vmatprep.mubr.f32.mxu0 %v528
        %2163 = vmatmul.mubr.f32.gmra.mrb[0].mxu0 %v527
        %v2164 = vpop.f32.mrb[0].mxu0
        %v2165 = vadd.f32 %v1656, %v2164
        %v2166 = vpop.f32.mrb[0].mxu0
        %v2167 = vadd.f32 %v1656, %v2166
        %2168 = vmatprep.mubr.f32.mxu0 %v530
        %2169 = vmatmul.mubr.f32.gmra.mrb[0].mxu0 %v529
        %v2170 = vpop.f32.mrb[0].mxu0
        %v2171 = vadd.f32 %v1661, %v2170
        %v2172 = vpop.f32.mrb[0].mxu0
        %v2173 = vadd.f32 %v1661, %v2172
        %2174 = vmatprep.mubr.f32.mxu0 %v532
        %2175 = vmatmul.mubr.f32.gmra.mrb[0].mxu0 %v531
        %v2176 = vpop.f32.mrb[0].mxu0
        %v2177 = vadd.f32 %v1666, %v2176
        %v2178 = vpop.f32.mrb[0].mxu0
        %v2179 = vadd.f32 %v1666, %v2178
        %2180 = vmatprep.mubr.f32.mxu0 %v534
        %2181 = vmatmul.mubr.f32.gmra.mrb[0].mxu0 %v533
        %v2182 = vpop.f32.mrb[0].mxu0
        %v2183 = vadd.f32 %v1671, %v2182
        %v2184 = vpop.f32.mrb[0].mxu0
        %v2185 = vadd.f32 %v1671, %v2184
        %2186 = vdwg.mxu0
        %v2187 = vmax.f32 %v1740, 0.0
        %v2188 = vmax.f32 %v1742, 0.0
        %v2189 = vmax.f32 %v1997, 0.0
        %v2190 = vmax.f32 %v1999, 0.0
        %v2191 = vmax.f32 %v1746, 0.0
        %v2192 = vmax.f32 %v1748, 0.0
        %v2193 = vmax.f32 %v2003, 0.0
        %v2194 = vmax.f32 %v2005, 0.0
        %v2195 = vmax.f32 %v1752, 0.0
        %v2196 = vmax.f32 %v1754, 0.0
        %v2197 = vmax.f32 %v2009, 0.0
        %v2198 = vmax.f32 %v2011, 0.0
        %v2199 = vmax.f32 %v1758, 0.0
        %v2200 = vmax.f32 %v1760, 0.0
        %v2201 = vmax.f32 %v2015, 0.0
        %v2202 = vmax.f32 %v2017, 0.0
        %v2203 = vmax.f32 %v1764, 0.0
        %v2204 = vmax.f32 %v1766, 0.0
        %v2205 = vmax.f32 %v2021, 0.0
        %v2206 = vmax.f32 %v2023, 0.0
        %v2207 = vmax.f32 %v1770, 0.0
        %v2208 = vmax.f32 %v1772, 0.0
        %v2209 = vmax.f32 %v2027, 0.0
        %v2210 = vmax.f32 %v2029, 0.0
        %v2211 = vmax.f32 %v1776, 0.0
        %v2212 = vmax.f32 %v1778, 0.0
        %v2213 = vmax.f32 %v2033, 0.0
        %v2214 = vmax.f32 %v2035, 0.0
        %v2215 = vmax.f32 %v1782, 0.0
        %v2216 = vmax.f32 %v1784, 0.0
        %v2217 = vmax.f32 %v2039, 0.0
        %v2218 = vmax.f32 %v2041, 0.0
        %v2219 = vmax.f32 %v1788, 0.0
        %v2220 = vmax.f32 %v1790, 0.0
        %v2221 = vmax.f32 %v2045, 0.0
        %v2222 = vmax.f32 %v2047, 0.0
        %v2223 = vmax.f32 %v1794, 0.0
        %v2224 = vmax.f32 %v1796, 0.0
        %v2225 = vmax.f32 %v2051, 0.0
        %v2226 = vmax.f32 %v2053, 0.0
        %v2227 = vmax.f32 %v1800, 0.0
        %v2228 = vmax.f32 %v1802, 0.0
        %v2229 = vmax.f32 %v2057, 0.0
        %v2230 = vmax.f32 %v2059, 0.0
        %v2231 = vmax.f32 %v1806, 0.0
        %v2232 = vmax.f32 %v1808, 0.0
        %v2233 = vmax.f32 %v2063, 0.0
        %v2234 = vmax.f32 %v2065, 0.0
        %v2235 = vmax.f32 %v1812, 0.0
        %v2236 = vmax.f32 %v1814, 0.0
        %v2237 = vmax.f32 %v2069, 0.0
        %v2238 = vmax.f32 %v2071, 0.0
        %v2239 = vmax.f32 %v1818, 0.0
        %v2240 = vmax.f32 %v1820, 0.0
        %v2241 = vmax.f32 %v2075, 0.0
        %v2242 = vmax.f32 %v2077, 0.0
        %v2243 = vmax.f32 %v1824, 0.0
        %v2244 = vmax.f32 %v1826, 0.0
        %v2245 = vmax.f32 %v2081, 0.0
        %v2246 = vmax.f32 %v2083, 0.0
        %v2247 = vmax.f32 %v1830, 0.0
        %v2248 = vmax.f32 %v1832, 0.0
        %v2249 = vmax.f32 %v2087, 0.0
        %v2250 = vmax.f32 %v2089, 0.0
        %v2251 = vmax.f32 %v1836, 0.0
        %v2252 = vmax.f32 %v1838, 0.0
        %v2253 = vmax.f32 %v2093, 0.0
        %v2254 = vmax.f32 %v2095, 0.0
        %v2255 = vmax.f32 %v1842, 0.0
        %v2256 = vmax.f32 %v1844, 0.0
        %v2257 = vmax.f32 %v2099, 0.0
        %v2258 = vmax.f32 %v2101, 0.0
        %v2259 = vmax.f32 %v1848, 0.0
        %v2260 = vmax.f32 %v1850, 0.0
        %v2261 = vmax.f32 %v2105, 0.0
        %v2262 = vmax.f32 %v2107, 0.0
        %v2263 = vmax.f32 %v1854, 0.0
        %v2264 = vmax.f32 %v1856, 0.0
        %v2265 = vmax.f32 %v2111, 0.0
        %v2266 = vmax.f32 %v2113, 0.0
        %v2267 = vmax.f32 %v1860, 0.0
        %v2268 = vmax.f32 %v1862, 0.0
        %v2269 = vmax.f32 %v2117, 0.0
        %v2270 = vmax.f32 %v2119, 0.0
        %v2271 = vmax.f32 %v1866, 0.0
        %v2272 = vmax.f32 %v1868, 0.0
        %v2273 = vmax.f32 %v2123, 0.0
        %v2274 = vmax.f32 %v2125, 0.0
        %v2275 = vmax.f32 %v1872, 0.0
        %v2276 = vmax.f32 %v1874, 0.0
        %v2277 = vmax.f32 %v2129, 0.0
        %v2278 = vmax.f32 %v2131, 0.0
        %v2279 = vmax.f32 %v1878, 0.0
        %v2280 = vmax.f32 %v1880, 0.0
        %v2281 = vmax.f32 %v2135, 0.0
        %v2282 = vmax.f32 %v2137, 0.0
        %v2283 = vmax.f32 %v1884, 0.0
        %v2284 = vmax.f32 %v1886, 0.0
        %v2285 = vmax.f32 %v2141, 0.0
        %v2286 = vmax.f32 %v2143, 0.0
        %v2287 = vmax.f32 %v1890, 0.0
        %v2288 = vmax.f32 %v1892, 0.0
        %v2289 = vmax.f32 %v2147, 0.0
        %v2290 = vmax.f32 %v2149, 0.0
        %v2291 = vmax.f32 %v1896, 0.0
        %v2292 = vmax.f32 %v1898, 0.0
        %v2293 = vmax.f32 %v2153, 0.0
        %v2294 = vmax.f32 %v2155, 0.0
        %v2295 = vmax.f32 %v1902, 0.0
        %v2296 = vmax.f32 %v1904, 0.0
        %v2297 = vmax.f32 %v2159, 0.0
        %v2298 = vmax.f32 %v2161, 0.0
        %v2299 = vmax.f32 %v1908, 0.0
        %v2300 = vmax.f32 %v1910, 0.0
        %v2301 = vmax.f32 %v2165, 0.0
        %v2302 = vmax.f32 %v2167, 0.0
        %v2303 = vmax.f32 %v1914, 0.0
        %v2304 = vmax.f32 %v1916, 0.0
        %v2305 = vmax.f32 %v2171, 0.0
        %v2306 = vmax.f32 %v2173, 0.0
        %v2307 = vmax.f32 %v1920, 0.0
        %v2308 = vmax.f32 %v1922, 0.0
        %v2309 = vmax.f32 %v2177, 0.0
        %v2310 = vmax.f32 %v2179, 0.0
        %v2311 = vmax.f32 %v1926, 0.0
        %v2312 = vmax.f32 %v1928, 0.0
        %v2313 = vmax.f32 %v2183, 0.0
        %v2314 = vmax.f32 %v2185, 0.0
        %2316 = vset.pattern.permute.xlu0 0
        %2317 = vperm.xlu0 %2316, %v631
        %v2318 = vpop.permute.xlu0 %2317
        %2321 = vset.pattern.permute.xlu0 0
        %2322 = vperm.xlu0 %2321, %v632
        %v2323 = vpop.permute.xlu0 %2322
        %2326 = vset.pattern.permute.xlu0 0
        %2327 = vperm.xlu0 %2326, %v633
        %v2328 = vpop.permute.xlu0 %2327
        %2331 = vset.pattern.permute.xlu0 0
        %2332 = vperm.xlu0 %2331, %v634
        %v2333 = vpop.permute.xlu0 %2332
        %2336 = vset.pattern.permute.xlu0 0
        %2337 = vperm.xlu0 %2336, %v635
        %v2338 = vpop.permute.xlu0 %2337
        %2341 = vset.pattern.permute.xlu0 0
        %2342 = vperm.xlu0 %2341, %v636
        %v2343 = vpop.permute.xlu0 %2342
        %2346 = vset.pattern.permute.xlu0 0
        %2347 = vperm.xlu0 %2346, %v637
        %v2348 = vpop.permute.xlu0 %2347
        %2351 = vset.pattern.permute.xlu0 0
        %2352 = vperm.xlu0 %2351, %v638
        %v2353 = vpop.permute.xlu0 %2352
        %2356 = vset.pattern.permute.xlu0 0
        %2357 = vperm.xlu0 %2356, %v639
        %v2358 = vpop.permute.xlu0 %2357
        %2361 = vset.pattern.permute.xlu0 0
        %2362 = vperm.xlu0 %2361, %v640
        %v2363 = vpop.permute.xlu0 %2362
        %2366 = vset.pattern.permute.xlu0 0
        %2367 = vperm.xlu0 %2366, %v641
        %v2368 = vpop.permute.xlu0 %2367
        %2371 = vset.pattern.permute.xlu0 0
        %2372 = vperm.xlu0 %2371, %v642
        %v2373 = vpop.permute.xlu0 %2372
        %2376 = vset.pattern.permute.xlu0 0
        %2377 = vperm.xlu0 %2376, %v643
        %v2378 = vpop.permute.xlu0 %2377
        %2381 = vset.pattern.permute.xlu0 0
        %2382 = vperm.xlu0 %2381, %v644
        %v2383 = vpop.permute.xlu0 %2382
        %2386 = vset.pattern.permute.xlu0 0
        %2387 = vperm.xlu0 %2386, %v645
        %v2388 = vpop.permute.xlu0 %2387
        %2391 = vset.pattern.permute.xlu0 0
        %2392 = vperm.xlu0 %2391, %v646
        %v2393 = vpop.permute.xlu0 %2392
        %2395 = vmatprep.subr.mxu0 %v2188
        %2396 = vmatpush1.msra.mxu0 %v2187
        %2397 = vmatprep.subr.mxu0 %v2192
        %2398 = vmatpush1.msra.mxu0 %v2191
        %2399 = vmatprep.subr.mxu0 %v2196
        %2400 = vmatpush1.msra.mxu0 %v2195
        %2401 = vmatprep.subr.mxu0 %v2200
        %2402 = vmatpush1.msra.mxu0 %v2199
        %2403 = vmatprep.subr.mxu0 %v2204
        %2404 = vmatpush1.msra.mxu0 %v2203
        %2405 = vmatprep.subr.mxu0 %v2208
        %2406 = vmatpush1.msra.mxu0 %v2207
        %2407 = vmatprep.subr.mxu0 %v2212
        %2408 = vmatpush1.msra.mxu0 %v2211
        %2409 = vmatprep.subr.mxu0 %v2216
        %2410 = vmatpush1.msra.mxu0 %v2215
        %2411 = vmatprep.subr.mxu0 %v2220
        %2412 = vmatpush1.msra.mxu0 %v2219
        %2413 = vmatprep.subr.mxu0 %v2224
        %2414 = vmatpush1.msra.mxu0 %v2223
        %2415 = vmatprep.subr.mxu0 %v2228
        %2416 = vmatpush1.msra.mxu0 %v2227
        %2417 = vmatprep.subr.mxu0 %v2232
        %2418 = vmatpush1.msra.mxu0 %v2231
        %2419 = vmatprep.subr.mxu0 %v2236
        %2420 = vmatpush1.msra.mxu0 %v2235
        %2421 = vmatprep.subr.mxu0 %v2240
        %2422 = vmatpush1.msra.mxu0 %v2239
        %2423 = vmatprep.subr.mxu0 %v2244
        %2424 = vmatpush1.msra.mxu0 %v2243
        %2425 = vmatprep.subr.mxu0 %v2248
        %2426 = vmatpush1.msra.mxu0 %v2247
        %2427 = vmatprep.subr.mxu0 %v2252
        %2428 = vmatpush1.msra.mxu0 %v2251
        %2429 = vmatprep.subr.mxu0 %v2256
        %2430 = vmatpush1.msra.mxu0 %v2255
        %2431 = vmatprep.subr.mxu0 %v2260
        %2432 = vmatpush1.msra.mxu0 %v2259
        %2433 = vmatprep.subr.mxu0 %v2264
        %2434 = vmatpush1.msra.mxu0 %v2263
        %2435 = vmatprep.subr.mxu0 %v2268
        %2436 = vmatpush1.msra.mxu0 %v2267
        %2437 = vmatprep.subr.mxu0 %v2272
        %2438 = vmatpush1.msra.mxu0 %v2271
        %2439 = vmatprep.subr.mxu0 %v2276
        %2440 = vmatpush1.msra.mxu0 %v2275
        %2441 = vmatprep.subr.mxu0 %v2280
        %2442 = vmatpush1.msra.mxu0 %v2279
        %2443 = vmatprep.subr.mxu0 %v2284
        %2444 = vmatpush1.msra.mxu0 %v2283
        %2445 = vmatprep.subr.mxu0 %v2288
        %2446 = vmatpush1.msra.mxu0 %v2287
        %2447 = vmatprep.subr.mxu0 %v2292
        %2448 = vmatpush1.msra.mxu0 %v2291
        %2449 = vmatprep.subr.mxu0 %v2296
        %2450 = vmatpush1.msra.mxu0 %v2295
        %2451 = vmatprep.subr.mxu0 %v2300
        %2452 = vmatpush1.msra.mxu0 %v2299
        %2453 = vmatprep.subr.mxu0 %v2304
        %2454 = vmatpush1.msra.mxu0 %v2303
        %2455 = vmatprep.subr.mxu0 %v2308
        %2456 = vmatpush1.msra.mxu0 %v2307
        %2457 = vmatprep.subr.mxu0 %v2312
        %2458 = vmatpush1.msra.mxu0 %v2311
        %2459 = vmatprep.mubr.f32.mxu0 %v536
        %2460 = vmatmul.mubr.f32.gmra.mrb[0].mxu0 %v535
        %v2461 = vpop.f32.mrb[0].mxu0
        %v2462 = vadd.f32 %v2318, %v2461
        %v2463 = vpop.f32.mrb[0].mxu0
        %v2464 = vadd.f32 %v2318, %v2463
        %2465 = vmatprep.mubr.f32.mxu0 %v538
        %2466 = vmatmul.mubr.f32.gmra.mrb[0].mxu0 %v537
        %v2467 = vpop.f32.mrb[0].mxu0
        %v2468 = vadd.f32 %v2323, %v2467
        %v2469 = vpop.f32.mrb[0].mxu0
        %v2470 = vadd.f32 %v2323, %v2469
        %2471 = vmatprep.mubr.f32.mxu0 %v540
        %2472 = vmatmul.mubr.f32.gmra.mrb[0].mxu0 %v539
        %v2473 = vpop.f32.mrb[0].mxu0
        %v2474 = vadd.f32 %v2328, %v2473
        %v2475 = vpop.f32.mrb[0].mxu0
        %v2476 = vadd.f32 %v2328, %v2475
        %2477 = vmatprep.mubr.f32.mxu0 %v542
        %2478 = vmatmul.mubr.f32.gmra.mrb[0].mxu0 %v541
        %v2479 = vpop.f32.mrb[0].mxu0
        %v2480 = vadd.f32 %v2333, %v2479
        %v2481 = vpop.f32.mrb[0].mxu0
        %v2482 = vadd.f32 %v2333, %v2481
        %2483 = vmatprep.mubr.f32.mxu0 %v544
        %2484 = vmatmul.mubr.f32.gmra.mrb[0].mxu0 %v543
        %v2485 = vpop.f32.mrb[0].mxu0
        %v2486 = vadd.f32 %v2338, %v2485
        %v2487 = vpop.f32.mrb[0].mxu0
        %v2488 = vadd.f32 %v2338, %v2487
        %2489 = vmatprep.mubr.f32.mxu0 %v546
        %2490 = vmatmul.mubr.f32.gmra.mrb[0].mxu0 %v545
        %v2491 = vpop.f32.mrb[0].mxu0
        %v2492 = vadd.f32 %v2343, %v2491
        %v2493 = vpop.f32.mrb[0].mxu0
        %v2494 = vadd.f32 %v2343, %v2493
        %2495 = vmatprep.mubr.f32.mxu0 %v548
        %2496 = vmatmul.mubr.f32.gmra.mrb[0].mxu0 %v547
        %v2497 = vpop.f32.mrb[0].mxu0
        %v2498 = vadd.f32 %v2348, %v2497
        %v2499 = vpop.f32.mrb[0].mxu0
        %v2500 = vadd.f32 %v2348, %v2499
        %2501 = vmatprep.mubr.f32.mxu0 %v550
        %2502 = vmatmul.mubr.f32.gmra.mrb[0].mxu0 %v549
        %v2503 = vpop.f32.mrb[0].mxu0
        %v2504 = vadd.f32 %v2353, %v2503
        %v2505 = vpop.f32.mrb[0].mxu0
        %v2506 = vadd.f32 %v2353, %v2505
        %2507 = vmatprep.mubr.f32.mxu0 %v552
        %2508 = vmatmul.mubr.f32.gmra.mrb[0].mxu0 %v551
        %v2509 = vpop.f32.mrb[0].mxu0
        %v2510 = vadd.f32 %v2358, %v2509
        %v2511 = vpop.f32.mrb[0].mxu0
        %v2512 = vadd.f32 %v2358, %v2511
        %2513 = vmatprep.mubr.f32.mxu0 %v554
        %2514 = vmatmul.mubr.f32.gmra.mrb[0].mxu0 %v553
        %v2515 = vpop.f32.mrb[0].mxu0
        %v2516 = vadd.f32 %v2363, %v2515
        %v2517 = vpop.f32.mrb[0].mxu0
        %v2518 = vadd.f32 %v2363, %v2517
        %2519 = vmatprep.mubr.f32.mxu0 %v556
        %2520 = vmatmul.mubr.f32.gmra.mrb[0].mxu0 %v555
        %v2521 = vpop.f32.mrb[0].mxu0
        %v2522 = vadd.f32 %v2368, %v2521
        %v2523 = vpop.f32.mrb[0].mxu0
        %v2524 = vadd.f32 %v2368, %v2523
        %2525 = vmatprep.mubr.f32.mxu0 %v558
        %2526 = vmatmul.mubr.f32.gmra.mrb[0].mxu0 %v557
        %v2527 = vpop.f32.mrb[0].mxu0
        %v2528 = vadd.f32 %v2373, %v2527
        %v2529 = vpop.f32.mrb[0].mxu0
        %v2530 = vadd.f32 %v2373, %v2529
        %2531 = vmatprep.mubr.f32.mxu0 %v560
        %2532 = vmatmul.mubr.f32.gmra.mrb[0].mxu0 %v559
        %v2533 = vpop.f32.mrb[0].mxu0
        %v2534 = vadd.f32 %v2378, %v2533
        %v2535 = vpop.f32.mrb[0].mxu0
        %v2536 = vadd.f32 %v2378, %v2535
        %2537 = vmatprep.mubr.f32.mxu0 %v562
        %2538 = vmatmul.mubr.f32.gmra.mrb[0].mxu0 %v561
        %v2539 = vpop.f32.mrb[0].mxu0
        %v2540 = vadd.f32 %v2383, %v2539
        %v2541 = vpop.f32.mrb[0].mxu0
        %v2542 = vadd.f32 %v2383, %v2541
        %2543 = vmatprep.mubr.f32.mxu0 %v564
        %2544 = vmatmul.mubr.f32.gmra.mrb[0].mxu0 %v563
        %v2545 = vpop.f32.mrb[0].mxu0
        %v2546 = vadd.f32 %v2388, %v2545
        %v2547 = vpop.f32.mrb[0].mxu0
        %v2548 = vadd.f32 %v2388, %v2547
        %2549 = vmatprep.mubr.f32.mxu0 %v566
        %2550 = vmatmul.mubr.f32.gmra.mrb[0].mxu0 %v565
        %v2551 = vpop.f32.mrb[0].mxu0
        %v2552 = vadd.f32 %v2393, %v2551
        %v2553 = vpop.f32.mrb[0].mxu0
        %v2554 = vadd.f32 %v2393, %v2553
        %2555 = vdwg.mxu0
        %2556 = vmatprep.subr.mxu0 %v2190
        %2557 = vmatpush1.msra.mxu0 %v2189
        %2558 = vmatprep.subr.mxu0 %v2194
        %2559 = vmatpush1.msra.mxu0 %v2193
        %2560 = vmatprep.subr.mxu0 %v2198
        %2561 = vmatpush1.msra.mxu0 %v2197
        %2562 = vmatprep.subr.mxu0 %v2202
        %2563 = vmatpush1.msra.mxu0 %v2201
        %2564 = vmatprep.subr.mxu0 %v2206
        %2565 = vmatpush1.msra.mxu0 %v2205
        %2566 = vmatprep.subr.mxu0 %v2210
        %2567 = vmatpush1.msra.mxu0 %v2209
        %2568 = vmatprep.subr.mxu0 %v2214
        %2569 = vmatpush1.msra.mxu0 %v2213
        %2570 = vmatprep.subr.mxu0 %v2218
        %2571 = vmatpush1.msra.mxu0 %v2217
        %2572 = vmatprep.subr.mxu0 %v2222
        %2573 = vmatpush1.msra.mxu0 %v2221
        %2574 = vmatprep.subr.mxu0 %v2226
        %2575 = vmatpush1.msra.mxu0 %v2225
        %2576 = vmatprep.subr.mxu0 %v2230
        %2577 = vmatpush1.msra.mxu0 %v2229
        %2578 = vmatprep.subr.mxu0 %v2234
        %2579 = vmatpush1.msra.mxu0 %v2233
        %2580 = vmatprep.subr.mxu0 %v2238
        %2581 = vmatpush1.msra.mxu0 %v2237
        %2582 = vmatprep.subr.mxu0 %v2242
        %2583 = vmatpush1.msra.mxu0 %v2241
        %2584 = vmatprep.subr.mxu0 %v2246
        %2585 = vmatpush1.msra.mxu0 %v2245
        %2586 = vmatprep.subr.mxu0 %v2250
        %2587 = vmatpush1.msra.mxu0 %v2249
        %2588 = vmatprep.subr.mxu0 %v2254
        %2589 = vmatpush1.msra.mxu0 %v2253
        %2590 = vmatprep.subr.mxu0 %v2258
        %2591 = vmatpush1.msra.mxu0 %v2257
        %2592 = vmatprep.subr.mxu0 %v2262
        %2593 = vmatpush1.msra.mxu0 %v2261
        %2594 = vmatprep.subr.mxu0 %v2266
        %2595 = vmatpush1.msra.mxu0 %v2265
        %2596 = vmatprep.subr.mxu0 %v2270
        %2597 = vmatpush1.msra.mxu0 %v2269
        %2598 = vmatprep.subr.mxu0 %v2274
        %2599 = vmatpush1.msra.mxu0 %v2273
        %2600 = vmatprep.subr.mxu0 %v2278
        %2601 = vmatpush1.msra.mxu0 %v2277
        %2602 = vmatprep.subr.mxu0 %v2282
        %2603 = vmatpush1.msra.mxu0 %v2281
        %2604 = vmatprep.subr.mxu0 %v2286
        %2605 = vmatpush1.msra.mxu0 %v2285
        %2606 = vmatprep.subr.mxu0 %v2290
        %2607 = vmatpush1.msra.mxu0 %v2289
        %2608 = vmatprep.subr.mxu0 %v2294
        %2609 = vmatpush1.msra.mxu0 %v2293
        %2610 = vmatprep.subr.mxu0 %v2298
        %2611 = vmatpush1.msra.mxu0 %v2297
        %2612 = vmatprep.subr.mxu0 %v2302
        %2613 = vmatpush1.msra.mxu0 %v2301
        %2614 = vmatprep.subr.mxu0 %v2306
        %2615 = vmatpush1.msra.mxu0 %v2305
        %2616 = vmatprep.subr.mxu0 %v2310
        %2617 = vmatpush1.msra.mxu0 %v2309
        %2618 = vmatprep.subr.mxu0 %v2314
        %2619 = vmatpush1.msra.mxu0 %v2313
        %2620 = vmatprep.mubr.f32.mxu0 %v536
        %2621 = vmatmul.mubr.f32.gmra.mrb[0].mxu0 %v535
        %v2622 = vpop.f32.mrb[0].mxu0
        %v2623 = vadd.f32 %v2318, %v2622
        %v2624 = vpop.f32.mrb[0].mxu0
        %v2625 = vadd.f32 %v2318, %v2624
        %2626 = vmatprep.mubr.f32.mxu0 %v538
        %2627 = vmatmul.mubr.f32.gmra.mrb[0].mxu0 %v537
        %v2628 = vpop.f32.mrb[0].mxu0
        %v2629 = vadd.f32 %v2323, %v2628
        %v2630 = vpop.f32.mrb[0].mxu0
        %v2631 = vadd.f32 %v2323, %v2630
        %2632 = vmatprep.mubr.f32.mxu0 %v540
        %2633 = vmatmul.mubr.f32.gmra.mrb[0].mxu0 %v539
        %v2634 = vpop.f32.mrb[0].mxu0
        %v2635 = vadd.f32 %v2328, %v2634
        %v2636 = vpop.f32.mrb[0].mxu0
        %v2637 = vadd.f32 %v2328, %v2636
        %2638 = vmatprep.mubr.f32.mxu0 %v542
        %2639 = vmatmul.mubr.f32.gmra.mrb[0].mxu0 %v541
        %v2640 = vpop.f32.mrb[0].mxu0
        %v2641 = vadd.f32 %v2333, %v2640
        %v2642 = vpop.f32.mrb[0].mxu0
        %v2643 = vadd.f32 %v2333, %v2642
        %2644 = vmatprep.mubr.f32.mxu0 %v544
        %2645 = vmatmul.mubr.f32.gmra.mrb[0].mxu0 %v543
        %v2646 = vpop.f32.mrb[0].mxu0
        %v2647 = vadd.f32 %v2338, %v2646
        %v2648 = vpop.f32.mrb[0].mxu0
        %v2649 = vadd.f32 %v2338, %v2648
        %2650 = vmatprep.mubr.f32.mxu0 %v546
        %2651 = vmatmul.mubr.f32.gmra.mrb[0].mxu0 %v545
        %v2652 = vpop.f32.mrb[0].mxu0
        %v2653 = vadd.f32 %v2343, %v2652
        %v2654 = vpop.f32.mrb[0].mxu0
        %v2655 = vadd.f32 %v2343, %v2654
        %2656 = vmatprep.mubr.f32.mxu0 %v548
        %2657 = vmatmul.mubr.f32.gmra.mrb[0].mxu0 %v547
        %v2658 = vpop.f32.mrb[0].mxu0
        %v2659 = vadd.f32 %v2348, %v2658
        %v2660 = vpop.f32.mrb[0].mxu0
        %v2661 = vadd.f32 %v2348, %v2660
        %2662 = vmatprep.mubr.f32.mxu0 %v550
        %2663 = vmatmul.mubr.f32.gmra.mrb[0].mxu0 %v549
        %v2664 = vpop.f32.mrb[0].mxu0
        %v2665 = vadd.f32 %v2353, %v2664
        %v2666 = vpop.f32.mrb[0].mxu0
        %v2667 = vadd.f32 %v2353, %v2666
        %2668 = vmatprep.mubr.f32.mxu0 %v552
        %2669 = vmatmul.mubr.f32.gmra.mrb[0].mxu0 %v551
        %v2670 = vpop.f32.mrb[0].mxu0
        %v2671 = vadd.f32 %v2358, %v2670
        %v2672 = vpop.f32.mrb[0].mxu0
        %v2673 = vadd.f32 %v2358, %v2672
        %2674 = vmatprep.mubr.f32.mxu0 %v554
        %2675 = vmatmul.mubr.f32.gmra.mrb[0].mxu0 %v553
        %v2676 = vpop.f32.mrb[0].mxu0
        %v2677 = vadd.f32 %v2363, %v2676
        %v2678 = vpop.f32.mrb[0].mxu0
        %v2679 = vadd.f32 %v2363, %v2678
        %2680 = vmatprep.mubr.f32.mxu0 %v556
        %2681 = vmatmul.mubr.f32.gmra.mrb[0].mxu0 %v555
        %v2682 = vpop.f32.mrb[0].mxu0
        %v2683 = vadd.f32 %v2368, %v2682
        %v2684 = vpop.f32.mrb[0].mxu0
        %v2685 = vadd.f32 %v2368, %v2684
        %2686 = vmatprep.mubr.f32.mxu0 %v558
        %2687 = vmatmul.mubr.f32.gmra.mrb[0].mxu0 %v557
        %v2688 = vpop.f32.mrb[0].mxu0
        %v2689 = vadd.f32 %v2373, %v2688
        %v2690 = vpop.f32.mrb[0].mxu0
        %v2691 = vadd.f32 %v2373, %v2690
        %2692 = vmatprep.mubr.f32.mxu0 %v560
        %2693 = vmatmul.mubr.f32.gmra.mrb[0].mxu0 %v559
        %v2694 = vpop.f32.mrb[0].mxu0
        %v2695 = vadd.f32 %v2378, %v2694
        %v2696 = vpop.f32.mrb[0].mxu0
        %v2697 = vadd.f32 %v2378, %v2696
        %2698 = vmatprep.mubr.f32.mxu0 %v562
        %2699 = vmatmul.mubr.f32.gmra.mrb[0].mxu0 %v561
        %v2700 = vpop.f32.mrb[0].mxu0
        %v2701 = vadd.f32 %v2383, %v2700
        %v2702 = vpop.f32.mrb[0].mxu0
        %v2703 = vadd.f32 %v2383, %v2702
        %2704 = vmatprep.mubr.f32.mxu0 %v564
        %2705 = vmatmul.mubr.f32.gmra.mrb[0].mxu0 %v563
        %v2706 = vpop.f32.mrb[0].mxu0
        %v2707 = vadd.f32 %v2388, %v2706
        %v2708 = vpop.f32.mrb[0].mxu0
        %v2709 = vadd.f32 %v2388, %v2708
        %2710 = vmatprep.mubr.f32.mxu0 %v566
        %2711 = vmatmul.mubr.f32.gmra.mrb[0].mxu0 %v565
        %v2712 = vpop.f32.mrb[0].mxu0
        %v2713 = vadd.f32 %v2393, %v2712
        %v2714 = vpop.f32.mrb[0].mxu0
        %v2715 = vadd.f32 %v2393, %v2714
        %2716 = vdwg.mxu0
        %2717 = vst [vmem:[%s436] sm:$0xff] %v2462
        %2718 = vst [vmem:[%s436 + $0x8] sm:$0xff] %v2464
        %2719 = vst [vmem:[%s436 + $0x10] sm:$0xff] %v2623
        %2720 = vst [vmem:[%s436 + $0x18] sm:$0xff] %v2625
        %2721 = vst [vmem:[%s436 + $0x20] sm:$0xff] %v2468
        %2722 = vst [vmem:[%s436 + $0x28] sm:$0xff] %v2470
        %2723 = vst [vmem:[%s436 + $0x30] sm:$0xff] %v2629
        %2724 = vst [vmem:[%s436 + $0x38] sm:$0xff] %v2631
        %2725 = vst [vmem:[%s436 + $0x40] sm:$0xff] %v2474
        %2726 = vst [vmem:[%s436 + $0x48] sm:$0xff] %v2476
        %2727 = vst [vmem:[%s436 + $0x50] sm:$0xff] %v2635
        %2728 = vst [vmem:[%s436 + $0x58] sm:$0xff] %v2637
        %2729 = vst [vmem:[%s436 + $0x60] sm:$0xff] %v2480
        %2730 = vst [vmem:[%s436 + $0x68] sm:$0xff] %v2482
        %2731 = vst [vmem:[%s436 + $0x70] sm:$0xff] %v2641
        %2732 = vst [vmem:[%s436 + $0x78] sm:$0xff] %v2643
        %2733 = vst [vmem:[%s436 + $0x80] sm:$0xff] %v2486
        %2734 = vst [vmem:[%s436 + $0x88] sm:$0xff] %v2488
        %2735 = vst [vmem:[%s436 + $0x90] sm:$0xff] %v2647
        %2736 = vst [vmem:[%s436 + $0x98] sm:$0xff] %v2649
        %2737 = vst [vmem:[%s436 + $0xa0] sm:$0xff] %v2492
        %2738 = vst [vmem:[%s436 + $0xa8] sm:$0xff] %v2494
        %2739 = vst [vmem:[%s436 + $0xb0] sm:$0xff] %v2653
        %2740 = vst [vmem:[%s436 + $0xb8] sm:$0xff] %v2655
        %2741 = vst [vmem:[%s436 + $0xc0] sm:$0xff] %v2498
        %2742 = vst [vmem:[%s436 + $0xc8] sm:$0xff] %v2500
        %2743 = vst [vmem:[%s436 + $0xd0] sm:$0xff] %v2659
        %2744 = vst [vmem:[%s436 + $0xd8] sm:$0xff] %v2661
        %2745 = vst [vmem:[%s436 + $0xe0] sm:$0xff] %v2504
        %2746 = vst [vmem:[%s436 + $0xe8] sm:$0xff] %v2506
        %2747 = vst [vmem:[%s436 + $0xf0] sm:$0xff] %v2665
        %2748 = vst [vmem:[%s436 + $0xf8] sm:$0xff] %v2667
        %2749 = vst [vmem:[%s436 + $0x100] sm:$0xff] %v2510
        %2750 = vst [vmem:[%s436 + $0x108] sm:$0xff] %v2512
        %2751 = vst [vmem:[%s436 + $0x110] sm:$0xff] %v2671
        %2752 = vst [vmem:[%s436 + $0x118] sm:$0xff] %v2673
        %2753 = vst [vmem:[%s436 + $0x120] sm:$0xff] %v2516
        %2754 = vst [vmem:[%s436 + $0x128] sm:$0xff] %v2518
        %2755 = vst [vmem:[%s436 + $0x130] sm:$0xff] %v2677
        %2756 = vst [vmem:[%s436 + $0x138] sm:$0xff] %v2679
        %2757 = vst [vmem:[%s436 + $0x140] sm:$0xff] %v2522
        %2758 = vst [vmem:[%s436 + $0x148] sm:$0xff] %v2524
        %2759 = vst [vmem:[%s436 + $0x150] sm:$0xff] %v2683
        %2760 = vst [vmem:[%s436 + $0x158] sm:$0xff] %v2685
        %2761 = vst [vmem:[%s436 + $0x160] sm:$0xff] %v2528
        %2762 = vst [vmem:[%s436 + $0x168] sm:$0xff] %v2530
        %2763 = vst [vmem:[%s436 + $0x170] sm:$0xff] %v2689
        %2764 = vst [vmem:[%s436 + $0x178] sm:$0xff] %v2691
        %2765 = vst [vmem:[%s436 + $0x180] sm:$0xff] %v2534
        %2766 = vst [vmem:[%s436 + $0x188] sm:$0xff] %v2536
        %2767 = vst [vmem:[%s436 + $0x190] sm:$0xff] %v2695
        %2768 = vst [vmem:[%s436 + $0x198] sm:$0xff] %v2697
        %2769 = vst [vmem:[%s436 + $0x1a0] sm:$0xff] %v2540
        %2770 = vst [vmem:[%s436 + $0x1a8] sm:$0xff] %v2542
        %2771 = vst [vmem:[%s436 + $0x1b0] sm:$0xff] %v2701
        %2772 = vst [vmem:[%s436 + $0x1b8] sm:$0xff] %v2703
        %2773 = vst [vmem:[%s436 + $0x1c0] sm:$0xff] %v2546
        %2774 = vst [vmem:[%s436 + $0x1c8] sm:$0xff] %v2548
        %2775 = vst [vmem:[%s436 + $0x1d0] sm:$0xff] %v2707
        %2776 = vst [vmem:[%s436 + $0x1d8] sm:$0xff] %v2709
        %2777 = vst [vmem:[%s436 + $0x1e0] sm:$0xff] %v2552
        %2778 = vst [vmem:[%s436 + $0x1e8] sm:$0xff] %v2554
        %2779 = vst [vmem:[%s436 + $0x1f0] sm:$0xff] %v2713
        %2780 = vst [vmem:[%s436 + $0x1f8] sm:$0xff] %v2715
        %s2781 = sand.u32 %s194, 1
        %s2782 = sand.u32 %s194, 1
        %s2783 = smul.addr %s2782, 512
        %s2784 = scalar_lea.vmem [#allocation3], %s2783
        // Predicated region
        $region72: #{conv_pallas.1} parent=66 // pred_check
          %p2785 = pneg %p204
        $region73: #{conv_pallas.1} parent=66 // pred_check_branch
          %2787 = sbr.rel (%p2785) target = $region75
        $region74: #{conv_pallas.1} parent=66 // pred_region
          %s2788 = smul.u32 4, %s23
          %s2789 = smul.addr %s22, 128
          %s2790 = sadd.s32 %s2788, %s2789
          %s2791 = smul.addr %s2790, 8
          %s2792 = scalar_lea.vmem %s7, %s2791
          // Predicated region
          $region76: #{conv_pallas.1} parent=74 // pred_check
            _
          $region77: #{conv_pallas.1} parent=74 // pred_check_branch
            %2794 = sbr.rel (0) target = $region79
          $region78: #{conv_pallas.1} parent=74 // pred_region
            // Predicated region
            $region80: #{conv_pallas.1} parent=78 // pred_check
              _
            $region81: #{conv_pallas.1} parent=78 // pred_check_branch
              %2796 = sbr.rel (0) target = $region83
            $region82: #{conv_pallas.1} parent=78 // pred_region
              loop: start=0, step=1, limit=1
              $region84: #{conv_pallas.1} parent=82 // loop_pre_header
                _
              $region85: #{conv_pallas.1} parent=82 // loop_header
                %s2798 = sphi 0, %s2802
                %p2799 = scmp.ge.s32.totalorder %s2798, 1
                %s2803 = sphi %s2784, %s2784
                %s2804 = sphi %s2792, %s2792
              $region86: #{conv_pallas.1} parent=82 // loop_header_branch
                %2801 = sbr.rel (%p2799) target = $region90
              $region87: #{conv_pallas.1} parent=82 // loop_body
                %v2805 = vld [vmem:[%s2803] sm:$0xff]
                %2806 = vst [vmem:[%s2804] sm:$0xff] %v2805
                %v2807 = vld [vmem:[%s2803 + $0x8] sm:$0xff]
                %2808 = vst [vmem:[%s2804 + $0x8] sm:$0xff] %v2807
                %v2809 = vld [vmem:[%s2803 + $0x10] sm:$0xff]
                %2810 = vst [vmem:[%s2804 + $0x10] sm:$0xff] %v2809
                %v2811 = vld [vmem:[%s2803 + $0x18] sm:$0xff]
                %2812 = vst [vmem:[%s2804 + $0x18] sm:$0xff] %v2811
                %v2813 = vld [vmem:[%s2803 + $0x20] sm:$0xff]
                %2814 = vst [vmem:[%s2804 + $0x40] sm:$0xff] %v2813
                %v2815 = vld [vmem:[%s2803 + $0x28] sm:$0xff]
                %2816 = vst [vmem:[%s2804 + $0x48] sm:$0xff] %v2815
                %v2817 = vld [vmem:[%s2803 + $0x30] sm:$0xff]
                %2818 = vst [vmem:[%s2804 + $0x50] sm:$0xff] %v2817
                %v2819 = vld [vmem:[%s2803 + $0x38] sm:$0xff]
                %2820 = vst [vmem:[%s2804 + $0x58] sm:$0xff] %v2819
                %v2821 = vld [vmem:[%s2803 + $0x40] sm:$0xff]
                %2822 = vst [vmem:[%s2804 + $0x80] sm:$0xff] %v2821
                %v2823 = vld [vmem:[%s2803 + $0x48] sm:$0xff]
                %2824 = vst [vmem:[%s2804 + $0x88] sm:$0xff] %v2823
                %v2825 = vld [vmem:[%s2803 + $0x50] sm:$0xff]
                %2826 = vst [vmem:[%s2804 + $0x90] sm:$0xff] %v2825
                %v2827 = vld [vmem:[%s2803 + $0x58] sm:$0xff]
                %2828 = vst [vmem:[%s2804 + $0x98] sm:$0xff] %v2827
                %v2829 = vld [vmem:[%s2803 + $0x60] sm:$0xff]
                %2830 = vst [vmem:[%s2804 + $0xc0] sm:$0xff] %v2829
                %v2831 = vld [vmem:[%s2803 + $0x68] sm:$0xff]
                %2832 = vst [vmem:[%s2804 + $0xc8] sm:$0xff] %v2831
                %v2833 = vld [vmem:[%s2803 + $0x70] sm:$0xff]
                %2834 = vst [vmem:[%s2804 + $0xd0] sm:$0xff] %v2833
                %v2835 = vld [vmem:[%s2803 + $0x78] sm:$0xff]
                %2836 = vst [vmem:[%s2804 + $0xd8] sm:$0xff] %v2835
                %v2837 = vld [vmem:[%s2803 + $0x80] sm:$0xff]
                %2838 = vst [vmem:[%s2804 + $0x100] sm:$0xff] %v2837
                %v2839 = vld [vmem:[%s2803 + $0x88] sm:$0xff]
                %2840 = vst [vmem:[%s2804 + $0x108] sm:$0xff] %v2839
                %v2841 = vld [vmem:[%s2803 + $0x90] sm:$0xff]
                %2842 = vst [vmem:[%s2804 + $0x110] sm:$0xff] %v2841
                %v2843 = vld [vmem:[%s2803 + $0x98] sm:$0xff]
                %2844 = vst [vmem:[%s2804 + $0x118] sm:$0xff] %v2843
                %v2845 = vld [vmem:[%s2803 + $0xa0] sm:$0xff]
                %2846 = vst [vmem:[%s2804 + $0x140] sm:$0xff] %v2845
                %v2847 = vld [vmem:[%s2803 + $0xa8] sm:$0xff]
                %2848 = vst [vmem:[%s2804 + $0x148] sm:$0xff] %v2847
                %v2849 = vld [vmem:[%s2803 + $0xb0] sm:$0xff]
                %2850 = vst [vmem:[%s2804 + $0x150] sm:$0xff] %v2849
                %v2851 = vld [vmem:[%s2803 + $0xb8] sm:$0xff]
                %2852 = vst [vmem:[%s2804 + $0x158] sm:$0xff] %v2851
                %v2853 = vld [vmem:[%s2803 + $0xc0] sm:$0xff]
                %2854 = vst [vmem:[%s2804 + $0x180] sm:$0xff] %v2853
                %v2855 = vld [vmem:[%s2803 + $0xc8] sm:$0xff]
                %2856 = vst [vmem:[%s2804 + $0x188] sm:$0xff] %v2855
                %v2857 = vld [vmem:[%s2803 + $0xd0] sm:$0xff]
                %2858 = vst [vmem:[%s2804 + $0x190] sm:$0xff] %v2857
                %v2859 = vld [vmem:[%s2803 + $0xd8] sm:$0xff]
                %2860 = vst [vmem:[%s2804 + $0x198] sm:$0xff] %v2859
                %v2861 = vld [vmem:[%s2803 + $0xe0] sm:$0xff]
                %2862 = vst [vmem:[%s2804 + $0x1c0] sm:$0xff] %v2861
                %v2863 = vld [vmem:[%s2803 + $0xe8] sm:$0xff]
                %2864 = vst [vmem:[%s2804 + $0x1c8] sm:$0xff] %v2863
                %v2865 = vld [vmem:[%s2803 + $0xf0] sm:$0xff]
                %2866 = vst [vmem:[%s2804 + $0x1d0] sm:$0xff] %v2865
                %v2867 = vld [vmem:[%s2803 + $0xf8] sm:$0xff]
                %2868 = vst [vmem:[%s2804 + $0x1d8] sm:$0xff] %v2867
                %v2869 = vld [vmem:[%s2803 + $0x100] sm:$0xff]
                %2870 = vst [vmem:[%s2804 + $0x200] sm:$0xff] %v2869
                %v2871 = vld [vmem:[%s2803 + $0x108] sm:$0xff]
                %2872 = vst [vmem:[%s2804 + $0x208] sm:$0xff] %v2871
                %v2873 = vld [vmem:[%s2803 + $0x110] sm:$0xff]
                %2874 = vst [vmem:[%s2804 + $0x210] sm:$0xff] %v2873
                %v2875 = vld [vmem:[%s2803 + $0x118] sm:$0xff]
                %2876 = vst [vmem:[%s2804 + $0x218] sm:$0xff] %v2875
                %v2877 = vld [vmem:[%s2803 + $0x120] sm:$0xff]
                %2878 = vst [vmem:[%s2804 + $0x240] sm:$0xff] %v2877
                %v2879 = vld [vmem:[%s2803 + $0x128] sm:$0xff]
                %2880 = vst [vmem:[%s2804 + $0x248] sm:$0xff] %v2879
                %v2881 = vld [vmem:[%s2803 + $0x130] sm:$0xff]
                %2882 = vst [vmem:[%s2804 + $0x250] sm:$0xff] %v2881
                %v2883 = vld [vmem:[%s2803 + $0x138] sm:$0xff]
                %2884 = vst [vmem:[%s2804 + $0x258] sm:$0xff] %v2883
                %v2885 = vld [vmem:[%s2803 + $0x140] sm:$0xff]
                %2886 = vst [vmem:[%s2804 + $0x280] sm:$0xff] %v2885
                %v2887 = vld [vmem:[%s2803 + $0x148] sm:$0xff]
                %2888 = vst [vmem:[%s2804 + $0x288] sm:$0xff] %v2887
                %v2889 = vld [vmem:[%s2803 + $0x150] sm:$0xff]
                %2890 = vst [vmem:[%s2804 + $0x290] sm:$0xff] %v2889
                %v2891 = vld [vmem:[%s2803 + $0x158] sm:$0xff]
                %2892 = vst [vmem:[%s2804 + $0x298] sm:$0xff] %v2891
                %v2893 = vld [vmem:[%s2803 + $0x160] sm:$0xff]
                %2894 = vst [vmem:[%s2804 + $0x2c0] sm:$0xff] %v2893
                %v2895 = vld [vmem:[%s2803 + $0x168] sm:$0xff]
                %2896 = vst [vmem:[%s2804 + $0x2c8] sm:$0xff] %v2895
                %v2897 = vld [vmem:[%s2803 + $0x170] sm:$0xff]
                %2898 = vst [vmem:[%s2804 + $0x2d0] sm:$0xff] %v2897
                %v2899 = vld [vmem:[%s2803 + $0x178] sm:$0xff]
                %2900 = vst [vmem:[%s2804 + $0x2d8] sm:$0xff] %v2899
                %v2901 = vld [vmem:[%s2803 + $0x180] sm:$0xff]
                %2902 = vst [vmem:[%s2804 + $0x300] sm:$0xff] %v2901
                %v2903 = vld [vmem:[%s2803 + $0x188] sm:$0xff]
                %2904 = vst [vmem:[%s2804 + $0x308] sm:$0xff] %v2903
                %v2905 = vld [vmem:[%s2803 + $0x190] sm:$0xff]
                %2906 = vst [vmem:[%s2804 + $0x310] sm:$0xff] %v2905
                %v2907 = vld [vmem:[%s2803 + $0x198] sm:$0xff]
                %2908 = vst [vmem:[%s2804 + $0x318] sm:$0xff] %v2907
                %v2909 = vld [vmem:[%s2803 + $0x1a0] sm:$0xff]
                %2910 = vst [vmem:[%s2804 + $0x340] sm:$0xff] %v2909
                %v2911 = vld [vmem:[%s2803 + $0x1a8] sm:$0xff]
                %2912 = vst [vmem:[%s2804 + $0x348] sm:$0xff] %v2911
                %v2913 = vld [vmem:[%s2803 + $0x1b0] sm:$0xff]
                %2914 = vst [vmem:[%s2804 + $0x350] sm:$0xff] %v2913
                %v2915 = vld [vmem:[%s2803 + $0x1b8] sm:$0xff]
                %2916 = vst [vmem:[%s2804 + $0x358] sm:$0xff] %v2915
                %v2917 = vld [vmem:[%s2803 + $0x1c0] sm:$0xff]
                %2918 = vst [vmem:[%s2804 + $0x380] sm:$0xff] %v2917
                %v2919 = vld [vmem:[%s2803 + $0x1c8] sm:$0xff]
                %2920 = vst [vmem:[%s2804 + $0x388] sm:$0xff] %v2919
                %v2921 = vld [vmem:[%s2803 + $0x1d0] sm:$0xff]
                %2922 = vst [vmem:[%s2804 + $0x390] sm:$0xff] %v2921
                %v2923 = vld [vmem:[%s2803 + $0x1d8] sm:$0xff]
                %2924 = vst [vmem:[%s2804 + $0x398] sm:$0xff] %v2923
                %v2925 = vld [vmem:[%s2803 + $0x1e0] sm:$0xff]
                %2926 = vst [vmem:[%s2804 + $0x3c0] sm:$0xff] %v2925
                %v2927 = vld [vmem:[%s2803 + $0x1e8] sm:$0xff]
                %2928 = vst [vmem:[%s2804 + $0x3c8] sm:$0xff] %v2927
                %v2929 = vld [vmem:[%s2803 + $0x1f0] sm:$0xff]
                %2930 = vst [vmem:[%s2804 + $0x3d0] sm:$0xff] %v2929
                %v2931 = vld [vmem:[%s2803 + $0x1f8] sm:$0xff]
                %2932 = vst [vmem:[%s2804 + $0x3d8] sm:$0xff] %v2931
              $region88: #{conv_pallas.1} parent=82 // loop_footer
                %s2802 = sadd.s32 1, %s2798
              $region89: #{conv_pallas.1} parent=82 // loop_footer_branch
                %2797 = sbr.rel target = $region85
              $region90: #{conv_pallas.1} parent=82 // loop_exit
                _
            $region83: #{conv_pallas.1} parent=78 // pred_fallthru
              _
            // Predicated region
            $region91: #{conv_pallas.1} parent=78 // pred_check
              _
            $region92: #{conv_pallas.1} parent=78 // pred_check_branch
              %2934 = sbr.rel target = $region94
            $region93: #{conv_pallas.1} parent=78 // pred_region
              _
            $region94: #{conv_pallas.1} parent=78 // pred_fallthru
              _
          $region79: #{conv_pallas.1} parent=74 // pred_fallthru
            _
          %2935 = vnop
        $region75: #{conv_pallas.1} parent=66 // pred_fallthru
          _
      $region67: #{conv_pallas.1} parent=5 // pred_fallthru
        _
      %p2936 = scmp.le.s32.totalorder 2, %s13
      // Predicated region
      $region95: #{conv_pallas.1} parent=5 // pred_check
        %p2937 = pneg %p2936
      $region96: #{conv_pallas.1} parent=5 // pred_check_branch
        %2939 = sbr.rel (%p2937) target = $region98
      $region97: #{conv_pallas.1} parent=5 // pred_region
        %s2940 = ssub.s32 %s13, 2
        // Predicated region
        $region99: #{conv_pallas.1} parent=97 // pred_check
          %p2941 = pneg %p210
        $region100: #{conv_pallas.1} parent=97 // pred_check_branch
          %2943 = sbr.rel (%p2941) target = $region102
        $region101: #{conv_pallas.1} parent=97 // pred_region
          %s2944 = sand.u32 %s195, 1
          %s2945 = sand.u32 %s195, 1
          %s2946 = smul.addr %s2945, 512
          %s2947 = scalar_lea.vmem [#allocation3], %s2946
        $region102: #{conv_pallas.1} parent=97 // pred_fallthru
          _
      $region98: #{conv_pallas.1} parent=5 // pred_fallthru
        _
    $region6: #{conv_pallas.1} parent=1 // loop_footer
      %s17 = sadd.s32 1, %s13
    $region7: #{conv_pallas.1} parent=1 // loop_footer_branch
      %12 = sbr.rel target = $region3
    $region8: #{conv_pallas.1} parent=1 // loop_exit
      _

</llo_original>
